<compile_context>
chip_gen: v6e
topology: v6e:2x2x1
jax: 0.10.0
libtpu: 0.0.40
codegen_flags: <defaults>
</compile_context>

<pallas_src>
import functools

import jax
import jax.numpy as jnp
from jax import lax
from jax.experimental import pallas as pl
from jax.experimental.pallas import tpu as pltpu


HIDDENDIM_LSTM = 256  # self.hiddendim_lstm in the PyTorch module
_SUBLANE_PAD = 16     # aligns both bf16 (16,128) and f32 (8,128) tiling


def _round_up(x, m):
    return (x + m - 1) // m * m


def _reorder_gates(w):
    """PyTorch gate order [i, f, g, o] -> [i, f, o, g] along axis 0."""
    i, f, g, o = jnp.split(w, 4, axis=0)
    return jnp.concatenate([i, f, o, g], axis=0)


def prepare_lstm_pooling_params(w_ih, w_hh, b_ih, b_hh):
    """One-time (setup-time) weight prep: gate reorder + transpose + bf16 cast.

    Returns (wih_t, whh_t, bias) with lane-dense 4H axis in [i|f|o|g] order.
    """
    H = HIDDENDIM_LSTM
    wih_t = jnp.transpose(_reorder_gates(w_ih)).astype(jnp.bfloat16)   # (D, 4H)
    whh_t = jnp.transpose(_reorder_gates(w_hh)).astype(jnp.bfloat16)   # (H, 4H)
    bias = _reorder_gates(b_ih + b_hh).reshape(1, 4 * H).astype(jnp.float32)
    return wih_t, whh_t, bias


def _lstm_pool_kernel(x_ref, wih_ref, whh_ref, b_ref, out_ref, xg_ref):
    """One batch tile: batched input projection + unrolled LSTM recurrence."""
    T, Bt, D = x_ref.shape              # (num_layers, batch_tile, hidden_size)
    H = whh_ref.shape[0]                # 256

    # Phase 1: input projection for ALL time steps in one MXU matmul, bias
    # folded once.  Bt is a multiple of 16 so both reshapes are layout
    # preserving.  Result goes to VMEM scratch, not live vregs.
    xg = jnp.dot(x_ref[...].reshape(T * Bt, D), wih_ref[...],
                 preferred_element_type=jnp.float32) + b_ref[...]   # (T*Bt, 4H)
    xg_ref[...] = xg.reshape(T, Bt, 4 * H)

    whh = whh_ref[...]                                              # (H, 4H) bf16

    # Phase 2: sequential recurrence, fully unrolled (T is small & static).
    # Only h (bf16), c (f32) and the current gate slab live in vregs; the
    # per-step gate fetch is a clean leading-axis vld from scratch.
    # TODO(synk): if a bundle dump shows the per-step whh re-streaming binding,
    # stage it once with pltpu.matmul_push_rhs / matmul_acc_lhs across steps.
    h = jnp.zeros((Bt, H), jnp.bfloat16)
    c = jnp.zeros((Bt, H), jnp.float32)
    h_f32 = jnp.zeros((Bt, H), jnp.float32)
    for t in range(T):
        gates = xg_ref[t] + jnp.dot(h, whh,
                                    preferred_element_type=jnp.float32)  # (Bt,4H)
        ifo = jax.nn.sigmoid(gates[:, :3 * H])      # fused sigmoid over [i|f|o]
        g_g = jnp.tanh(gates[:, 3 * H:])            # g gate
        c = ifo[:, H:2 * H] * c + ifo[:, :H] * g_g  # f*c + i*g
        h_f32 = ifo[:, 2 * H:] * jnp.tanh(c)        # o * tanh(c)
        h = h_f32.astype(jnp.bfloat16)

    # Output written exactly once (last hidden state of the LSTM).
    out_ref[...] = h_f32.astype(out_ref.dtype)


def lstm_pooling_forward_prepared(all_hidden_states, wih_t, whh_t, bias,
                                  *, num_layers, hidden_size, batch_tile=256):
    """all_hidden_states: (num_layers + 1, B, S, D); weights pre-prepared."""
    assert all_hidden_states.shape[0] == num_layers + 1
    assert all_hidden_states.shape[-1] == hidden_size
    B = all_hidden_states.shape[1]
    T = num_layers
    D = hidden_size
    H = HIDDENDIM_LSTM

    # Time-major CLS features (matches torch.cat(...[:, 0, :]...).view(...)),
    # batch padded to a sublane-aligned batch tile, cast to bf16 for the MXU.
    x = all_hidden_states[1:, :, 0, :]                       # (T, B, D)
    Bt = min(batch_tile, _round_up(B, _SUBLANE_PAD))
    B_pad = _round_up(max(B, Bt), Bt)
    if B_pad != B:
        x = jnp.pad(x, ((0, 0), (0, B_pad - B), (0, 0)))
    x = x.astype(jnp.bfloat16)

    grid = (B_pad // Bt,)

    # Explicit VMEM budget (double-buffered inputs/outputs + xg scratch),
    # capped well below v7x's 64 MiB physical VMEM.
    vmem_bytes = (2 * T * Bt * D * 2                  # x tiles (bf16, 2 bufs)
                  + D * 4 * H * 2 + H * 4 * H * 2     # weights (bf16)
                  + 4 * H * 4                         # bias (f32)
                  + 2 * Bt * H * 4                    # out tiles (f32, 2 bufs)
                  + T * Bt * 4 * H * 4)               # xg scratch (f32)
    vmem_limit = int(min(max(2 * vmem_bytes, 16 << 20), 64 << 20))

    out = pl.pallas_call(
        _lstm_pool_kernel,
        out_shape=jax.ShapeDtypeStruct((B_pad, H), jnp.float32),
        grid_spec=pltpu.PrefetchScalarGridSpec(
            num_scalar_prefetch=0,
            grid=grid,
            in_specs=[
                pl.BlockSpec((T, Bt, D), lambda i: (0, i, 0)),   # x batch tile
                pl.BlockSpec((D, 4 * H), lambda i: (0, 0)),      # W_ih^T
                pl.BlockSpec((H, 4 * H), lambda i: (0, 0)),      # W_hh^T
                pl.BlockSpec((1, 4 * H), lambda i: (0, 0)),      # b_ih + b_hh
            ],
            out_specs=pl.BlockSpec((Bt, H), lambda i: (i, 0)),
            scratch_shapes=[pltpu.VMEM((T, Bt, 4 * H), jnp.float32)],
        ),
        compiler_params=pltpu.CompilerParams(
            dimension_semantics=("parallel",),        # batch tiles independent
            vmem_limit_bytes=vmem_limit,
        ),
    )(x, wih_t, whh_t, bias)

    # TODO(synk): nn.Dropout(0.1) is identity in eval mode; training-mode
    # dropout would need pltpu.prng_seed / stateful_bernoulli in the kernel.
    return out[:B]


def lstm_pooling_forward(all_hidden_states, w_ih, w_hh, b_ih, b_hh,
                         *, num_layers, hidden_size):
    """Convenience wrapper (weights prepared per call; prefer the prepared API)."""
    wih_t, whh_t, bias = prepare_lstm_pooling_params(w_ih, w_hh, b_ih, b_hh)
    return lstm_pooling_forward_prepared(
        all_hidden_states, wih_t, whh_t, bias,
        num_layers=num_layers, hidden_size=hidden_size)


def _reference_lstm_pooling(all_hidden_states, w_ih, w_hh, b_ih, b_hh,
                            *, num_layers, hidden_size):
    """Pure-JAX f32 reference (PyTorch nn.LSTM semantics, original gate order)."""
    B = all_hidden_states.shape[1]
    H = HIDDENDIM_LSTM
    x = jnp.transpose(all_hidden_states[1:, :, 0, :], (1, 0, 2))  # (B, T, D)

    def step(carry, x_t):
        h, c = carry
        gates = x_t @ w_ih.T + h @ w_hh.T + b_ih + b_hh
        i = jax.nn.sigmoid(gates[:, 0 * H:1 * H])
        f = jax.nn.sigmoid(gates[:, 1 * H:2 * H])
        g = jnp.tanh(gates[:, 2 * H:3 * H])
        o = jax.nn.sigmoid(gates[:, 3 * H:4 * H])
        c = f * c + i * g
        h = o * jnp.tanh(c)
        return (h, c), None

    h0 = jnp.zeros((B, H), jnp.float32)
    c0 = jnp.zeros((B, H), jnp.float32)
    (h_last, _), _ = lax.scan(step, (h0, c0), jnp.transpose(x, (1, 0, 2)))
    return h_last


if __name__ == "__main__":
    num_layers = 8       # num_hidden_layers
    hidden_size = 32     # transformer hidden size D
    batch = 2
    seq = 8
    H = HIDDENDIM_LSTM

    key = jax.random.PRNGKey(0)
    k_x, k_wih, k_whh, k_bih, k_bhh = jax.random.split(key, 5)

    # Synthetic transformer stack output: (num_layers + 1, B, S, D)
    all_hidden_states = jax.random.normal(
        k_x, (num_layers + 1, batch, seq, hidden_size), dtype=jnp.float32)

    # PyTorch nn.LSTM init: U(-k, k), k = 1/sqrt(hidden_out)
    bound = 1.0 / (H ** 0.5)
    w_ih = jax.random.uniform(k_wih, (4 * H, hidden_size), jnp.float32, -bound, bound)
    w_hh = jax.random.uniform(k_whh, (4 * H, H), jnp.float32, -bound, bound)
    b_ih = jax.random.uniform(k_bih, (4 * H,), jnp.float32, -bound, bound)
    b_hh = jax.random.uniform(k_bhh, (4 * H,), jnp.float32, -bound, bound)

    # One-time weight prep (hoisted out of the per-call hot path).
    wih_t, whh_t, bias = prepare_lstm_pooling_params(w_ih, w_hh, b_ih, b_hh)

    fwd = jax.jit(functools.partial(
        lstm_pooling_forward_prepared,
        num_layers=num_layers, hidden_size=hidden_size))
    out = fwd(all_hidden_states, wih_t, whh_t, bias)
    out = jax.block_until_ready(out)

    ref = _reference_lstm_pooling(
        all_hidden_states, w_ih, w_hh, b_ih, b_hh,
        num_layers=num_layers, hidden_size=hidden_size)
    assert out.shape == (batch, H)
    # bf16 MXU operands + bf16 h carry (f32 accumulation / gate math) ->
    # looser tolerance than pure f32.
    assert jnp.allclose(out, ref, atol=2e-2, rtol=2e-2), "mismatch vs JAX reference"

    print("KERNEL_OK")
</pallas_src>

<mosaic_0001>
module attributes {stable_mosaic.version = 11 : i64} {
  func.func @_lstm_pool_kernel(%arg0: i32, %arg1: memref<8x16x32xbf16, #tpu.memory_space<vmem>>, %arg2: memref<32x1024xbf16, #tpu.memory_space<vmem>>, %arg3: memref<256x1024xbf16, #tpu.memory_space<vmem>>, %arg4: memref<1x1024xf32, #tpu.memory_space<vmem>>, %arg5: memref<16x256xf32, #tpu.memory_space<vmem>>, %arg6: memref<8x16x1024xf32, #tpu.memory_space<vmem>>) attributes {dimension_semantics = [#tpu.dimension_semantics<parallel>], iteration_bounds = array<i64: 1>, scalar_prefetch = 0 : i64, scratch_operands = 1 : i64, tpu.core_type = #tpu.core_type<tc>, window_params = [{transform_indices = @transform_0, window_bounds = array<i64: 8, 16, 32>}, {pipeline_mode = #tpu.pipeline_mode<synchronous>, transform_indices = @transform_1, window_bounds = array<i64: 32, 1024>}, {pipeline_mode = #tpu.pipeline_mode<synchronous>, transform_indices = @transform_2, window_bounds = array<i64: 256, 1024>}, {pipeline_mode = #tpu.pipeline_mode<synchronous>, transform_indices = @transform_3, window_bounds = array<i64: 1, 1024>}, {transform_indices = @transform_4, window_bounds = array<i64: 16, 256>}]} {
    %c0 = arith.constant 0 : index
    %c0_0 = arith.constant 0 : index
    %c0_1 = arith.constant 0 : index
    %0 = vector.load %arg1[%c0, %c0_0, %c0_1] : memref<8x16x32xbf16, #tpu.memory_space<vmem>>, vector<8x16x32xbf16>
    %1 = vector.shape_cast %0 : vector<8x16x32xbf16> to vector<128x32xbf16>
    %c0_2 = arith.constant 0 : index
    %c0_3 = arith.constant 0 : index
    %2 = vector.load %arg2[%c0_2, %c0_3] : memref<32x1024xbf16, #tpu.memory_space<vmem>>, vector<32x1024xbf16>
    %cst = arith.constant dense<0.000000e+00> : vector<128x1024xf32>
    %3 = tpu.matmul %1, %2, %cst {dimension_numbers = #tpu.dot_dimension_numbers<[1], [0], [0], [1], [0, 0, 1, 1], [], []>} : vector<128x32xbf16>, vector<32x1024xbf16>, vector<128x1024xf32> -> vector<128x1024xf32>
    %c0_4 = arith.constant 0 : index
    %c0_5 = arith.constant 0 : index
    %4 = vector.load %arg4[%c0_4, %c0_5] : memref<1x1024xf32, #tpu.memory_space<vmem>>, vector<1x1024xf32>
    %5 = vector.broadcast %4 : vector<1x1024xf32> to vector<128x1024xf32>
    %6 = arith.addf %3, %5 : vector<128x1024xf32>
    %7 = vector.shape_cast %6 : vector<128x1024xf32> to vector<8x16x1024xf32>
    %c0_6 = arith.constant 0 : index
    %c0_7 = arith.constant 0 : index
    %c0_8 = arith.constant 0 : index
    %8 = vector.load %arg6[%c0_6, %c0_7, %c0_8] : memref<8x16x1024xf32, #tpu.memory_space<vmem>>, vector<8x16x1024xf32>
    tpu.vector_store %arg6[%c0_6, %c0_7, %c0_8], %7 {strides = array<i32>} : memref<8x16x1024xf32, #tpu.memory_space<vmem>>, vector<8x16x1024xf32>,
    %c0_9 = arith.constant 0 : index
    %c0_10 = arith.constant 0 : index
    %9 = vector.load %arg3[%c0_9, %c0_10] : memref<256x1024xbf16, #tpu.memory_space<vmem>>, vector<256x1024xbf16>
    %cst_11 = arith.constant 0.000000e+00 : bf16
    %10 = vector.broadcast %cst_11 : bf16 to vector<16x256xbf16>
    %cst_12 = arith.constant 0.000000e+00 : f32
    %11 = vector.broadcast %cst_12 : f32 to vector<16x256xf32>
    %c0_13 = arith.constant 0 : index
    %c0_14 = arith.constant 0 : index
    %c0_15 = arith.constant 0 : index
    %12 = vector.load %arg6[%c0_13, %c0_14, %c0_15] : memref<8x16x1024xf32, #tpu.memory_space<vmem>>, vector<1x16x1024xf32>
    %13 = vector.shape_cast %12 : vector<1x16x1024xf32> to vector<16x1024xf32>
    %cst_16 = arith.constant dense<0.000000e+00> : vector<16x1024xf32>
    %14 = tpu.matmul %10, %9, %cst_16 {dimension_numbers = #tpu.dot_dimension_numbers<[1], [0], [0], [1], [0, 0, 1, 1], [], []>} : vector<16x256xbf16>, vector<256x1024xbf16>, vector<16x1024xf32> -> vector<16x1024xf32>
    %15 = arith.addf %13, %14 : vector<16x1024xf32>
    %16 = vector.extract_strided_slice %15 {offsets = [0, 0], sizes = [16, 768], strides = [1, 1]} : vector<16x1024xf32> to vector<16x768xf32>
    %17 = arith.negf %16 : vector<16x768xf32>
    %18 = math.exp %17 : vector<16x768xf32>
    %cst_17 = arith.constant 1.000000e+00 : f32
    %19 = vector.broadcast %cst_17 : f32 to vector<16x768xf32>
    %20 = arith.addf %19, %18 : vector<16x768xf32>
    %21 = arith.divf %19, %20 : vector<16x768xf32>
    %22 = vector.extract_strided_slice %15 {offsets = [0, 768], sizes = [16, 256], strides = [1, 1]} : vector<16x1024xf32> to vector<16x256xf32>
    %23 = math.tanh %22 : vector<16x256xf32>
    %24 = vector.extract_strided_slice %21 {offsets = [0, 256], sizes = [16, 256], strides = [1, 1]} : vector<16x768xf32> to vector<16x256xf32>
    %25 = arith.mulf %24, %11 : vector<16x256xf32>
    %26 = vector.extract_strided_slice %21 {offsets = [0, 0], sizes = [16, 256], strides = [1, 1]} : vector<16x768xf32> to vector<16x256xf32>
    %27 = arith.mulf %26, %23 : vector<16x256xf32>
    %28 = arith.addf %25, %27 : vector<16x256xf32>
    %29 = vector.extract_strided_slice %21 {offsets = [0, 512], sizes = [16, 256], strides = [1, 1]} : vector<16x768xf32> to vector<16x256xf32>
    %30 = math.tanh %28 : vector<16x256xf32>
    %31 = arith.mulf %29, %30 : vector<16x256xf32>
    %32 = arith.truncf %31 : vector<16x256xf32> to vector<16x256xbf16>
    %c1 = arith.constant 1 : index
    %c0_18 = arith.constant 0 : index
    %c0_19 = arith.constant 0 : index
    %33 = vector.load %arg6[%c1, %c0_18, %c0_19] : memref<8x16x1024xf32, #tpu.memory_space<vmem>>, vector<1x16x1024xf32>
    %34 = vector.shape_cast %33 : vector<1x16x1024xf32> to vector<16x1024xf32>
    %cst_20 = arith.constant dense<0.000000e+00> : vector<16x1024xf32>
    %35 = tpu.matmul %32, %9, %cst_20 {dimension_numbers = #tpu.dot_dimension_numbers<[1], [0], [0], [1], [0, 0, 1, 1], [], []>} : vector<16x256xbf16>, vector<256x1024xbf16>, vector<16x1024xf32> -> vector<16x1024xf32>
    %36 = arith.addf %34, %35 : vector<16x1024xf32>
    %37 = vector.extract_strided_slice %36 {offsets = [0, 0], sizes = [16, 768], strides = [1, 1]} : vector<16x1024xf32> to vector<16x768xf32>
    %38 = arith.negf %37 : vector<16x768xf32>
    %39 = math.exp %38 : vector<16x768xf32>
    %cst_21 = arith.constant 1.000000e+00 : f32
    %40 = vector.broadcast %cst_21 : f32 to vector<16x768xf32>
    %41 = arith.addf %40, %39 : vector<16x768xf32>
    %42 = arith.divf %40, %41 : vector<16x768xf32>
    %43 = vector.extract_strided_slice %36 {offsets = [0, 768], sizes = [16, 256], strides = [1, 1]} : vector<16x1024xf32> to vector<16x256xf32>
    %44 = math.tanh %43 : vector<16x256xf32>
    %45 = vector.extract_strided_slice %42 {offsets = [0, 256], sizes = [16, 256], strides = [1, 1]} : vector<16x768xf32> to vector<16x256xf32>
    %46 = arith.mulf %45, %28 : vector<16x256xf32>
    %47 = vector.extract_strided_slice %42 {offsets = [0, 0], sizes = [16, 256], strides = [1, 1]} : vector<16x768xf32> to vector<16x256xf32>
    %48 = arith.mulf %47, %44 : vector<16x256xf32>
    %49 = arith.addf %46, %48 : vector<16x256xf32>
    %50 = vector.extract_strided_slice %42 {offsets = [0, 512], sizes = [16, 256], strides = [1, 1]} : vector<16x768xf32> to vector<16x256xf32>
    %51 = math.tanh %49 : vector<16x256xf32>
    %52 = arith.mulf %50, %51 : vector<16x256xf32>
    %53 = arith.truncf %52 : vector<16x256xf32> to vector<16x256xbf16>
    %c2 = arith.constant 2 : index
    %c0_22 = arith.constant 0 : index
    %c0_23 = arith.constant 0 : index
    %54 = vector.load %arg6[%c2, %c0_22, %c0_23] : memref<8x16x1024xf32, #tpu.memory_space<vmem>>, vector<1x16x1024xf32>
    %55 = vector.shape_cast %54 : vector<1x16x1024xf32> to vector<16x1024xf32>
    %cst_24 = arith.constant dense<0.000000e+00> : vector<16x1024xf32>
    %56 = tpu.matmul %53, %9, %cst_24 {dimension_numbers = #tpu.dot_dimension_numbers<[1], [0], [0], [1], [0, 0, 1, 1], [], []>} : vector<16x256xbf16>, vector<256x1024xbf16>, vector<16x1024xf32> -> vector<16x1024xf32>
    %57 = arith.addf %55, %56 : vector<16x1024xf32>
    %58 = vector.extract_strided_slice %57 {offsets = [0, 0], sizes = [16, 768], strides = [1, 1]} : vector<16x1024xf32> to vector<16x768xf32>
    %59 = arith.negf %58 : vector<16x768xf32>
    %60 = math.exp %59 : vector<16x768xf32>
    %cst_25 = arith.constant 1.000000e+00 : f32
    %61 = vector.broadcast %cst_25 : f32 to vector<16x768xf32>
    %62 = arith.addf %61, %60 : vector<16x768xf32>
    %63 = arith.divf %61, %62 : vector<16x768xf32>
    %64 = vector.extract_strided_slice %57 {offsets = [0, 768], sizes = [16, 256], strides = [1, 1]} : vector<16x1024xf32> to vector<16x256xf32>
    %65 = math.tanh %64 : vector<16x256xf32>
    %66 = vector.extract_strided_slice %63 {offsets = [0, 256], sizes = [16, 256], strides = [1, 1]} : vector<16x768xf32> to vector<16x256xf32>
    %67 = arith.mulf %66, %49 : vector<16x256xf32>
    %68 = vector.extract_strided_slice %63 {offsets = [0, 0], sizes = [16, 256], strides = [1, 1]} : vector<16x768xf32> to vector<16x256xf32>
    %69 = arith.mulf %68, %65 : vector<16x256xf32>
    %70 = arith.addf %67, %69 : vector<16x256xf32>
    %71 = vector.extract_strided_slice %63 {offsets = [0, 512], sizes = [16, 256], strides = [1, 1]} : vector<16x768xf32> to vector<16x256xf32>
    %72 = math.tanh %70 : vector<16x256xf32>
    %73 = arith.mulf %71, %72 : vector<16x256xf32>
    %74 = arith.truncf %73 : vector<16x256xf32> to vector<16x256xbf16>
    %c3 = arith.constant 3 : index
    %c0_26 = arith.constant 0 : index
    %c0_27 = arith.constant 0 : index
    %75 = vector.load %arg6[%c3, %c0_26, %c0_27] : memref<8x16x1024xf32, #tpu.memory_space<vmem>>, vector<1x16x1024xf32>
    %76 = vector.shape_cast %75 : vector<1x16x1024xf32> to vector<16x1024xf32>
    %cst_28 = arith.constant dense<0.000000e+00> : vector<16x1024xf32>
    %77 = tpu.matmul %74, %9, %cst_28 {dimension_numbers = #tpu.dot_dimension_numbers<[1], [0], [0], [1], [0, 0, 1, 1], [], []>} : vector<16x256xbf16>, vector<256x1024xbf16>, vector<16x1024xf32> -> vector<16x1024xf32>
    %78 = arith.addf %76, %77 : vector<16x1024xf32>
    %79 = vector.extract_strided_slice %78 {offsets = [0, 0], sizes = [16, 768], strides = [1, 1]} : vector<16x1024xf32> to vector<16x768xf32>
    %80 = arith.negf %79 : vector<16x768xf32>
    %81 = math.exp %80 : vector<16x768xf32>
    %cst_29 = arith.constant 1.000000e+00 : f32
    %82 = vector.broadcast %cst_29 : f32 to vector<16x768xf32>
    %83 = arith.addf %82, %81 : vector<16x768xf32>
    %84 = arith.divf %82, %83 : vector<16x768xf32>
    %85 = vector.extract_strided_slice %78 {offsets = [0, 768], sizes = [16, 256], strides = [1, 1]} : vector<16x1024xf32> to vector<16x256xf32>
    %86 = math.tanh %85 : vector<16x256xf32>
    %87 = vector.extract_strided_slice %84 {offsets = [0, 256], sizes = [16, 256], strides = [1, 1]} : vector<16x768xf32> to vector<16x256xf32>
    %88 = arith.mulf %87, %70 : vector<16x256xf32>
    %89 = vector.extract_strided_slice %84 {offsets = [0, 0], sizes = [16, 256], strides = [1, 1]} : vector<16x768xf32> to vector<16x256xf32>
    %90 = arith.mulf %89, %86 : vector<16x256xf32>
    %91 = arith.addf %88, %90 : vector<16x256xf32>
    %92 = vector.extract_strided_slice %84 {offsets = [0, 512], sizes = [16, 256], strides = [1, 1]} : vector<16x768xf32> to vector<16x256xf32>
    %93 = math.tanh %91 : vector<16x256xf32>
    %94 = arith.mulf %92, %93 : vector<16x256xf32>
    %95 = arith.truncf %94 : vector<16x256xf32> to vector<16x256xbf16>
    %c4 = arith.constant 4 : index
    %c0_30 = arith.constant 0 : index
    %c0_31 = arith.constant 0 : index
    %96 = vector.load %arg6[%c4, %c0_30, %c0_31] : memref<8x16x1024xf32, #tpu.memory_space<vmem>>, vector<1x16x1024xf32>
    %97 = vector.shape_cast %96 : vector<1x16x1024xf32> to vector<16x1024xf32>
    %cst_32 = arith.constant dense<0.000000e+00> : vector<16x1024xf32>
    %98 = tpu.matmul %95, %9, %cst_32 {dimension_numbers = #tpu.dot_dimension_numbers<[1], [0], [0], [1], [0, 0, 1, 1], [], []>} : vector<16x256xbf16>, vector<256x1024xbf16>, vector<16x1024xf32> -> vector<16x1024xf32>
    %99 = arith.addf %97, %98 : vector<16x1024xf32>
    %100 = vector.extract_strided_slice %99 {offsets = [0, 0], sizes = [16, 768], strides = [1, 1]} : vector<16x1024xf32> to vector<16x768xf32>
    %101 = arith.negf %100 : vector<16x768xf32>
    %102 = math.exp %101 : vector<16x768xf32>
    %cst_33 = arith.constant 1.000000e+00 : f32
    %103 = vector.broadcast %cst_33 : f32 to vector<16x768xf32>
    %104 = arith.addf %103, %102 : vector<16x768xf32>
    %105 = arith.divf %103, %104 : vector<16x768xf32>
    %106 = vector.extract_strided_slice %99 {offsets = [0, 768], sizes = [16, 256], strides = [1, 1]} : vector<16x1024xf32> to vector<16x256xf32>
    %107 = math.tanh %106 : vector<16x256xf32>
    %108 = vector.extract_strided_slice %105 {offsets = [0, 256], sizes = [16, 256], strides = [1, 1]} : vector<16x768xf32> to vector<16x256xf32>
    %109 = arith.mulf %108, %91 : vector<16x256xf32>
    %110 = vector.extract_strided_slice %105 {offsets = [0, 0], sizes = [16, 256], strides = [1, 1]} : vector<16x768xf32> to vector<16x256xf32>
    %111 = arith.mulf %110, %107 : vector<16x256xf32>
    %112 = arith.addf %109, %111 : vector<16x256xf32>
    %113 = vector.extract_strided_slice %105 {offsets = [0, 512], sizes = [16, 256], strides = [1, 1]} : vector<16x768xf32> to vector<16x256xf32>
    %114 = math.tanh %112 : vector<16x256xf32>
    %115 = arith.mulf %113, %114 : vector<16x256xf32>
    %116 = arith.truncf %115 : vector<16x256xf32> to vector<16x256xbf16>
    %c5 = arith.constant 5 : index
    %c0_34 = arith.constant 0 : index
    %c0_35 = arith.constant 0 : index
    %117 = vector.load %arg6[%c5, %c0_34, %c0_35] : memref<8x16x1024xf32, #tpu.memory_space<vmem>>, vector<1x16x1024xf32>
    %118 = vector.shape_cast %117 : vector<1x16x1024xf32> to vector<16x1024xf32>
    %cst_36 = arith.constant dense<0.000000e+00> : vector<16x1024xf32>
    %119 = tpu.matmul %116, %9, %cst_36 {dimension_numbers = #tpu.dot_dimension_numbers<[1], [0], [0], [1], [0, 0, 1, 1], [], []>} : vector<16x256xbf16>, vector<256x1024xbf16>, vector<16x1024xf32> -> vector<16x1024xf32>
    %120 = arith.addf %118, %119 : vector<16x1024xf32>
    %121 = vector.extract_strided_slice %120 {offsets = [0, 0], sizes = [16, 768], strides = [1, 1]} : vector<16x1024xf32> to vector<16x768xf32>
    %122 = arith.negf %121 : vector<16x768xf32>
    %123 = math.exp %122 : vector<16x768xf32>
    %cst_37 = arith.constant 1.000000e+00 : f32
    %124 = vector.broadcast %cst_37 : f32 to vector<16x768xf32>
    %125 = arith.addf %124, %123 : vector<16x768xf32>
    %126 = arith.divf %124, %125 : vector<16x768xf32>
    %127 = vector.extract_strided_slice %120 {offsets = [0, 768], sizes = [16, 256], strides = [1, 1]} : vector<16x1024xf32> to vector<16x256xf32>
    %128 = math.tanh %127 : vector<16x256xf32>
    %129 = vector.extract_strided_slice %126 {offsets = [0, 256], sizes = [16, 256], strides = [1, 1]} : vector<16x768xf32> to vector<16x256xf32>
    %130 = arith.mulf %129, %112 : vector<16x256xf32>
    %131 = vector.extract_strided_slice %126 {offsets = [0, 0], sizes = [16, 256], strides = [1, 1]} : vector<16x768xf32> to vector<16x256xf32>
    %132 = arith.mulf %131, %128 : vector<16x256xf32>
    %133 = arith.addf %130, %132 : vector<16x256xf32>
    %134 = vector.extract_strided_slice %126 {offsets = [0, 512], sizes = [16, 256], strides = [1, 1]} : vector<16x768xf32> to vector<16x256xf32>
    %135 = math.tanh %133 : vector<16x256xf32>
    %136 = arith.mulf %134, %135 : vector<16x256xf32>
    %137 = arith.truncf %136 : vector<16x256xf32> to vector<16x256xbf16>
    %c6 = arith.constant 6 : index
    %c0_38 = arith.constant 0 : index
    %c0_39 = arith.constant 0 : index
    %138 = vector.load %arg6[%c6, %c0_38, %c0_39] : memref<8x16x1024xf32, #tpu.memory_space<vmem>>, vector<1x16x1024xf32>
    %139 = vector.shape_cast %138 : vector<1x16x1024xf32> to vector<16x1024xf32>
    %cst_40 = arith.constant dense<0.000000e+00> : vector<16x1024xf32>
    %140 = tpu.matmul %137, %9, %cst_40 {dimension_numbers = #tpu.dot_dimension_numbers<[1], [0], [0], [1], [0, 0, 1, 1], [], []>} : vector<16x256xbf16>, vector<256x1024xbf16>, vector<16x1024xf32> -> vector<16x1024xf32>
    %141 = arith.addf %139, %140 : vector<16x1024xf32>
    %142 = vector.extract_strided_slice %141 {offsets = [0, 0], sizes = [16, 768], strides = [1, 1]} : vector<16x1024xf32> to vector<16x768xf32>
    %143 = arith.negf %142 : vector<16x768xf32>
    %144 = math.exp %143 : vector<16x768xf32>
    %cst_41 = arith.constant 1.000000e+00 : f32
    %145 = vector.broadcast %cst_41 : f32 to vector<16x768xf32>
    %146 = arith.addf %145, %144 : vector<16x768xf32>
    %147 = arith.divf %145, %146 : vector<16x768xf32>
    %148 = vector.extract_strided_slice %141 {offsets = [0, 768], sizes = [16, 256], strides = [1, 1]} : vector<16x1024xf32> to vector<16x256xf32>
    %149 = math.tanh %148 : vector<16x256xf32>
    %150 = vector.extract_strided_slice %147 {offsets = [0, 256], sizes = [16, 256], strides = [1, 1]} : vector<16x768xf32> to vector<16x256xf32>
    %151 = arith.mulf %150, %133 : vector<16x256xf32>
    %152 = vector.extract_strided_slice %147 {offsets = [0, 0], sizes = [16, 256], strides = [1, 1]} : vector<16x768xf32> to vector<16x256xf32>
    %153 = arith.mulf %152, %149 : vector<16x256xf32>
    %154 = arith.addf %151, %153 : vector<16x256xf32>
    %155 = vector.extract_strided_slice %147 {offsets = [0, 512], sizes = [16, 256], strides = [1, 1]} : vector<16x768xf32> to vector<16x256xf32>
    %156 = math.tanh %154 : vector<16x256xf32>
    %157 = arith.mulf %155, %156 : vector<16x256xf32>
    %158 = arith.truncf %157 : vector<16x256xf32> to vector<16x256xbf16>
    %c7 = arith.constant 7 : index
    %c0_42 = arith.constant 0 : index
    %c0_43 = arith.constant 0 : index
    %159 = vector.load %arg6[%c7, %c0_42, %c0_43] : memref<8x16x1024xf32, #tpu.memory_space<vmem>>, vector<1x16x1024xf32>
    %160 = vector.shape_cast %159 : vector<1x16x1024xf32> to vector<16x1024xf32>
    %cst_44 = arith.constant dense<0.000000e+00> : vector<16x1024xf32>
    %161 = tpu.matmul %158, %9, %cst_44 {dimension_numbers = #tpu.dot_dimension_numbers<[1], [0], [0], [1], [0, 0, 1, 1], [], []>} : vector<16x256xbf16>, vector<256x1024xbf16>, vector<16x1024xf32> -> vector<16x1024xf32>
    %162 = arith.addf %160, %161 : vector<16x1024xf32>
    %163 = vector.extract_strided_slice %162 {offsets = [0, 0], sizes = [16, 768], strides = [1, 1]} : vector<16x1024xf32> to vector<16x768xf32>
    %164 = arith.negf %163 : vector<16x768xf32>
    %165 = math.exp %164 : vector<16x768xf32>
    %cst_45 = arith.constant 1.000000e+00 : f32
    %166 = vector.broadcast %cst_45 : f32 to vector<16x768xf32>
    %167 = arith.addf %166, %165 : vector<16x768xf32>
    %168 = arith.divf %166, %167 : vector<16x768xf32>
    %169 = vector.extract_strided_slice %162 {offsets = [0, 768], sizes = [16, 256], strides = [1, 1]} : vector<16x1024xf32> to vector<16x256xf32>
    %170 = math.tanh %169 : vector<16x256xf32>
    %171 = vector.extract_strided_slice %168 {offsets = [0, 256], sizes = [16, 256], strides = [1, 1]} : vector<16x768xf32> to vector<16x256xf32>
    %172 = arith.mulf %171, %154 : vector<16x256xf32>
    %173 = vector.extract_strided_slice %168 {offsets = [0, 0], sizes = [16, 256], strides = [1, 1]} : vector<16x768xf32> to vector<16x256xf32>
    %174 = arith.mulf %173, %170 : vector<16x256xf32>
    %175 = arith.addf %172, %174 : vector<16x256xf32>
    %176 = vector.extract_strided_slice %168 {offsets = [0, 512], sizes = [16, 256], strides = [1, 1]} : vector<16x768xf32> to vector<16x256xf32>
    %177 = math.tanh %175 : vector<16x256xf32>
    %178 = arith.mulf %176, %177 : vector<16x256xf32>
    %c0_46 = arith.constant 0 : index
    %c0_47 = arith.constant 0 : index
    %179 = vector.load %arg5[%c0_46, %c0_47] : memref<16x256xf32, #tpu.memory_space<vmem>>, vector<16x256xf32>
    tpu.vector_store %arg5[%c0_46, %c0_47], %178 {strides = array<i32>} : memref<16x256xf32, #tpu.memory_space<vmem>>, vector<16x256xf32>,
    return
  }
  func.func @transform_0(%arg0: i32) -> (i32, i32, i32) {
    %c0_i32 = arith.constant 0 : i32
    %c0_i32_0 = arith.constant 0 : i32
    %c0_i32_1 = arith.constant 0 : i32
    return %c0_i32, %arg0, %c0_i32_0 : i32, i32, i32
  }
  func.func @transform_1(%arg0: i32) -> (i32, i32) {
    %c0_i32 = arith.constant 0 : i32
    %c0_i32_0 = arith.constant 0 : i32
    %c0_i32_1 = arith.constant 0 : i32
    return %c0_i32, %c0_i32_0 : i32, i32
  }
  func.func @transform_2(%arg0: i32) -> (i32, i32) {
    %c0_i32 = arith.constant 0 : i32
    %c0_i32_0 = arith.constant 0 : i32
    %c0_i32_1 = arith.constant 0 : i32
    return %c0_i32, %c0_i32_0 : i32, i32
  }
  func.func @transform_3(%arg0: i32) -> (i32, i32) {
    %c0_i32 = arith.constant 0 : i32
    %c0_i32_0 = arith.constant 0 : i32
    %c0_i32_1 = arith.constant 0 : i32
    return %c0_i32, %c0_i32_0 : i32, i32
  }
  func.func @transform_4(%arg0: i32) -> (i32, i32) {
    %c0_i32 = arith.constant 0 : i32
    %c0_i32_0 = arith.constant 0 : i32
    return %arg0, %c0_i32 : i32, i32
  }
}

</mosaic_0001>

<llo_original>
// kernel: lstm_pooling_forward_prepared.1
$region0: #{lstm_pooling_forward_prepared.1}
  #allocation0 [shape = 'u32[]', space=smem, size = 0x4, offset = 0x4, fixed_abs, tag = 'smem constant byte address 0x4 - core index']
  #allocation1 [shape = 'u32[144,128]{1,0:T(1,128)}', space=vmem, size = 0x12000, scoped, tag = 'internal scratch']
  #allocation2 [shape = 'f32[8,16,1024]{2,1,0:T(8,128)}', space=vmem, size = 0x80000, scoped, tag = 'scratch operand']
  %s0 = inlined_call_operand.vmem [shape: bf16[8,16,32], index: 0, kind: input, shape index: {}]
  %s1 = inlined_call_operand.vmem [shape: bf16[32,1024], index: 1, kind: input, shape index: {}]
  %s2 = inlined_call_operand.hbm [shape: bf16[256,1024], index: 2, kind: input, shape index: {}]
  %s3 = inlined_call_operand.hbm [shape: f32[1,1024], index: 3, kind: input, shape index: {}]
  %s4 = inlined_call_operand.vmem [shape: f32[16,256], index: 4, kind: output, shape index: {}]
  %s5 = sld [smem:[#allocation0]]
  $region34: #{lstm_pooling_forward_prepared.1} parent=0
    _
  %s7 = ssub.s32 1, %s5
  %s8 = scalar_select 0, %s7, %s5
  $region1: #{lstm_pooling_forward_prepared.1} parent=0
    #allocation3 [shape = 'u8[524288]{0}', space=vmem, size = 0x80000, scoped, tag = 'input window, operand 2, single buffered']
    #allocation4 [shape = 's32[1]{0}', space=sflag, size = 0x4, scoped, tag = 'scoped memory for lstm_pooling_forward_prepared.1']
    #allocation5 [shape = 'u8[4096]{0}', space=vmem, size = 0x1000, scoped, tag = 'input window, operand 3, single buffered']
    #allocation6 [shape = 's32[1]{0}', space=sflag, size = 0x4, scoped, tag = 'scoped memory for lstm_pooling_forward_prepared.1']
    %9 = vsyncpa [#allocation4], 0
    %10 = vsyncpa [#allocation6], 0
    // Predicated region
    $region2: #{lstm_pooling_forward_prepared.1} parent=1 // pred_check
      _
    $region3: #{lstm_pooling_forward_prepared.1} parent=1 // pred_check_branch
      %12 = sbr.rel (0) target = $region5
    $region4: #{lstm_pooling_forward_prepared.1} parent=1 // pred_region
      _
    $region5: #{lstm_pooling_forward_prepared.1} parent=1 // pred_fallthru
      _
    // Predicated region
    $region6: #{lstm_pooling_forward_prepared.1} parent=1 // pred_check
      _
    $region7: #{lstm_pooling_forward_prepared.1} parent=1 // pred_check_branch
      %14 = sbr.rel (0) target = $region9
    $region8: #{lstm_pooling_forward_prepared.1} parent=1 // pred_region
      _
    $region9: #{lstm_pooling_forward_prepared.1} parent=1 // pred_fallthru
      _
    // Predicated region
    $region10: #{lstm_pooling_forward_prepared.1} parent=1 // pred_check
      _
    $region11: #{lstm_pooling_forward_prepared.1} parent=1 // pred_check_branch
      %16 = sbr.rel (0) target = $region13
    $region12: #{lstm_pooling_forward_prepared.1} parent=1 // pred_region
      %s18 = ssub.s32 16384, 16384
      %19 = vsyncadd [#allocation4], %s18
      %s20 = sshll.u32 [#allocation3], 4
      %s21 = int_to_ptr.vmem [resolvable:$true] %s20
      %26 = dma.hbm_to_vmem [thread:$0]  %s2, 16384, %s21, [#allocation4], 512, 512, 32
    $region13: #{lstm_pooling_forward_prepared.1} parent=1 // pred_fallthru
      _
    // Predicated region
    $region14: #{lstm_pooling_forward_prepared.1} parent=1 // pred_check
      _
    $region15: #{lstm_pooling_forward_prepared.1} parent=1 // pred_check_branch
      %28 = sbr.rel (0) target = $region17
    $region16: #{lstm_pooling_forward_prepared.1} parent=1 // pred_region
      %s30 = ssub.s32 128, 128
      %31 = vsyncadd [#allocation6], %s30
      %s33 = sshll.u32 [#allocation5], 4
      %s34 = int_to_ptr.vmem [resolvable:$true] %s33
      %36 = dma.hbm_to_vmem [thread:$0]  %s3, 128, %s34, [#allocation6]
    $region17: #{lstm_pooling_forward_prepared.1} parent=1 // pred_fallthru
      _
    // Predicated region
    $region18: #{lstm_pooling_forward_prepared.1} parent=1 // pred_check
      _
    $region19: #{lstm_pooling_forward_prepared.1} parent=1 // pred_check_branch
      %38 = sbr.rel (0) target = $region21
    $region20: #{lstm_pooling_forward_prepared.1} parent=1 // pred_region
      %39 = dma.done [#allocation4], 16384
    $region21: #{lstm_pooling_forward_prepared.1} parent=1 // pred_fallthru
      _
    // Predicated region
    $region22: #{lstm_pooling_forward_prepared.1} parent=1 // pred_check
      _
    $region23: #{lstm_pooling_forward_prepared.1} parent=1 // pred_check_branch
      %41 = sbr.rel (0) target = $region25
    $region24: #{lstm_pooling_forward_prepared.1} parent=1 // pred_region
      %42 = dma.done [#allocation6], 128
    $region25: #{lstm_pooling_forward_prepared.1} parent=1 // pred_fallthru
      _
    %v44 = vld [vmem:[%s0] sm:$0xf]
    %v45 = vld [vmem:[%s0 + $0x4] sm:$0xf]
    %v46 = vld [vmem:[%s0 + $0x8] sm:$0xf]
    %v47 = vld [vmem:[%s0 + $0xc] sm:$0xf]
    %v48 = vld [vmem:[%s0 + $0x10] sm:$0xf]
    %v49 = vld [vmem:[%s0 + $0x14] sm:$0xf]
    %v50 = vld [vmem:[%s0 + $0x18] sm:$0xf]
    %v51 = vld [vmem:[%s0 + $0x1c] sm:$0xf]
    %v52 = vld [vmem:[%s0 + $0x20] sm:$0xf]
    %v53 = vld [vmem:[%s0 + $0x24] sm:$0xf]
    %v54 = vld [vmem:[%s0 + $0x28] sm:$0xf]
    %v55 = vld [vmem:[%s0 + $0x2c] sm:$0xf]
    %v56 = vld [vmem:[%s0 + $0x30] sm:$0xf]
    %v57 = vld [vmem:[%s0 + $0x34] sm:$0xf]
    %v58 = vld [vmem:[%s0 + $0x38] sm:$0xf]
    %v59 = vld [vmem:[%s0 + $0x3c] sm:$0xf]
    %v60 = vld [vmem:[%s1] sm:$0xff]
    %v61 = vld [vmem:[%s1 + $0x8] sm:$0xff]
    %v62 = vld [vmem:[%s1 + $0x10] sm:$0xff]
    %v63 = vld [vmem:[%s1 + $0x18] sm:$0xff]
    %v64 = vld [vmem:[%s1 + $0x20] sm:$0xff]
    %v65 = vld [vmem:[%s1 + $0x28] sm:$0xff]
    %v66 = vld [vmem:[%s1 + $0x30] sm:$0xff]
    %v67 = vld [vmem:[%s1 + $0x38] sm:$0xff]
    %v68 = vld [vmem:[%s1 + $0x40] sm:$0xff]
    %v69 = vld [vmem:[%s1 + $0x48] sm:$0xff]
    %v70 = vld [vmem:[%s1 + $0x50] sm:$0xff]
    %v71 = vld [vmem:[%s1 + $0x58] sm:$0xff]
    %v72 = vld [vmem:[%s1 + $0x60] sm:$0xff]
    %v73 = vld [vmem:[%s1 + $0x68] sm:$0xff]
    %v74 = vld [vmem:[%s1 + $0x70] sm:$0xff]
    %v75 = vld [vmem:[%s1 + $0x78] sm:$0xff]
    %v76 = vld [vmem:[#allocation5] sm:$0xff]
    %v78 = vlaneseq
    %v79 = vshrl.u32 %v78, 7
    %v80 = vsub.s32 0, %v79
    %v81 = vrot.slane %v76, %v80
    %v82 = vlaneseq
    %v83 = vshrl.u32 %v82, 7
    %v84 = vsub.s32 1, %v83
    %v85 = vrot.slane %v76, %v84
    %v86 = vlaneseq
    %v87 = vshrl.u32 %v86, 7
    %v88 = vsub.s32 2, %v87
    %v89 = vrot.slane %v76, %v88
    %v90 = vlaneseq
    %v91 = vshrl.u32 %v90, 7
    %v92 = vsub.s32 3, %v91
    %v93 = vrot.slane %v76, %v92
    %v94 = vlaneseq
    %v95 = vshrl.u32 %v94, 7
    %v96 = vsub.s32 4, %v95
    %v97 = vrot.slane %v76, %v96
    %v98 = vlaneseq
    %v99 = vshrl.u32 %v98, 7
    %v100 = vsub.s32 5, %v99
    %v101 = vrot.slane %v76, %v100
    %v102 = vlaneseq
    %v103 = vshrl.u32 %v102, 7
    %v104 = vsub.s32 6, %v103
    %v105 = vrot.slane %v76, %v104
    %v106 = vlaneseq
    %v107 = vshrl.u32 %v106, 7
    %v108 = vsub.s32 7, %v107
    %v109 = vrot.slane %v76, %v108
    %v134 = vunpack.c.l.b16 %v44
    %v135 = vunpack.c.l.b16 %v45
    %v136 = vunpack.c.l.b16 %v46
    %v137 = vunpack.c.l.b16 %v47
    %v138 = vunpack.c.l.b16 %v48
    %v139 = vunpack.c.l.b16 %v49
    %v140 = vunpack.c.l.b16 %v50
    %v141 = vunpack.c.l.b16 %v51
    %v142 = vunpack.c.l.b16 %v52
    %v143 = vunpack.c.l.b16 %v53
    %v144 = vunpack.c.l.b16 %v54
    %v145 = vunpack.c.l.b16 %v55
    %v146 = vunpack.c.l.b16 %v56
    %v147 = vunpack.c.l.b16 %v57
    %v148 = vunpack.c.l.b16 %v58
    %v149 = vunpack.c.l.b16 %v59
    %v150 = vpack.c.b16 %v135, %v134
    %v151 = vpack.c.b16 %v137, %v136
    %v152 = vpack.c.b16 %v139, %v138
    %v153 = vpack.c.b16 %v141, %v140
    %v154 = vpack.c.b16 %v143, %v142
    %v155 = vpack.c.b16 %v145, %v144
    %v156 = vpack.c.b16 %v147, %v146
    %v157 = vpack.c.b16 %v149, %v148
    %v174 = vunpack.c.l.b16 %v60
    %v175 = vunpack.c.h.b16 %v60
    %v176 = vunpack.c.l.b16 %v61
    %v177 = vunpack.c.h.b16 %v61
    %v178 = vunpack.c.l.b16 %v62
    %v179 = vunpack.c.h.b16 %v62
    %v180 = vunpack.c.l.b16 %v63
    %v181 = vunpack.c.h.b16 %v63
    %v182 = vunpack.c.l.b16 %v64
    %v183 = vunpack.c.h.b16 %v64
    %v184 = vunpack.c.l.b16 %v65
    %v185 = vunpack.c.h.b16 %v65
    %v186 = vunpack.c.l.b16 %v66
    %v187 = vunpack.c.h.b16 %v66
    %v188 = vunpack.c.l.b16 %v67
    %v189 = vunpack.c.h.b16 %v67
    %v190 = vunpack.c.l.b16 %v68
    %v191 = vunpack.c.h.b16 %v68
    %v192 = vunpack.c.l.b16 %v69
    %v193 = vunpack.c.h.b16 %v69
    %v194 = vunpack.c.l.b16 %v70
    %v195 = vunpack.c.h.b16 %v70
    %v196 = vunpack.c.l.b16 %v71
    %v197 = vunpack.c.h.b16 %v71
    %v198 = vunpack.c.l.b16 %v72
    %v199 = vunpack.c.h.b16 %v72
    %v200 = vunpack.c.l.b16 %v73
    %v201 = vunpack.c.h.b16 %v73
    %v202 = vunpack.c.l.b16 %v74
    %v203 = vunpack.c.h.b16 %v74
    %v204 = vunpack.c.l.b16 %v75
    %v205 = vunpack.c.h.b16 %v75
    %v206 = vpack.c.b16 %v182, %v174
    %v207 = vpack.c.b16 %v183, %v175
    %v208 = vpack.c.b16 %v184, %v176
    %v209 = vpack.c.b16 %v185, %v177
    %v210 = vpack.c.b16 %v186, %v178
    %v211 = vpack.c.b16 %v187, %v179
    %v212 = vpack.c.b16 %v188, %v180
    %v213 = vpack.c.b16 %v189, %v181
    %v214 = vpack.c.b16 %v198, %v190
    %v215 = vpack.c.b16 %v199, %v191
    %v216 = vpack.c.b16 %v200, %v192
    %v217 = vpack.c.b16 %v201, %v193
    %v218 = vpack.c.b16 %v202, %v194
    %v219 = vpack.c.b16 %v203, %v195
    %v220 = vpack.c.b16 %v204, %v196
    %v221 = vpack.c.b16 %v205, %v197
    %vm238 = vcmask 261120
    %v240 = vsel %vm238, %v150, 0
    %v243 = vsel %vm238, %v151, 0
    %v246 = vsel %vm238, %v152, 0
    %v249 = vsel %vm238, %v153, 0
    %v252 = vsel %vm238, %v154, 0
    %v255 = vsel %vm238, %v155, 0
    %v258 = vsel %vm238, %v156, 0
    %v261 = vsel %vm238, %v157, 0
    %263 = vmatprep.subr.bf16.mxu0 0
    %264 = vmatpush1.bf16.msra.mxu0 0
    %265 = vmatprep.subr.bf16.mxu0 0
    %266 = vmatpush1.bf16.msra.mxu0 0
    %267 = vmatprep.subr.bf16.mxu0 0
    %268 = vmatpush1.bf16.msra.mxu0 0
    %269 = vmatprep.subr.bf16.mxu0 0
    %270 = vmatpush1.bf16.msra.mxu0 0
    %271 = vmatprep.subr.bf16.mxu0 0
    %272 = vmatpush1.bf16.msra.mxu0 0
    %273 = vmatprep.subr.bf16.mxu0 0
    %274 = vmatpush1.bf16.msra.mxu0 0
    %275 = vmatprep.subr.bf16.mxu0 %v215
    %276 = vmatpush1.bf16.msra.mxu0 %v214
    %277 = vmatprep.subr.bf16.mxu0 %v207
    %278 = vmatpush1.bf16.msra.mxu0 %v206
    %279 = vmatprep.subr.bf16.mxu0 0
    %280 = vmatpush2.bf16.msra.mxu0 0
    %281 = vmatprep.subr.bf16.mxu0 0
    %282 = vmatpush2.bf16.msra.mxu0 0
    %283 = vmatprep.subr.bf16.mxu0 0
    %284 = vmatpush2.bf16.msra.mxu0 0
    %285 = vmatprep.subr.bf16.mxu0 0
    %286 = vmatpush2.bf16.msra.mxu0 0
    %287 = vmatprep.subr.bf16.mxu0 0
    %288 = vmatpush2.bf16.msra.mxu0 0
    %289 = vmatprep.subr.bf16.mxu0 0
    %290 = vmatpush2.bf16.msra.mxu0 0
    %291 = vmatprep.subr.bf16.mxu0 0
    %292 = vmatpush2.bf16.msra.mxu0 0
    %293 = vmatprep.subr.bf16.mxu0 0
    %294 = vmatpush2.bf16.msra.mxu0 0
    %295 = vmatprep.mubr.bf16.mxu0 0
    %296 = vmatmul.mubr.bf16.gmra.mxu0 %v240
    %v297 = vpop.f32.mrf.mxu0
    %v298 = vadd.f32 %v81, %v297
    %v299 = vpop.f32.mrf.mxu0
    %v300 = vadd.f32 %v85, %v299
    %v301 = vpop.f32.mrf.mxu0
    %v302 = vadd.f32 %v81, %v301
    %v303 = vpop.f32.mrf.mxu0
    %v304 = vadd.f32 %v85, %v303
    %305 = vmatprep.mubr.bf16.mxu0 0
    %306 = vmatmul.mubr.bf16.gmra.mxu0 %v243
    %v307 = vpop.f32.mrf.mxu0
    %v308 = vadd.f32 %v81, %v307
    %v309 = vpop.f32.mrf.mxu0
    %v310 = vadd.f32 %v85, %v309
    %v311 = vpop.f32.mrf.mxu0
    %v312 = vadd.f32 %v81, %v311
    %v313 = vpop.f32.mrf.mxu0
    %v314 = vadd.f32 %v85, %v313
    %315 = vmatprep.mubr.bf16.mxu0 0
    %316 = vmatmul.mubr.bf16.gmra.mxu0 %v246
    %v317 = vpop.f32.mrf.mxu0
    %v318 = vadd.f32 %v81, %v317
    %v319 = vpop.f32.mrf.mxu0
    %v320 = vadd.f32 %v85, %v319
    %v321 = vpop.f32.mrf.mxu0
    %v322 = vadd.f32 %v81, %v321
    %v323 = vpop.f32.mrf.mxu0
    %v324 = vadd.f32 %v85, %v323
    %325 = vmatprep.mubr.bf16.mxu0 0
    %326 = vmatmul.mubr.bf16.gmra.mxu0 %v249
    %v327 = vpop.f32.mrf.mxu0
    %v328 = vadd.f32 %v81, %v327
    %v329 = vpop.f32.mrf.mxu0
    %v330 = vadd.f32 %v85, %v329
    %v331 = vpop.f32.mrf.mxu0
    %v332 = vadd.f32 %v81, %v331
    %v333 = vpop.f32.mrf.mxu0
    %v334 = vadd.f32 %v85, %v333
    %335 = vmatprep.mubr.bf16.mxu0 0
    %336 = vmatmul.mubr.bf16.gmra.mxu0 %v252
    %v337 = vpop.f32.mrf.mxu0
    %v338 = vadd.f32 %v81, %v337
    %v339 = vpop.f32.mrf.mxu0
    %v340 = vadd.f32 %v85, %v339
    %v341 = vpop.f32.mrf.mxu0
    %v342 = vadd.f32 %v81, %v341
    %v343 = vpop.f32.mrf.mxu0
    %v344 = vadd.f32 %v85, %v343
    %345 = vmatprep.mubr.bf16.mxu0 0
    %346 = vmatmul.mubr.bf16.gmra.mxu0 %v255
    %v347 = vpop.f32.mrf.mxu0
    %v348 = vadd.f32 %v81, %v347
    %v349 = vpop.f32.mrf.mxu0
    %v350 = vadd.f32 %v85, %v349
    %v351 = vpop.f32.mrf.mxu0
    %v352 = vadd.f32 %v81, %v351
    %v353 = vpop.f32.mrf.mxu0
    %v354 = vadd.f32 %v85, %v353
    %355 = vmatprep.mubr.bf16.mxu0 0
    %356 = vmatmul.mubr.bf16.gmra.mxu0 %v258
    %v357 = vpop.f32.mrf.mxu0
    %v358 = vadd.f32 %v81, %v357
    %v359 = vpop.f32.mrf.mxu0
    %v360 = vadd.f32 %v85, %v359
    %v361 = vpop.f32.mrf.mxu0
    %v362 = vadd.f32 %v81, %v361
    %v363 = vpop.f32.mrf.mxu0
    %v364 = vadd.f32 %v85, %v363
    %365 = vmatprep.mubr.bf16.mxu0 0
    %366 = vmatmul.mubr.bf16.gmra.mxu0 %v261
    %v367 = vpop.f32.mrf.mxu0
    %v368 = vadd.f32 %v81, %v367
    %v369 = vpop.f32.mrf.mxu0
    %v370 = vadd.f32 %v85, %v369
    %v371 = vpop.f32.mrf.mxu0
    %v372 = vadd.f32 %v81, %v371
    %v373 = vpop.f32.mrf.mxu0
    %v374 = vadd.f32 %v85, %v373
    %375 = vdwg.mxu0
    %376 = vmatprep.subr.bf16.mxu0 0
    %377 = vmatpush1.bf16.msra.mxu0 0
    %378 = vmatprep.subr.bf16.mxu0 0
    %379 = vmatpush1.bf16.msra.mxu0 0
    %380 = vmatprep.subr.bf16.mxu0 0
    %381 = vmatpush1.bf16.msra.mxu0 0
    %382 = vmatprep.subr.bf16.mxu0 0
    %383 = vmatpush1.bf16.msra.mxu0 0
    %384 = vmatprep.subr.bf16.mxu0 0
    %385 = vmatpush1.bf16.msra.mxu0 0
    %386 = vmatprep.subr.bf16.mxu0 0
    %387 = vmatpush1.bf16.msra.mxu0 0
    %388 = vmatprep.subr.bf16.mxu0 %v217
    %389 = vmatpush1.bf16.msra.mxu0 %v216
    %390 = vmatprep.subr.bf16.mxu0 %v209
    %391 = vmatpush1.bf16.msra.mxu0 %v208
    %392 = vmatprep.subr.bf16.mxu0 0
    %393 = vmatpush2.bf16.msra.mxu0 0
    %394 = vmatprep.subr.bf16.mxu0 0
    %395 = vmatpush2.bf16.msra.mxu0 0
    %396 = vmatprep.subr.bf16.mxu0 0
    %397 = vmatpush2.bf16.msra.mxu0 0
    %398 = vmatprep.subr.bf16.mxu0 0
    %399 = vmatpush2.bf16.msra.mxu0 0
    %400 = vmatprep.subr.bf16.mxu0 0
    %401 = vmatpush2.bf16.msra.mxu0 0
    %402 = vmatprep.subr.bf16.mxu0 0
    %403 = vmatpush2.bf16.msra.mxu0 0
    %404 = vmatprep.subr.bf16.mxu0 0
    %405 = vmatpush2.bf16.msra.mxu0 0
    %406 = vmatprep.subr.bf16.mxu0 0
    %407 = vmatpush2.bf16.msra.mxu0 0
    %408 = vmatprep.mubr.bf16.mxu0 0
    %409 = vmatmul.mubr.bf16.gmra.mxu0 %v240
    %v410 = vpop.f32.mrf.mxu0
    %v411 = vadd.f32 %v89, %v410
    %v412 = vpop.f32.mrf.mxu0
    %v413 = vadd.f32 %v93, %v412
    %v414 = vpop.f32.mrf.mxu0
    %v415 = vadd.f32 %v89, %v414
    %v416 = vpop.f32.mrf.mxu0
    %v417 = vadd.f32 %v93, %v416
    %418 = vmatprep.mubr.bf16.mxu0 0
    %419 = vmatmul.mubr.bf16.gmra.mxu0 %v243
    %v420 = vpop.f32.mrf.mxu0
    %v421 = vadd.f32 %v89, %v420
    %v422 = vpop.f32.mrf.mxu0
    %v423 = vadd.f32 %v93, %v422
    %v424 = vpop.f32.mrf.mxu0
    %v425 = vadd.f32 %v89, %v424
    %v426 = vpop.f32.mrf.mxu0
    %v427 = vadd.f32 %v93, %v426
    %428 = vmatprep.mubr.bf16.mxu0 0
    %429 = vmatmul.mubr.bf16.gmra.mxu0 %v246
    %v430 = vpop.f32.mrf.mxu0
    %v431 = vadd.f32 %v89, %v430
    %v432 = vpop.f32.mrf.mxu0
    %v433 = vadd.f32 %v93, %v432
    %v434 = vpop.f32.mrf.mxu0
    %v435 = vadd.f32 %v89, %v434
    %v436 = vpop.f32.mrf.mxu0
    %v437 = vadd.f32 %v93, %v436
    %438 = vmatprep.mubr.bf16.mxu0 0
    %439 = vmatmul.mubr.bf16.gmra.mxu0 %v249
    %v440 = vpop.f32.mrf.mxu0
    %v441 = vadd.f32 %v89, %v440
    %v442 = vpop.f32.mrf.mxu0
    %v443 = vadd.f32 %v93, %v442
    %v444 = vpop.f32.mrf.mxu0
    %v445 = vadd.f32 %v89, %v444
    %v446 = vpop.f32.mrf.mxu0
    %v447 = vadd.f32 %v93, %v446
    %448 = vmatprep.mubr.bf16.mxu0 0
    %449 = vmatmul.mubr.bf16.gmra.mxu0 %v252
    %v450 = vpop.f32.mrf.mxu0
    %v451 = vadd.f32 %v89, %v450
    %v452 = vpop.f32.mrf.mxu0
    %v453 = vadd.f32 %v93, %v452
    %v454 = vpop.f32.mrf.mxu0
    %v455 = vadd.f32 %v89, %v454
    %v456 = vpop.f32.mrf.mxu0
    %v457 = vadd.f32 %v93, %v456
    %458 = vmatprep.mubr.bf16.mxu0 0
    %459 = vmatmul.mubr.bf16.gmra.mxu0 %v255
    %v460 = vpop.f32.mrf.mxu0
    %v461 = vadd.f32 %v89, %v460
    %v462 = vpop.f32.mrf.mxu0
    %v463 = vadd.f32 %v93, %v462
    %v464 = vpop.f32.mrf.mxu0
    %v465 = vadd.f32 %v89, %v464
    %v466 = vpop.f32.mrf.mxu0
    %v467 = vadd.f32 %v93, %v466
    %468 = vmatprep.mubr.bf16.mxu0 0
    %469 = vmatmul.mubr.bf16.gmra.mxu0 %v258
    %v470 = vpop.f32.mrf.mxu0
    %v471 = vadd.f32 %v89, %v470
    %v472 = vpop.f32.mrf.mxu0
    %v473 = vadd.f32 %v93, %v472
    %v474 = vpop.f32.mrf.mxu0
    %v475 = vadd.f32 %v89, %v474
    %v476 = vpop.f32.mrf.mxu0
    %v477 = vadd.f32 %v93, %v476
    %478 = vmatprep.mubr.bf16.mxu0 0
    %479 = vmatmul.mubr.bf16.gmra.mxu0 %v261
    %v480 = vpop.f32.mrf.mxu0
    %v481 = vadd.f32 %v89, %v480
    %v482 = vpop.f32.mrf.mxu0
    %v483 = vadd.f32 %v93, %v482
    %v484 = vpop.f32.mrf.mxu0
    %v485 = vadd.f32 %v89, %v484
    %v486 = vpop.f32.mrf.mxu0
    %v487 = vadd.f32 %v93, %v486
    %488 = vdwg.mxu0
    %489 = vmatprep.subr.bf16.mxu0 0
    %490 = vmatpush1.bf16.msra.mxu0 0
    %491 = vmatprep.subr.bf16.mxu0 0
    %492 = vmatpush1.bf16.msra.mxu0 0
    %493 = vmatprep.subr.bf16.mxu0 0
    %494 = vmatpush1.bf16.msra.mxu0 0
    %495 = vmatprep.subr.bf16.mxu0 0
    %496 = vmatpush1.bf16.msra.mxu0 0
    %497 = vmatprep.subr.bf16.mxu0 0
    %498 = vmatpush1.bf16.msra.mxu0 0
    %499 = vmatprep.subr.bf16.mxu0 0
    %500 = vmatpush1.bf16.msra.mxu0 0
    %501 = vmatprep.subr.bf16.mxu0 %v219
    %502 = vmatpush1.bf16.msra.mxu0 %v218
    %503 = vmatprep.subr.bf16.mxu0 %v211
    %504 = vmatpush1.bf16.msra.mxu0 %v210
    %505 = vmatprep.subr.bf16.mxu0 0
    %506 = vmatpush2.bf16.msra.mxu0 0
    %507 = vmatprep.subr.bf16.mxu0 0
    %508 = vmatpush2.bf16.msra.mxu0 0
    %509 = vmatprep.subr.bf16.mxu0 0
    %510 = vmatpush2.bf16.msra.mxu0 0
    %511 = vmatprep.subr.bf16.mxu0 0
    %512 = vmatpush2.bf16.msra.mxu0 0
    %513 = vmatprep.subr.bf16.mxu0 0
    %514 = vmatpush2.bf16.msra.mxu0 0
    %515 = vmatprep.subr.bf16.mxu0 0
    %516 = vmatpush2.bf16.msra.mxu0 0
    %517 = vmatprep.subr.bf16.mxu0 0
    %518 = vmatpush2.bf16.msra.mxu0 0
    %519 = vmatprep.subr.bf16.mxu0 0
    %520 = vmatpush2.bf16.msra.mxu0 0
    %521 = vmatprep.mubr.bf16.mxu0 0
    %522 = vmatmul.mubr.bf16.gmra.mxu0 %v240
    %v523 = vpop.f32.mrf.mxu0
    %v524 = vadd.f32 %v97, %v523
    %v525 = vpop.f32.mrf.mxu0
    %v526 = vadd.f32 %v101, %v525
    %v527 = vpop.f32.mrf.mxu0
    %v528 = vadd.f32 %v97, %v527
    %v529 = vpop.f32.mrf.mxu0
    %v530 = vadd.f32 %v101, %v529
    %531 = vmatprep.mubr.bf16.mxu0 0
    %532 = vmatmul.mubr.bf16.gmra.mxu0 %v243
    %v533 = vpop.f32.mrf.mxu0
    %v534 = vadd.f32 %v97, %v533
    %v535 = vpop.f32.mrf.mxu0
    %v536 = vadd.f32 %v101, %v535
    %v537 = vpop.f32.mrf.mxu0
    %v538 = vadd.f32 %v97, %v537
    %v539 = vpop.f32.mrf.mxu0
    %v540 = vadd.f32 %v101, %v539
    %541 = vmatprep.mubr.bf16.mxu0 0
    %542 = vmatmul.mubr.bf16.gmra.mxu0 %v246
    %v543 = vpop.f32.mrf.mxu0
    %v544 = vadd.f32 %v97, %v543
    %v545 = vpop.f32.mrf.mxu0
    %v546 = vadd.f32 %v101, %v545
    %v547 = vpop.f32.mrf.mxu0
    %v548 = vadd.f32 %v97, %v547
    %v549 = vpop.f32.mrf.mxu0
    %v550 = vadd.f32 %v101, %v549
    %551 = vmatprep.mubr.bf16.mxu0 0
    %552 = vmatmul.mubr.bf16.gmra.mxu0 %v249
    %v553 = vpop.f32.mrf.mxu0
    %v554 = vadd.f32 %v97, %v553
    %v555 = vpop.f32.mrf.mxu0
    %v556 = vadd.f32 %v101, %v555
    %v557 = vpop.f32.mrf.mxu0
    %v558 = vadd.f32 %v97, %v557
    %v559 = vpop.f32.mrf.mxu0
    %v560 = vadd.f32 %v101, %v559
    %561 = vmatprep.mubr.bf16.mxu0 0
    %562 = vmatmul.mubr.bf16.gmra.mxu0 %v252
    %v563 = vpop.f32.mrf.mxu0
    %v564 = vadd.f32 %v97, %v563
    %v565 = vpop.f32.mrf.mxu0
    %v566 = vadd.f32 %v101, %v565
    %v567 = vpop.f32.mrf.mxu0
    %v568 = vadd.f32 %v97, %v567
    %v569 = vpop.f32.mrf.mxu0
    %v570 = vadd.f32 %v101, %v569
    %571 = vmatprep.mubr.bf16.mxu0 0
    %572 = vmatmul.mubr.bf16.gmra.mxu0 %v255
    %v573 = vpop.f32.mrf.mxu0
    %v574 = vadd.f32 %v97, %v573
    %v575 = vpop.f32.mrf.mxu0
    %v576 = vadd.f32 %v101, %v575
    %v577 = vpop.f32.mrf.mxu0
    %v578 = vadd.f32 %v97, %v577
    %v579 = vpop.f32.mrf.mxu0
    %v580 = vadd.f32 %v101, %v579
    %581 = vmatprep.mubr.bf16.mxu0 0
    %582 = vmatmul.mubr.bf16.gmra.mxu0 %v258
    %v583 = vpop.f32.mrf.mxu0
    %v584 = vadd.f32 %v97, %v583
    %v585 = vpop.f32.mrf.mxu0
    %v586 = vadd.f32 %v101, %v585
    %v587 = vpop.f32.mrf.mxu0
    %v588 = vadd.f32 %v97, %v587
    %v589 = vpop.f32.mrf.mxu0
    %v590 = vadd.f32 %v101, %v589
    %591 = vmatprep.mubr.bf16.mxu0 0
    %592 = vmatmul.mubr.bf16.gmra.mxu0 %v261
    %v593 = vpop.f32.mrf.mxu0
    %v594 = vadd.f32 %v97, %v593
    %v595 = vpop.f32.mrf.mxu0
    %v596 = vadd.f32 %v101, %v595
    %v597 = vpop.f32.mrf.mxu0
    %v598 = vadd.f32 %v97, %v597
    %v599 = vpop.f32.mrf.mxu0
    %v600 = vadd.f32 %v101, %v599
    %601 = vdwg.mxu0
    %602 = vmatprep.subr.bf16.mxu0 0
    %603 = vmatpush1.bf16.msra.mxu0 0
    %604 = vmatprep.subr.bf16.mxu0 0
    %605 = vmatpush1.bf16.msra.mxu0 0
    %606 = vmatprep.subr.bf16.mxu0 0
    %607 = vmatpush1.bf16.msra.mxu0 0
    %608 = vmatprep.subr.bf16.mxu0 0
    %609 = vmatpush1.bf16.msra.mxu0 0
    %610 = vmatprep.subr.bf16.mxu0 0
    %611 = vmatpush1.bf16.msra.mxu0 0
    %612 = vmatprep.subr.bf16.mxu0 0
    %613 = vmatpush1.bf16.msra.mxu0 0
    %614 = vmatprep.subr.bf16.mxu0 %v221
    %615 = vmatpush1.bf16.msra.mxu0 %v220
    %616 = vmatprep.subr.bf16.mxu0 %v213
    %617 = vmatpush1.bf16.msra.mxu0 %v212
    %618 = vmatprep.subr.bf16.mxu0 0
    %619 = vmatpush2.bf16.msra.mxu0 0
    %620 = vmatprep.subr.bf16.mxu0 0
    %621 = vmatpush2.bf16.msra.mxu0 0
    %622 = vmatprep.subr.bf16.mxu0 0
    %623 = vmatpush2.bf16.msra.mxu0 0
    %624 = vmatprep.subr.bf16.mxu0 0
    %625 = vmatpush2.bf16.msra.mxu0 0
    %626 = vmatprep.subr.bf16.mxu0 0
    %627 = vmatpush2.bf16.msra.mxu0 0
    %628 = vmatprep.subr.bf16.mxu0 0
    %629 = vmatpush2.bf16.msra.mxu0 0
    %630 = vmatprep.subr.bf16.mxu0 0
    %631 = vmatpush2.bf16.msra.mxu0 0
    %632 = vmatprep.subr.bf16.mxu0 0
    %633 = vmatpush2.bf16.msra.mxu0 0
    %634 = vmatprep.mubr.bf16.mxu0 0
    %635 = vmatmul.mubr.bf16.gmra.mxu0 %v240
    %v636 = vpop.f32.mrf.mxu0
    %v637 = vadd.f32 %v105, %v636
    %v638 = vpop.f32.mrf.mxu0
    %v639 = vadd.f32 %v109, %v638
    %v640 = vpop.f32.mrf.mxu0
    %v641 = vadd.f32 %v105, %v640
    %v642 = vpop.f32.mrf.mxu0
    %v643 = vadd.f32 %v109, %v642
    %644 = vmatprep.mubr.bf16.mxu0 0
    %645 = vmatmul.mubr.bf16.gmra.mxu0 %v243
    %v646 = vpop.f32.mrf.mxu0
    %v647 = vadd.f32 %v105, %v646
    %v648 = vpop.f32.mrf.mxu0
    %v649 = vadd.f32 %v109, %v648
    %v650 = vpop.f32.mrf.mxu0
    %v651 = vadd.f32 %v105, %v650
    %v652 = vpop.f32.mrf.mxu0
    %v653 = vadd.f32 %v109, %v652
    %654 = vmatprep.mubr.bf16.mxu0 0
    %655 = vmatmul.mubr.bf16.gmra.mxu0 %v246
    %v656 = vpop.f32.mrf.mxu0
    %v657 = vadd.f32 %v105, %v656
    %v658 = vpop.f32.mrf.mxu0
    %v659 = vadd.f32 %v109, %v658
    %v660 = vpop.f32.mrf.mxu0
    %v661 = vadd.f32 %v105, %v660
    %v662 = vpop.f32.mrf.mxu0
    %v663 = vadd.f32 %v109, %v662
    %664 = vmatprep.mubr.bf16.mxu0 0
    %665 = vmatmul.mubr.bf16.gmra.mxu0 %v249
    %v666 = vpop.f32.mrf.mxu0
    %v667 = vadd.f32 %v105, %v666
    %v668 = vpop.f32.mrf.mxu0
    %v669 = vadd.f32 %v109, %v668
    %v670 = vpop.f32.mrf.mxu0
    %v671 = vadd.f32 %v105, %v670
    %v672 = vpop.f32.mrf.mxu0
    %v673 = vadd.f32 %v109, %v672
    %674 = vmatprep.mubr.bf16.mxu0 0
    %675 = vmatmul.mubr.bf16.gmra.mxu0 %v252
    %v676 = vpop.f32.mrf.mxu0
    %v677 = vadd.f32 %v105, %v676
    %v678 = vpop.f32.mrf.mxu0
    %v679 = vadd.f32 %v109, %v678
    %v680 = vpop.f32.mrf.mxu0
    %v681 = vadd.f32 %v105, %v680
    %v682 = vpop.f32.mrf.mxu0
    %v683 = vadd.f32 %v109, %v682
    %684 = vmatprep.mubr.bf16.mxu0 0
    %685 = vmatmul.mubr.bf16.gmra.mxu0 %v255
    %v686 = vpop.f32.mrf.mxu0
    %v687 = vadd.f32 %v105, %v686
    %v688 = vpop.f32.mrf.mxu0
    %v689 = vadd.f32 %v109, %v688
    %v690 = vpop.f32.mrf.mxu0
    %v691 = vadd.f32 %v105, %v690
    %v692 = vpop.f32.mrf.mxu0
    %v693 = vadd.f32 %v109, %v692
    %694 = vmatprep.mubr.bf16.mxu0 0
    %695 = vmatmul.mubr.bf16.gmra.mxu0 %v258
    %v696 = vpop.f32.mrf.mxu0
    %v697 = vadd.f32 %v105, %v696
    %v698 = vpop.f32.mrf.mxu0
    %v699 = vadd.f32 %v109, %v698
    %v700 = vpop.f32.mrf.mxu0
    %v701 = vadd.f32 %v105, %v700
    %v702 = vpop.f32.mrf.mxu0
    %v703 = vadd.f32 %v109, %v702
    %704 = vmatprep.mubr.bf16.mxu0 0
    %705 = vmatmul.mubr.bf16.gmra.mxu0 %v261
    %v706 = vpop.f32.mrf.mxu0
    %v707 = vadd.f32 %v105, %v706
    %v708 = vpop.f32.mrf.mxu0
    %v709 = vadd.f32 %v109, %v708
    %v710 = vpop.f32.mrf.mxu0
    %v711 = vadd.f32 %v105, %v710
    %v712 = vpop.f32.mrf.mxu0
    %v713 = vadd.f32 %v109, %v712
    %714 = vdwg.mxu0
    %715 = vst [vmem:[#allocation2] sm:$0xff] %v298
    %716 = vst [vmem:[#allocation2 + $0x8] sm:$0xff] %v300
    %717 = vst [vmem:[#allocation2 + $0x10] sm:$0xff] %v411
    %718 = vst [vmem:[#allocation2 + $0x18] sm:$0xff] %v413
    %719 = vst [vmem:[#allocation2 + $0x20] sm:$0xff] %v524
    %720 = vst [vmem:[#allocation2 + $0x28] sm:$0xff] %v526
    %721 = vst [vmem:[#allocation2 + $0x30] sm:$0xff] %v637
    %722 = vst [vmem:[#allocation2 + $0x38] sm:$0xff] %v639
    %723 = vst [vmem:[#allocation2 + $0x40] sm:$0xff] %v302
    %724 = vst [vmem:[#allocation2 + $0x48] sm:$0xff] %v304
    %725 = vst [vmem:[#allocation2 + $0x50] sm:$0xff] %v415
    %726 = vst [vmem:[#allocation2 + $0x58] sm:$0xff] %v417
    %727 = vst [vmem:[#allocation2 + $0x60] sm:$0xff] %v528
    %728 = vst [vmem:[#allocation2 + $0x68] sm:$0xff] %v530
    %729 = vst [vmem:[#allocation2 + $0x70] sm:$0xff] %v641
    %730 = vst [vmem:[#allocation2 + $0x78] sm:$0xff] %v643
    %731 = vst [vmem:[#allocation2 + $0x80] sm:$0xff] %v308
    %732 = vst [vmem:[#allocation2 + $0x88] sm:$0xff] %v310
    %733 = vst [vmem:[#allocation2 + $0x90] sm:$0xff] %v421
    %734 = vst [vmem:[#allocation2 + $0x98] sm:$0xff] %v423
    %735 = vst [vmem:[#allocation2 + $0xa0] sm:$0xff] %v534
    %736 = vst [vmem:[#allocation2 + $0xa8] sm:$0xff] %v536
    %737 = vst [vmem:[#allocation2 + $0xb0] sm:$0xff] %v647
    %738 = vst [vmem:[#allocation2 + $0xb8] sm:$0xff] %v649
    %739 = vst [vmem:[#allocation2 + $0xc0] sm:$0xff] %v312
    %740 = vst [vmem:[#allocation2 + $0xc8] sm:$0xff] %v314
    %741 = vst [vmem:[#allocation2 + $0xd0] sm:$0xff] %v425
    %742 = vst [vmem:[#allocation2 + $0xd8] sm:$0xff] %v427
    %743 = vst [vmem:[#allocation2 + $0xe0] sm:$0xff] %v538
    %744 = vst [vmem:[#allocation2 + $0xe8] sm:$0xff] %v540
    %745 = vst [vmem:[#allocation2 + $0xf0] sm:$0xff] %v651
    %746 = vst [vmem:[#allocation2 + $0xf8] sm:$0xff] %v653
    %747 = vst [vmem:[#allocation2 + $0x100] sm:$0xff] %v318
    %748 = vst [vmem:[#allocation2 + $0x108] sm:$0xff] %v320
    %749 = vst [vmem:[#allocation2 + $0x110] sm:$0xff] %v431
    %750 = vst [vmem:[#allocation2 + $0x118] sm:$0xff] %v433
    %751 = vst [vmem:[#allocation2 + $0x120] sm:$0xff] %v544
    %752 = vst [vmem:[#allocation2 + $0x128] sm:$0xff] %v546
    %753 = vst [vmem:[#allocation2 + $0x130] sm:$0xff] %v657
    %754 = vst [vmem:[#allocation2 + $0x138] sm:$0xff] %v659
    %755 = vst [vmem:[#allocation2 + $0x140] sm:$0xff] %v322
    %756 = vst [vmem:[#allocation2 + $0x148] sm:$0xff] %v324
    %757 = vst [vmem:[#allocation2 + $0x150] sm:$0xff] %v435
    %758 = vst [vmem:[#allocation2 + $0x158] sm:$0xff] %v437
    %759 = vst [vmem:[#allocation2 + $0x160] sm:$0xff] %v548
    %760 = vst [vmem:[#allocation2 + $0x168] sm:$0xff] %v550
    %761 = vst [vmem:[#allocation2 + $0x170] sm:$0xff] %v661
    %762 = vst [vmem:[#allocation2 + $0x178] sm:$0xff] %v663
    %763 = vst [vmem:[#allocation2 + $0x180] sm:$0xff] %v328
    %764 = vst [vmem:[#allocation2 + $0x188] sm:$0xff] %v330
    %765 = vst [vmem:[#allocation2 + $0x190] sm:$0xff] %v441
    %766 = vst [vmem:[#allocation2 + $0x198] sm:$0xff] %v443
    %767 = vst [vmem:[#allocation2 + $0x1a0] sm:$0xff] %v554
    %768 = vst [vmem:[#allocation2 + $0x1a8] sm:$0xff] %v556
    %769 = vst [vmem:[#allocation2 + $0x1b0] sm:$0xff] %v667
    %770 = vst [vmem:[#allocation2 + $0x1b8] sm:$0xff] %v669
    %771 = vst [vmem:[#allocation2 + $0x1c0] sm:$0xff] %v332
    %772 = vst [vmem:[#allocation2 + $0x1c8] sm:$0xff] %v334
    %773 = vst [vmem:[#allocation2 + $0x1d0] sm:$0xff] %v445
    %774 = vst [vmem:[#allocation2 + $0x1d8] sm:$0xff] %v447
    %775 = vst [vmem:[#allocation2 + $0x1e0] sm:$0xff] %v558
    %776 = vst [vmem:[#allocation2 + $0x1e8] sm:$0xff] %v560
    %777 = vst [vmem:[#allocation2 + $0x1f0] sm:$0xff] %v671
    %778 = vst [vmem:[#allocation2 + $0x1f8] sm:$0xff] %v673
    %779 = vst [vmem:[#allocation2 + $0x200] sm:$0xff] %v338
    %780 = vst [vmem:[#allocation2 + $0x208] sm:$0xff] %v340
    %781 = vst [vmem:[#allocation2 + $0x210] sm:$0xff] %v451
    %782 = vst [vmem:[#allocation2 + $0x218] sm:$0xff] %v453
    %783 = vst [vmem:[#allocation2 + $0x220] sm:$0xff] %v564
    %784 = vst [vmem:[#allocation2 + $0x228] sm:$0xff] %v566
    %785 = vst [vmem:[#allocation2 + $0x230] sm:$0xff] %v677
    %786 = vst [vmem:[#allocation2 + $0x238] sm:$0xff] %v679
    %787 = vst [vmem:[#allocation2 + $0x240] sm:$0xff] %v342
    %788 = vst [vmem:[#allocation2 + $0x248] sm:$0xff] %v344
    %789 = vst [vmem:[#allocation2 + $0x250] sm:$0xff] %v455
    %790 = vst [vmem:[#allocation2 + $0x258] sm:$0xff] %v457
    %791 = vst [vmem:[#allocation2 + $0x260] sm:$0xff] %v568
    %792 = vst [vmem:[#allocation2 + $0x268] sm:$0xff] %v570
    %793 = vst [vmem:[#allocation2 + $0x270] sm:$0xff] %v681
    %794 = vst [vmem:[#allocation2 + $0x278] sm:$0xff] %v683
    %795 = vst [vmem:[#allocation2 + $0x280] sm:$0xff] %v348
    %796 = vst [vmem:[#allocation2 + $0x288] sm:$0xff] %v350
    %797 = vst [vmem:[#allocation2 + $0x290] sm:$0xff] %v461
    %798 = vst [vmem:[#allocation2 + $0x298] sm:$0xff] %v463
    %799 = vst [vmem:[#allocation2 + $0x2a0] sm:$0xff] %v574
    %800 = vst [vmem:[#allocation2 + $0x2a8] sm:$0xff] %v576
    %801 = vst [vmem:[#allocation2 + $0x2b0] sm:$0xff] %v687
    %802 = vst [vmem:[#allocation2 + $0x2b8] sm:$0xff] %v689
    %803 = vst [vmem:[#allocation2 + $0x2c0] sm:$0xff] %v352
    %804 = vst [vmem:[#allocation2 + $0x2c8] sm:$0xff] %v354
    %805 = vst [vmem:[#allocation2 + $0x2d0] sm:$0xff] %v465
    %806 = vst [vmem:[#allocation2 + $0x2d8] sm:$0xff] %v467
    %807 = vst [vmem:[#allocation2 + $0x2e0] sm:$0xff] %v578
    %808 = vst [vmem:[#allocation2 + $0x2e8] sm:$0xff] %v580
    %809 = vst [vmem:[#allocation2 + $0x2f0] sm:$0xff] %v691
    %810 = vst [vmem:[#allocation2 + $0x2f8] sm:$0xff] %v693
    %811 = vst [vmem:[#allocation2 + $0x300] sm:$0xff] %v358
    %812 = vst [vmem:[#allocation2 + $0x308] sm:$0xff] %v360
    %813 = vst [vmem:[#allocation2 + $0x310] sm:$0xff] %v471
    %814 = vst [vmem:[#allocation2 + $0x318] sm:$0xff] %v473
    %815 = vst [vmem:[#allocation2 + $0x320] sm:$0xff] %v584
    %816 = vst [vmem:[#allocation2 + $0x328] sm:$0xff] %v586
    %817 = vst [vmem:[#allocation2 + $0x330] sm:$0xff] %v697
    %818 = vst [vmem:[#allocation2 + $0x338] sm:$0xff] %v699
    %819 = vst [vmem:[#allocation2 + $0x340] sm:$0xff] %v362
    %820 = vst [vmem:[#allocation2 + $0x348] sm:$0xff] %v364
    %821 = vst [vmem:[#allocation2 + $0x350] sm:$0xff] %v475
    %822 = vst [vmem:[#allocation2 + $0x358] sm:$0xff] %v477
    %823 = vst [vmem:[#allocation2 + $0x360] sm:$0xff] %v588
    %824 = vst [vmem:[#allocation2 + $0x368] sm:$0xff] %v590
    %825 = vst [vmem:[#allocation2 + $0x370] sm:$0xff] %v701
    %826 = vst [vmem:[#allocation2 + $0x378] sm:$0xff] %v703
    %827 = vst [vmem:[#allocation2 + $0x380] sm:$0xff] %v368
    %828 = vst [vmem:[#allocation2 + $0x388] sm:$0xff] %v370
    %829 = vst [vmem:[#allocation2 + $0x390] sm:$0xff] %v481
    %830 = vst [vmem:[#allocation2 + $0x398] sm:$0xff] %v483
    %831 = vst [vmem:[#allocation2 + $0x3a0] sm:$0xff] %v594
    %832 = vst [vmem:[#allocation2 + $0x3a8] sm:$0xff] %v596
    %833 = vst [vmem:[#allocation2 + $0x3b0] sm:$0xff] %v707
    %834 = vst [vmem:[#allocation2 + $0x3b8] sm:$0xff] %v709
    %835 = vst [vmem:[#allocation2 + $0x3c0] sm:$0xff] %v372
    %836 = vst [vmem:[#allocation2 + $0x3c8] sm:$0xff] %v374
    %837 = vst [vmem:[#allocation2 + $0x3d0] sm:$0xff] %v485
    %838 = vst [vmem:[#allocation2 + $0x3d8] sm:$0xff] %v487
    %839 = vst [vmem:[#allocation2 + $0x3e0] sm:$0xff] %v598
    %840 = vst [vmem:[#allocation2 + $0x3e8] sm:$0xff] %v600
    %841 = vst [vmem:[#allocation2 + $0x3f0] sm:$0xff] %v711
    %842 = vst [vmem:[#allocation2 + $0x3f8] sm:$0xff] %v713
    %v843 = vld [vmem:[#allocation3] sm:$0xff]
    %v844 = vld [vmem:[#allocation3 + $0x8] sm:$0xff]
    %v845 = vld [vmem:[#allocation3 + $0x10] sm:$0xff]
    %v846 = vld [vmem:[#allocation3 + $0x18] sm:$0xff]
    %v847 = vld [vmem:[#allocation3 + $0x20] sm:$0xff]
    %v848 = vld [vmem:[#allocation3 + $0x28] sm:$0xff]
    %v849 = vld [vmem:[#allocation3 + $0x30] sm:$0xff]
    %v850 = vld [vmem:[#allocation3 + $0x38] sm:$0xff]
    %v851 = vld [vmem:[#allocation3 + $0x40] sm:$0xff]
    %v852 = vld [vmem:[#allocation3 + $0x48] sm:$0xff]
    %v853 = vld [vmem:[#allocation3 + $0x50] sm:$0xff]
    %v854 = vld [vmem:[#allocation3 + $0x58] sm:$0xff]
    %v855 = vld [vmem:[#allocation3 + $0x60] sm:$0xff]
    %v856 = vld [vmem:[#allocation3 + $0x68] sm:$0xff]
    %v857 = vld [vmem:[#allocation3 + $0x70] sm:$0xff]
    %v858 = vld [vmem:[#allocation3 + $0x78] sm:$0xff]
    %v859 = vld [vmem:[#allocation3 + $0x80] sm:$0xff]
    %v860 = vld [vmem:[#allocation3 + $0x88] sm:$0xff]
    %v861 = vld [vmem:[#allocation3 + $0x90] sm:$0xff]
    %v862 = vld [vmem:[#allocation3 + $0x98] sm:$0xff]
    %v863 = vld [vmem:[#allocation3 + $0xa0] sm:$0xff]
    %v864 = vld [vmem:[#allocation3 + $0xa8] sm:$0xff]
    %v865 = vld [vmem:[#allocation3 + $0xb0] sm:$0xff]
    %v866 = vld [vmem:[#allocation3 + $0xb8] sm:$0xff]
    %v867 = vld [vmem:[#allocation3 + $0xc0] sm:$0xff]
    %v868 = vld [vmem:[#allocation3 + $0xc8] sm:$0xff]
    %v869 = vld [vmem:[#allocation3 + $0xd0] sm:$0xff]
    %v870 = vld [vmem:[#allocation3 + $0xd8] sm:$0xff]
    %v871 = vld [vmem:[#allocation3 + $0xe0] sm:$0xff]
    %v872 = vld [vmem:[#allocation3 + $0xe8] sm:$0xff]
    %v873 = vld [vmem:[#allocation3 + $0xf0] sm:$0xff]
    %v874 = vld [vmem:[#allocation3 + $0xf8] sm:$0xff]
    %v875 = vld [vmem:[#allocation3 + $0x100] sm:$0xff]
    %v876 = vld [vmem:[#allocation3 + $0x108] sm:$0xff]
    %v877 = vld [vmem:[#allocation3 + $0x110] sm:$0xff]
    %v878 = vld [vmem:[#allocation3 + $0x118] sm:$0xff]
    %v879 = vld [vmem:[#allocation3 + $0x120] sm:$0xff]
    %v880 = vld [vmem:[#allocation3 + $0x128] sm:$0xff]
    %v881 = vld [vmem:[#allocation3 + $0x130] sm:$0xff]
    %v882 = vld [vmem:[#allocation3 + $0x138] sm:$0xff]
    %v883 = vld [vmem:[#allocation3 + $0x140] sm:$0xff]
    %v884 = vld [vmem:[#allocation3 + $0x148] sm:$0xff]
    %v885 = vld [vmem:[#allocation3 + $0x150] sm:$0xff]
    %v886 = vld [vmem:[#allocation3 + $0x158] sm:$0xff]
    %v887 = vld [vmem:[#allocation3 + $0x160] sm:$0xff]
    %v888 = vld [vmem:[#allocation3 + $0x168] sm:$0xff]
    %v889 = vld [vmem:[#allocation3 + $0x170] sm:$0xff]
    %v890 = vld [vmem:[#allocation3 + $0x178] sm:$0xff]
    %v891 = vld [vmem:[#allocation3 + $0x180] sm:$0xff]
    %v892 = vld [vmem:[#allocation3 + $0x188] sm:$0xff]
    %v893 = vld [vmem:[#allocation3 + $0x190] sm:$0xff]
    %v894 = vld [vmem:[#allocation3 + $0x198] sm:$0xff]
    %v895 = vld [vmem:[#allocation3 + $0x1a0] sm:$0xff]
    %v896 = vld [vmem:[#allocation3 + $0x1a8] sm:$0xff]
    %v897 = vld [vmem:[#allocation3 + $0x1b0] sm:$0xff]
    %v898 = vld [vmem:[#allocation3 + $0x1b8] sm:$0xff]
    %v899 = vld [vmem:[#allocation3 + $0x1c0] sm:$0xff]
    %v900 = vld [vmem:[#allocation3 + $0x1c8] sm:$0xff]
    %v901 = vld [vmem:[#allocation3 + $0x1d0] sm:$0xff]
    %v902 = vld [vmem:[#allocation3 + $0x1d8] sm:$0xff]
    %v903 = vld [vmem:[#allocation3 + $0x1e0] sm:$0xff]
    %v904 = vld [vmem:[#allocation3 + $0x1e8] sm:$0xff]
    %v905 = vld [vmem:[#allocation3 + $0x1f0] sm:$0xff]
    %v906 = vld [vmem:[#allocation3 + $0x1f8] sm:$0xff]
    %v907 = vld [vmem:[#allocation3 + $0x200] sm:$0xff]
    %v908 = vld [vmem:[#allocation3 + $0x208] sm:$0xff]
    %v909 = vld [vmem:[#allocation3 + $0x210] sm:$0xff]
    %v910 = vld [vmem:[#allocation3 + $0x218] sm:$0xff]
    %v911 = vld [vmem:[#allocation3 + $0x220] sm:$0xff]
    %v912 = vld [vmem:[#allocation3 + $0x228] sm:$0xff]
    %v913 = vld [vmem:[#allocation3 + $0x230] sm:$0xff]
    %v914 = vld [vmem:[#allocation3 + $0x238] sm:$0xff]
    %v915 = vld [vmem:[#allocation3 + $0x240] sm:$0xff]
    %v916 = vld [vmem:[#allocation3 + $0x248] sm:$0xff]
    %v917 = vld [vmem:[#allocation3 + $0x250] sm:$0xff]
    %v918 = vld [vmem:[#allocation3 + $0x258] sm:$0xff]
    %v919 = vld [vmem:[#allocation3 + $0x260] sm:$0xff]
    %v920 = vld [vmem:[#allocation3 + $0x268] sm:$0xff]
    %v921 = vld [vmem:[#allocation3 + $0x270] sm:$0xff]
    %v922 = vld [vmem:[#allocation3 + $0x278] sm:$0xff]
    %v923 = vld [vmem:[#allocation3 + $0x280] sm:$0xff]
    %v924 = vld [vmem:[#allocation3 + $0x288] sm:$0xff]
    %v925 = vld [vmem:[#allocation3 + $0x290] sm:$0xff]
    %v926 = vld [vmem:[#allocation3 + $0x298] sm:$0xff]
    %v927 = vld [vmem:[#allocation3 + $0x2a0] sm:$0xff]
    %v928 = vld [vmem:[#allocation3 + $0x2a8] sm:$0xff]
    %v929 = vld [vmem:[#allocation3 + $0x2b0] sm:$0xff]
    %v930 = vld [vmem:[#allocation3 + $0x2b8] sm:$0xff]
    %v931 = vld [vmem:[#allocation3 + $0x2c0] sm:$0xff]
    %v932 = vld [vmem:[#allocation3 + $0x2c8] sm:$0xff]
    %v933 = vld [vmem:[#allocation3 + $0x2d0] sm:$0xff]
    %v934 = vld [vmem:[#allocation3 + $0x2d8] sm:$0xff]
    %v935 = vld [vmem:[#allocation3 + $0x2e0] sm:$0xff]
    %v936 = vld [vmem:[#allocation3 + $0x2e8] sm:$0xff]
    %v937 = vld [vmem:[#allocation3 + $0x2f0] sm:$0xff]
    %v938 = vld [vmem:[#allocation3 + $0x2f8] sm:$0xff]
    %v939 = vld [vmem:[#allocation3 + $0x300] sm:$0xff]
    %v940 = vld [vmem:[#allocation3 + $0x308] sm:$0xff]
    %v941 = vld [vmem:[#allocation3 + $0x310] sm:$0xff]
    %v942 = vld [vmem:[#allocation3 + $0x318] sm:$0xff]
    %v943 = vld [vmem:[#allocation3 + $0x320] sm:$0xff]
    %v944 = vld [vmem:[#allocation3 + $0x328] sm:$0xff]
    %v945 = vld [vmem:[#allocation3 + $0x330] sm:$0xff]
    %v946 = vld [vmem:[#allocation3 + $0x338] sm:$0xff]
    %v947 = vld [vmem:[#allocation3 + $0x340] sm:$0xff]
    %v948 = vld [vmem:[#allocation3 + $0x348] sm:$0xff]
    %v949 = vld [vmem:[#allocation3 + $0x350] sm:$0xff]
    %v950 = vld [vmem:[#allocation3 + $0x358] sm:$0xff]
    %v951 = vld [vmem:[#allocation3 + $0x360] sm:$0xff]
    %v952 = vld [vmem:[#allocation3 + $0x368] sm:$0xff]
    %v953 = vld [vmem:[#allocation3 + $0x370] sm:$0xff]
    %v954 = vld [vmem:[#allocation3 + $0x378] sm:$0xff]
    %v955 = vld [vmem:[#allocation3 + $0x380] sm:$0xff]
    %v956 = vld [vmem:[#allocation3 + $0x388] sm:$0xff]
    %v957 = vld [vmem:[#allocation3 + $0x390] sm:$0xff]
    %v958 = vld [vmem:[#allocation3 + $0x398] sm:$0xff]
    %v959 = vld [vmem:[#allocation3 + $0x3a0] sm:$0xff]
    %v960 = vld [vmem:[#allocation3 + $0x3a8] sm:$0xff]
    %v961 = vld [vmem:[#allocation3 + $0x3b0] sm:$0xff]
    %v962 = vld [vmem:[#allocation3 + $0x3b8] sm:$0xff]
    %v963 = vld [vmem:[#allocation3 + $0x3c0] sm:$0xff]
    %v964 = vld [vmem:[#allocation3 + $0x3c8] sm:$0xff]
    %v965 = vld [vmem:[#allocation3 + $0x3d0] sm:$0xff]
    %v966 = vld [vmem:[#allocation3 + $0x3d8] sm:$0xff]
    %v967 = vld [vmem:[#allocation3 + $0x3e0] sm:$0xff]
    %v968 = vld [vmem:[#allocation3 + $0x3e8] sm:$0xff]
    %v969 = vld [vmem:[#allocation3 + $0x3f0] sm:$0xff]
    %v970 = vld [vmem:[#allocation3 + $0x3f8] sm:$0xff]
    %v971 = vld [vmem:[#allocation2] sm:$0xff]
    %v972 = vld [vmem:[#allocation2 + $0x8] sm:$0xff]
    %v973 = vld [vmem:[#allocation2 + $0x10] sm:$0xff]
    %v974 = vld [vmem:[#allocation2 + $0x18] sm:$0xff]
    %v975 = vld [vmem:[#allocation2 + $0x20] sm:$0xff]
    %v976 = vld [vmem:[#allocation2 + $0x28] sm:$0xff]
    %v977 = vld [vmem:[#allocation2 + $0x30] sm:$0xff]
    %v978 = vld [vmem:[#allocation2 + $0x38] sm:$0xff]
    %v979 = vld [vmem:[#allocation2 + $0x40] sm:$0xff]
    %v980 = vld [vmem:[#allocation2 + $0x48] sm:$0xff]
    %v981 = vld [vmem:[#allocation2 + $0x50] sm:$0xff]
    %v982 = vld [vmem:[#allocation2 + $0x58] sm:$0xff]
    %v983 = vld [vmem:[#allocation2 + $0x60] sm:$0xff]
    %v984 = vld [vmem:[#allocation2 + $0x68] sm:$0xff]
    %v985 = vld [vmem:[#allocation2 + $0x70] sm:$0xff]
    %v986 = vld [vmem:[#allocation2 + $0x78] sm:$0xff]
    %v1115 = vunpack.c.l.b16 %v843
    %v1116 = vunpack.c.h.b16 %v843
    %v1117 = vunpack.c.l.b16 %v844
    %v1118 = vunpack.c.h.b16 %v844
    %v1119 = vunpack.c.l.b16 %v845
    %v1120 = vunpack.c.h.b16 %v845
    %v1121 = vunpack.c.l.b16 %v846
    %v1122 = vunpack.c.h.b16 %v846
    %v1123 = vunpack.c.l.b16 %v847
    %v1124 = vunpack.c.h.b16 %v847
    %v1125 = vunpack.c.l.b16 %v848
    %v1126 = vunpack.c.h.b16 %v848
    %v1127 = vunpack.c.l.b16 %v849
    %v1128 = vunpack.c.h.b16 %v849
    %v1129 = vunpack.c.l.b16 %v850
    %v1130 = vunpack.c.h.b16 %v850
    %v1131 = vunpack.c.l.b16 %v851
    %v1132 = vunpack.c.h.b16 %v851
    %v1133 = vunpack.c.l.b16 %v852
    %v1134 = vunpack.c.h.b16 %v852
    %v1135 = vunpack.c.l.b16 %v853
    %v1136 = vunpack.c.h.b16 %v853
    %v1137 = vunpack.c.l.b16 %v854
    %v1138 = vunpack.c.h.b16 %v854
    %v1139 = vunpack.c.l.b16 %v855
    %v1140 = vunpack.c.h.b16 %v855
    %v1141 = vunpack.c.l.b16 %v856
    %v1142 = vunpack.c.h.b16 %v856
    %v1143 = vunpack.c.l.b16 %v857
    %v1144 = vunpack.c.h.b16 %v857
    %v1145 = vunpack.c.l.b16 %v858
    %v1146 = vunpack.c.h.b16 %v858
    %v1147 = vunpack.c.l.b16 %v859
    %v1148 = vunpack.c.h.b16 %v859
    %v1149 = vunpack.c.l.b16 %v860
    %v1150 = vunpack.c.h.b16 %v860
    %v1151 = vunpack.c.l.b16 %v861
    %v1152 = vunpack.c.h.b16 %v861
    %v1153 = vunpack.c.l.b16 %v862
    %v1154 = vunpack.c.h.b16 %v862
    %v1155 = vunpack.c.l.b16 %v863
    %v1156 = vunpack.c.h.b16 %v863
    %v1157 = vunpack.c.l.b16 %v864
    %v1158 = vunpack.c.h.b16 %v864
    %v1159 = vunpack.c.l.b16 %v865
    %v1160 = vunpack.c.h.b16 %v865
    %v1161 = vunpack.c.l.b16 %v866
    %v1162 = vunpack.c.h.b16 %v866
    %v1163 = vunpack.c.l.b16 %v867
    %v1164 = vunpack.c.h.b16 %v867
    %v1165 = vunpack.c.l.b16 %v868
    %v1166 = vunpack.c.h.b16 %v868
    %v1167 = vunpack.c.l.b16 %v869
    %v1168 = vunpack.c.h.b16 %v869
    %v1169 = vunpack.c.l.b16 %v870
    %v1170 = vunpack.c.h.b16 %v870
    %v1171 = vunpack.c.l.b16 %v871
    %v1172 = vunpack.c.h.b16 %v871
    %v1173 = vunpack.c.l.b16 %v872
    %v1174 = vunpack.c.h.b16 %v872
    %v1175 = vunpack.c.l.b16 %v873
    %v1176 = vunpack.c.h.b16 %v873
    %v1177 = vunpack.c.l.b16 %v874
    %v1178 = vunpack.c.h.b16 %v874
    %v1179 = vunpack.c.l.b16 %v875
    %v1180 = vunpack.c.h.b16 %v875
    %v1181 = vunpack.c.l.b16 %v876
    %v1182 = vunpack.c.h.b16 %v876
    %v1183 = vunpack.c.l.b16 %v877
    %v1184 = vunpack.c.h.b16 %v877
    %v1185 = vunpack.c.l.b16 %v878
    %v1186 = vunpack.c.h.b16 %v878
    %v1187 = vunpack.c.l.b16 %v879
    %v1188 = vunpack.c.h.b16 %v879
    %v1189 = vunpack.c.l.b16 %v880
    %v1190 = vunpack.c.h.b16 %v880
    %v1191 = vunpack.c.l.b16 %v881
    %v1192 = vunpack.c.h.b16 %v881
    %v1193 = vunpack.c.l.b16 %v882
    %v1194 = vunpack.c.h.b16 %v882
    %v1195 = vunpack.c.l.b16 %v883
    %v1196 = vunpack.c.h.b16 %v883
    %v1197 = vunpack.c.l.b16 %v884
    %v1198 = vunpack.c.h.b16 %v884
    %v1199 = vunpack.c.l.b16 %v885
    %v1200 = vunpack.c.h.b16 %v885
    %v1201 = vunpack.c.l.b16 %v886
    %v1202 = vunpack.c.h.b16 %v886
    %v1203 = vunpack.c.l.b16 %v887
    %v1204 = vunpack.c.h.b16 %v887
    %v1205 = vunpack.c.l.b16 %v888
    %v1206 = vunpack.c.h.b16 %v888
    %v1207 = vunpack.c.l.b16 %v889
    %v1208 = vunpack.c.h.b16 %v889
    %v1209 = vunpack.c.l.b16 %v890
    %v1210 = vunpack.c.h.b16 %v890
    %v1211 = vunpack.c.l.b16 %v891
    %v1212 = vunpack.c.h.b16 %v891
    %v1213 = vunpack.c.l.b16 %v892
    %v1214 = vunpack.c.h.b16 %v892
    %v1215 = vunpack.c.l.b16 %v893
    %v1216 = vunpack.c.h.b16 %v893
    %v1217 = vunpack.c.l.b16 %v894
    %v1218 = vunpack.c.h.b16 %v894
    %v1219 = vunpack.c.l.b16 %v895
    %v1220 = vunpack.c.h.b16 %v895
    %v1221 = vunpack.c.l.b16 %v896
    %v1222 = vunpack.c.h.b16 %v896
    %v1223 = vunpack.c.l.b16 %v897
    %v1224 = vunpack.c.h.b16 %v897
    %v1225 = vunpack.c.l.b16 %v898
    %v1226 = vunpack.c.h.b16 %v898
    %v1227 = vunpack.c.l.b16 %v899
    %v1228 = vunpack.c.h.b16 %v899
    %v1229 = vunpack.c.l.b16 %v900
    %v1230 = vunpack.c.h.b16 %v900
    %v1231 = vunpack.c.l.b16 %v901
    %v1232 = vunpack.c.h.b16 %v901
    %v1233 = vunpack.c.l.b16 %v902
    %v1234 = vunpack.c.h.b16 %v902
    %v1235 = vunpack.c.l.b16 %v903
    %v1236 = vunpack.c.h.b16 %v903
    %v1237 = vunpack.c.l.b16 %v904
    %v1238 = vunpack.c.h.b16 %v904
    %v1239 = vunpack.c.l.b16 %v905
    %v1240 = vunpack.c.h.b16 %v905
    %v1241 = vunpack.c.l.b16 %v906
    %v1242 = vunpack.c.h.b16 %v906
    %v1243 = vunpack.c.l.b16 %v907
    %v1244 = vunpack.c.h.b16 %v907
    %v1245 = vunpack.c.l.b16 %v908
    %v1246 = vunpack.c.h.b16 %v908
    %v1247 = vunpack.c.l.b16 %v909
    %v1248 = vunpack.c.h.b16 %v909
    %v1249 = vunpack.c.l.b16 %v910
    %v1250 = vunpack.c.h.b16 %v910
    %v1251 = vunpack.c.l.b16 %v911
    %v1252 = vunpack.c.h.b16 %v911
    %v1253 = vunpack.c.l.b16 %v912
    %v1254 = vunpack.c.h.b16 %v912
    %v1255 = vunpack.c.l.b16 %v913
    %v1256 = vunpack.c.h.b16 %v913
    %v1257 = vunpack.c.l.b16 %v914
    %v1258 = vunpack.c.h.b16 %v914
    %v1259 = vunpack.c.l.b16 %v915
    %v1260 = vunpack.c.h.b16 %v915
    %v1261 = vunpack.c.l.b16 %v916
    %v1262 = vunpack.c.h.b16 %v916
    %v1263 = vunpack.c.l.b16 %v917
    %v1264 = vunpack.c.h.b16 %v917
    %v1265 = vunpack.c.l.b16 %v918
    %v1266 = vunpack.c.h.b16 %v918
    %v1267 = vunpack.c.l.b16 %v919
    %v1268 = vunpack.c.h.b16 %v919
    %v1269 = vunpack.c.l.b16 %v920
    %v1270 = vunpack.c.h.b16 %v920
    %v1271 = vunpack.c.l.b16 %v921
    %v1272 = vunpack.c.h.b16 %v921
    %v1273 = vunpack.c.l.b16 %v922
    %v1274 = vunpack.c.h.b16 %v922
    %v1275 = vunpack.c.l.b16 %v923
    %v1276 = vunpack.c.h.b16 %v923
    %v1277 = vunpack.c.l.b16 %v924
    %v1278 = vunpack.c.h.b16 %v924
    %v1279 = vunpack.c.l.b16 %v925
    %v1280 = vunpack.c.h.b16 %v925
    %v1281 = vunpack.c.l.b16 %v926
    %v1282 = vunpack.c.h.b16 %v926
    %v1283 = vunpack.c.l.b16 %v927
    %v1284 = vunpack.c.h.b16 %v927
    %v1285 = vunpack.c.l.b16 %v928
    %v1286 = vunpack.c.h.b16 %v928
    %v1287 = vunpack.c.l.b16 %v929
    %v1288 = vunpack.c.h.b16 %v929
    %v1289 = vunpack.c.l.b16 %v930
    %v1290 = vunpack.c.h.b16 %v930
    %v1291 = vunpack.c.l.b16 %v931
    %v1292 = vunpack.c.h.b16 %v931
    %v1293 = vunpack.c.l.b16 %v932
    %v1294 = vunpack.c.h.b16 %v932
    %v1295 = vunpack.c.l.b16 %v933
    %v1296 = vunpack.c.h.b16 %v933
    %v1297 = vunpack.c.l.b16 %v934
    %v1298 = vunpack.c.h.b16 %v934
    %v1299 = vunpack.c.l.b16 %v935
    %v1300 = vunpack.c.h.b16 %v935
    %v1301 = vunpack.c.l.b16 %v936
    %v1302 = vunpack.c.h.b16 %v936
    %v1303 = vunpack.c.l.b16 %v937
    %v1304 = vunpack.c.h.b16 %v937
    %v1305 = vunpack.c.l.b16 %v938
    %v1306 = vunpack.c.h.b16 %v938
    %v1307 = vunpack.c.l.b16 %v939
    %v1308 = vunpack.c.h.b16 %v939
    %v1309 = vunpack.c.l.b16 %v940
    %v1310 = vunpack.c.h.b16 %v940
    %v1311 = vunpack.c.l.b16 %v941
    %v1312 = vunpack.c.h.b16 %v941
    %v1313 = vunpack.c.l.b16 %v942
    %v1314 = vunpack.c.h.b16 %v942
    %v1315 = vunpack.c.l.b16 %v943
    %v1316 = vunpack.c.h.b16 %v943
    %v1317 = vunpack.c.l.b16 %v944
    %v1318 = vunpack.c.h.b16 %v944
    %v1319 = vunpack.c.l.b16 %v945
    %v1320 = vunpack.c.h.b16 %v945
    %v1321 = vunpack.c.l.b16 %v946
    %v1322 = vunpack.c.h.b16 %v946
    %v1323 = vunpack.c.l.b16 %v947
    %v1324 = vunpack.c.h.b16 %v947
    %v1325 = vunpack.c.l.b16 %v948
    %v1326 = vunpack.c.h.b16 %v948
    %v1327 = vunpack.c.l.b16 %v949
    %v1328 = vunpack.c.h.b16 %v949
    %v1329 = vunpack.c.l.b16 %v950
    %v1330 = vunpack.c.h.b16 %v950
    %v1331 = vunpack.c.l.b16 %v951
    %v1332 = vunpack.c.h.b16 %v951
    %v1333 = vunpack.c.l.b16 %v952
    %v1334 = vunpack.c.h.b16 %v952
    %v1335 = vunpack.c.l.b16 %v953
    %v1336 = vunpack.c.h.b16 %v953
    %v1337 = vunpack.c.l.b16 %v954
    %v1338 = vunpack.c.h.b16 %v954
    %v1339 = vunpack.c.l.b16 %v955
    %v1340 = vunpack.c.h.b16 %v955
    %v1341 = vunpack.c.l.b16 %v956
    %v1342 = vunpack.c.h.b16 %v956
    %v1343 = vunpack.c.l.b16 %v957
    %v1344 = vunpack.c.h.b16 %v957
    %v1345 = vunpack.c.l.b16 %v958
    %v1346 = vunpack.c.h.b16 %v958
    %v1347 = vunpack.c.l.b16 %v959
    %v1348 = vunpack.c.h.b16 %v959
    %v1349 = vunpack.c.l.b16 %v960
    %v1350 = vunpack.c.h.b16 %v960
    %v1351 = vunpack.c.l.b16 %v961
    %v1352 = vunpack.c.h.b16 %v961
    %v1353 = vunpack.c.l.b16 %v962
    %v1354 = vunpack.c.h.b16 %v962
    %v1355 = vunpack.c.l.b16 %v963
    %v1356 = vunpack.c.h.b16 %v963
    %v1357 = vunpack.c.l.b16 %v964
    %v1358 = vunpack.c.h.b16 %v964
    %v1359 = vunpack.c.l.b16 %v965
    %v1360 = vunpack.c.h.b16 %v965
    %v1361 = vunpack.c.l.b16 %v966
    %v1362 = vunpack.c.h.b16 %v966
    %v1363 = vunpack.c.l.b16 %v967
    %v1364 = vunpack.c.h.b16 %v967
    %v1365 = vunpack.c.l.b16 %v968
    %v1366 = vunpack.c.h.b16 %v968
    %v1367 = vunpack.c.l.b16 %v969
    %v1368 = vunpack.c.h.b16 %v969
    %v1369 = vunpack.c.l.b16 %v970
    %v1370 = vunpack.c.h.b16 %v970
    %v1371 = vpack.c.b16 %v1123, %v1115
    %v1372 = vpack.c.b16 %v1124, %v1116
    %v1373 = vpack.c.b16 %v1125, %v1117
    %v1374 = vpack.c.b16 %v1126, %v1118
    %v1375 = vpack.c.b16 %v1127, %v1119
    %v1376 = vpack.c.b16 %v1128, %v1120
    %v1377 = vpack.c.b16 %v1129, %v1121
    %v1378 = vpack.c.b16 %v1130, %v1122
    %v1379 = vpack.c.b16 %v1139, %v1131
    %v1380 = vpack.c.b16 %v1140, %v1132
    %v1381 = vpack.c.b16 %v1141, %v1133
    %v1382 = vpack.c.b16 %v1142, %v1134
    %v1383 = vpack.c.b16 %v1143, %v1135
    %v1384 = vpack.c.b16 %v1144, %v1136
    %v1385 = vpack.c.b16 %v1145, %v1137
    %v1386 = vpack.c.b16 %v1146, %v1138
    %v1387 = vpack.c.b16 %v1155, %v1147
    %v1388 = vpack.c.b16 %v1156, %v1148
    %v1389 = vpack.c.b16 %v1157, %v1149
    %v1390 = vpack.c.b16 %v1158, %v1150
    %v1391 = vpack.c.b16 %v1159, %v1151
    %v1392 = vpack.c.b16 %v1160, %v1152
    %v1393 = vpack.c.b16 %v1161, %v1153
    %v1394 = vpack.c.b16 %v1162, %v1154
    %v1395 = vpack.c.b16 %v1171, %v1163
    %v1396 = vpack.c.b16 %v1172, %v1164
    %v1397 = vpack.c.b16 %v1173, %v1165
    %v1398 = vpack.c.b16 %v1174, %v1166
    %v1399 = vpack.c.b16 %v1175, %v1167
    %v1400 = vpack.c.b16 %v1176, %v1168
    %v1401 = vpack.c.b16 %v1177, %v1169
    %v1402 = vpack.c.b16 %v1178, %v1170
    %v1403 = vpack.c.b16 %v1187, %v1179
    %v1404 = vpack.c.b16 %v1188, %v1180
    %v1405 = vpack.c.b16 %v1189, %v1181
    %v1406 = vpack.c.b16 %v1190, %v1182
    %v1407 = vpack.c.b16 %v1191, %v1183
    %v1408 = vpack.c.b16 %v1192, %v1184
    %v1409 = vpack.c.b16 %v1193, %v1185
    %v1410 = vpack.c.b16 %v1194, %v1186
    %v1411 = vpack.c.b16 %v1203, %v1195
    %v1412 = vpack.c.b16 %v1204, %v1196
    %v1413 = vpack.c.b16 %v1205, %v1197
    %v1414 = vpack.c.b16 %v1206, %v1198
    %v1415 = vpack.c.b16 %v1207, %v1199
    %v1416 = vpack.c.b16 %v1208, %v1200
    %v1417 = vpack.c.b16 %v1209, %v1201
    %v1418 = vpack.c.b16 %v1210, %v1202
    %v1419 = vpack.c.b16 %v1219, %v1211
    %v1420 = vpack.c.b16 %v1220, %v1212
    %v1421 = vpack.c.b16 %v1221, %v1213
    %v1422 = vpack.c.b16 %v1222, %v1214
    %v1423 = vpack.c.b16 %v1223, %v1215
    %v1424 = vpack.c.b16 %v1224, %v1216
    %v1425 = vpack.c.b16 %v1225, %v1217
    %v1426 = vpack.c.b16 %v1226, %v1218
    %v1427 = vpack.c.b16 %v1235, %v1227
    %v1428 = vpack.c.b16 %v1236, %v1228
    %v1429 = vpack.c.b16 %v1237, %v1229
    %v1430 = vpack.c.b16 %v1238, %v1230
    %v1431 = vpack.c.b16 %v1239, %v1231
    %v1432 = vpack.c.b16 %v1240, %v1232
    %v1433 = vpack.c.b16 %v1241, %v1233
    %v1434 = vpack.c.b16 %v1242, %v1234
    %v1435 = vpack.c.b16 %v1251, %v1243
    %v1436 = vpack.c.b16 %v1252, %v1244
    %v1437 = vpack.c.b16 %v1253, %v1245
    %v1438 = vpack.c.b16 %v1254, %v1246
    %v1439 = vpack.c.b16 %v1255, %v1247
    %v1440 = vpack.c.b16 %v1256, %v1248
    %v1441 = vpack.c.b16 %v1257, %v1249
    %v1442 = vpack.c.b16 %v1258, %v1250
    %v1443 = vpack.c.b16 %v1267, %v1259
    %v1444 = vpack.c.b16 %v1268, %v1260
    %v1445 = vpack.c.b16 %v1269, %v1261
    %v1446 = vpack.c.b16 %v1270, %v1262
    %v1447 = vpack.c.b16 %v1271, %v1263
    %v1448 = vpack.c.b16 %v1272, %v1264
    %v1449 = vpack.c.b16 %v1273, %v1265
    %v1450 = vpack.c.b16 %v1274, %v1266
    %v1451 = vpack.c.b16 %v1283, %v1275
    %v1452 = vpack.c.b16 %v1284, %v1276
    %v1453 = vpack.c.b16 %v1285, %v1277
    %v1454 = vpack.c.b16 %v1286, %v1278
    %v1455 = vpack.c.b16 %v1287, %v1279
    %v1456 = vpack.c.b16 %v1288, %v1280
    %v1457 = vpack.c.b16 %v1289, %v1281
    %v1458 = vpack.c.b16 %v1290, %v1282
    %v1459 = vpack.c.b16 %v1299, %v1291
    %v1460 = vpack.c.b16 %v1300, %v1292
    %v1461 = vpack.c.b16 %v1301, %v1293
    %v1462 = vpack.c.b16 %v1302, %v1294
    %v1463 = vpack.c.b16 %v1303, %v1295
    %v1464 = vpack.c.b16 %v1304, %v1296
    %v1465 = vpack.c.b16 %v1305, %v1297
    %v1466 = vpack.c.b16 %v1306, %v1298
    %v1467 = vpack.c.b16 %v1315, %v1307
    %v1468 = vpack.c.b16 %v1316, %v1308
    %v1469 = vpack.c.b16 %v1317, %v1309
    %v1470 = vpack.c.b16 %v1318, %v1310
    %v1471 = vpack.c.b16 %v1319, %v1311
    %v1472 = vpack.c.b16 %v1320, %v1312
    %v1473 = vpack.c.b16 %v1321, %v1313
    %v1474 = vpack.c.b16 %v1322, %v1314
    %v1475 = vpack.c.b16 %v1331, %v1323
    %v1476 = vpack.c.b16 %v1332, %v1324
    %v1477 = vpack.c.b16 %v1333, %v1325
    %v1478 = vpack.c.b16 %v1334, %v1326
    %v1479 = vpack.c.b16 %v1335, %v1327
    %v1480 = vpack.c.b16 %v1336, %v1328
    %v1481 = vpack.c.b16 %v1337, %v1329
    %v1482 = vpack.c.b16 %v1338, %v1330
    %v1483 = vpack.c.b16 %v1347, %v1339
    %v1484 = vpack.c.b16 %v1348, %v1340
    %v1485 = vpack.c.b16 %v1349, %v1341
    %v1486 = vpack.c.b16 %v1350, %v1342
    %v1487 = vpack.c.b16 %v1351, %v1343
    %v1488 = vpack.c.b16 %v1352, %v1344
    %v1489 = vpack.c.b16 %v1353, %v1345
    %v1490 = vpack.c.b16 %v1354, %v1346
    %v1491 = vpack.c.b16 %v1363, %v1355
    %v1492 = vpack.c.b16 %v1364, %v1356
    %v1493 = vpack.c.b16 %v1365, %v1357
    %v1494 = vpack.c.b16 %v1366, %v1358
    %v1495 = vpack.c.b16 %v1367, %v1359
    %v1496 = vpack.c.b16 %v1368, %v1360
    %v1497 = vpack.c.b16 %v1369, %v1361
    %v1498 = vpack.c.b16 %v1370, %v1362
    %1627 = vmatprep.subr.bf16.mxu0 %v1428
    %1628 = vmatpush1.bf16.msra.mxu0 %v1427
    %1629 = vmatprep.subr.bf16.mxu0 %v1420
    %1630 = vmatpush1.bf16.msra.mxu0 %v1419
    %1631 = vmatprep.subr.bf16.mxu0 %v1412
    %1632 = vmatpush1.bf16.msra.mxu0 %v1411
    %1633 = vmatprep.subr.bf16.mxu0 %v1404
    %1634 = vmatpush1.bf16.msra.mxu0 %v1403
    %1635 = vmatprep.subr.bf16.mxu0 %v1396
    %1636 = vmatpush1.bf16.msra.mxu0 %v1395
    %1637 = vmatprep.subr.bf16.mxu0 %v1388
    %1638 = vmatpush1.bf16.msra.mxu0 %v1387
    %1639 = vmatprep.subr.bf16.mxu0 %v1380
    %1640 = vmatpush1.bf16.msra.mxu0 %v1379
    %1641 = vmatprep.subr.bf16.mxu0 %v1372
    %1642 = vmatpush1.bf16.msra.mxu0 %v1371
    %1643 = vmatprep.subr.bf16.mxu0 %v1492
    %1644 = vmatpush2.bf16.msra.mxu0 %v1491
    %1645 = vmatprep.subr.bf16.mxu0 %v1484
    %1646 = vmatpush2.bf16.msra.mxu0 %v1483
    %1647 = vmatprep.subr.bf16.mxu0 %v1476
    %1648 = vmatpush2.bf16.msra.mxu0 %v1475
    %1649 = vmatprep.subr.bf16.mxu0 %v1468
    %1650 = vmatpush2.bf16.msra.mxu0 %v1467
    %1651 = vmatprep.subr.bf16.mxu0 %v1460
    %1652 = vmatpush2.bf16.msra.mxu0 %v1459
    %1653 = vmatprep.subr.bf16.mxu0 %v1452
    %1654 = vmatpush2.bf16.msra.mxu0 %v1451
    %1655 = vmatprep.subr.bf16.mxu0 %v1444
    %1656 = vmatpush2.bf16.msra.mxu0 %v1443
    %1657 = vmatprep.subr.bf16.mxu0 %v1436
    %1658 = vmatpush2.bf16.msra.mxu0 %v1435
    %1659 = vmatprep.mubr.bf16.mxu0 0
    %1660 = vmatmul.mubr.bf16.gmra.mxu0 0
    %v1661 = vpop.f32.mrf.mxu0
    %v1662 = vadd.f32 0.0, %v1661
    %v1663 = vpop.f32.mrf.mxu0
    %v1664 = vadd.f32 0.0, %v1663
    %v1665 = vpop.f32.mrf.mxu0
    %v1666 = vadd.f32 0.0, %v1665
    %v1667 = vpop.f32.mrf.mxu0
    %v1668 = vadd.f32 0.0, %v1667
    %1669 = vdwg.mxu0
    %1670 = vmatprep.subr.bf16.mxu0 %v1430
    %1671 = vmatpush1.bf16.msra.mxu0 %v1429
    %1672 = vmatprep.subr.bf16.mxu0 %v1422
    %1673 = vmatpush1.bf16.msra.mxu0 %v1421
    %1674 = vmatprep.subr.bf16.mxu0 %v1414
    %1675 = vmatpush1.bf16.msra.mxu0 %v1413
    %1676 = vmatprep.subr.bf16.mxu0 %v1406
    %1677 = vmatpush1.bf16.msra.mxu0 %v1405
    %1678 = vmatprep.subr.bf16.mxu0 %v1398
    %1679 = vmatpush1.bf16.msra.mxu0 %v1397
    %1680 = vmatprep.subr.bf16.mxu0 %v1390
    %1681 = vmatpush1.bf16.msra.mxu0 %v1389
    %1682 = vmatprep.subr.bf16.mxu0 %v1382
    %1683 = vmatpush1.bf16.msra.mxu0 %v1381
    %1684 = vmatprep.subr.bf16.mxu0 %v1374
    %1685 = vmatpush1.bf16.msra.mxu0 %v1373
    %1686 = vmatprep.subr.bf16.mxu0 %v1494
    %1687 = vmatpush2.bf16.msra.mxu0 %v1493
    %1688 = vmatprep.subr.bf16.mxu0 %v1486
    %1689 = vmatpush2.bf16.msra.mxu0 %v1485
    %1690 = vmatprep.subr.bf16.mxu0 %v1478
    %1691 = vmatpush2.bf16.msra.mxu0 %v1477
    %1692 = vmatprep.subr.bf16.mxu0 %v1470
    %1693 = vmatpush2.bf16.msra.mxu0 %v1469
    %1694 = vmatprep.subr.bf16.mxu0 %v1462
    %1695 = vmatpush2.bf16.msra.mxu0 %v1461
    %1696 = vmatprep.subr.bf16.mxu0 %v1454
    %1697 = vmatpush2.bf16.msra.mxu0 %v1453
    %1698 = vmatprep.subr.bf16.mxu0 %v1446
    %1699 = vmatpush2.bf16.msra.mxu0 %v1445
    %1700 = vmatprep.subr.bf16.mxu0 %v1438
    %1701 = vmatpush2.bf16.msra.mxu0 %v1437
    %1702 = vmatprep.mubr.bf16.mxu0 0
    %1703 = vmatmul.mubr.bf16.gmra.mxu0 0
    %v1704 = vpop.f32.mrf.mxu0
    %v1705 = vadd.f32 0.0, %v1704
    %v1706 = vpop.f32.mrf.mxu0
    %v1707 = vadd.f32 0.0, %v1706
    %v1708 = vpop.f32.mrf.mxu0
    %v1709 = vadd.f32 0.0, %v1708
    %v1710 = vpop.f32.mrf.mxu0
    %v1711 = vadd.f32 0.0, %v1710
    %1712 = vdwg.mxu0
    %1713 = vmatprep.subr.bf16.mxu0 %v1432
    %1714 = vmatpush1.bf16.msra.mxu0 %v1431
    %1715 = vmatprep.subr.bf16.mxu0 %v1424
    %1716 = vmatpush1.bf16.msra.mxu0 %v1423
    %1717 = vmatprep.subr.bf16.mxu0 %v1416
    %1718 = vmatpush1.bf16.msra.mxu0 %v1415
    %1719 = vmatprep.subr.bf16.mxu0 %v1408
    %1720 = vmatpush1.bf16.msra.mxu0 %v1407
    %1721 = vmatprep.subr.bf16.mxu0 %v1400
    %1722 = vmatpush1.bf16.msra.mxu0 %v1399
    %1723 = vmatprep.subr.bf16.mxu0 %v1392
    %1724 = vmatpush1.bf16.msra.mxu0 %v1391
    %1725 = vmatprep.subr.bf16.mxu0 %v1384
    %1726 = vmatpush1.bf16.msra.mxu0 %v1383
    %1727 = vmatprep.subr.bf16.mxu0 %v1376
    %1728 = vmatpush1.bf16.msra.mxu0 %v1375
    %1729 = vmatprep.subr.bf16.mxu0 %v1496
    %1730 = vmatpush2.bf16.msra.mxu0 %v1495
    %1731 = vmatprep.subr.bf16.mxu0 %v1488
    %1732 = vmatpush2.bf16.msra.mxu0 %v1487
    %1733 = vmatprep.subr.bf16.mxu0 %v1480
    %1734 = vmatpush2.bf16.msra.mxu0 %v1479
    %1735 = vmatprep.subr.bf16.mxu0 %v1472
    %1736 = vmatpush2.bf16.msra.mxu0 %v1471
    %1737 = vmatprep.subr.bf16.mxu0 %v1464
    %1738 = vmatpush2.bf16.msra.mxu0 %v1463
    %1739 = vmatprep.subr.bf16.mxu0 %v1456
    %1740 = vmatpush2.bf16.msra.mxu0 %v1455
    %1741 = vmatprep.subr.bf16.mxu0 %v1448
    %1742 = vmatpush2.bf16.msra.mxu0 %v1447
    %1743 = vmatprep.subr.bf16.mxu0 %v1440
    %1744 = vmatpush2.bf16.msra.mxu0 %v1439
    %1745 = vmatprep.mubr.bf16.mxu0 0
    %1746 = vmatmul.mubr.bf16.gmra.mxu0 0
    %v1747 = vpop.f32.mrf.mxu0
    %v1748 = vadd.f32 0.0, %v1747
    %v1749 = vpop.f32.mrf.mxu0
    %v1750 = vadd.f32 0.0, %v1749
    %v1751 = vpop.f32.mrf.mxu0
    %v1752 = vadd.f32 0.0, %v1751
    %v1753 = vpop.f32.mrf.mxu0
    %v1754 = vadd.f32 0.0, %v1753
    %1755 = vdwg.mxu0
    %1756 = vmatprep.subr.bf16.mxu0 %v1434
    %1757 = vmatpush1.bf16.msra.mxu0 %v1433
    %1758 = vmatprep.subr.bf16.mxu0 %v1426
    %1759 = vmatpush1.bf16.msra.mxu0 %v1425
    %1760 = vmatprep.subr.bf16.mxu0 %v1418
    %1761 = vmatpush1.bf16.msra.mxu0 %v1417
    %1762 = vmatprep.subr.bf16.mxu0 %v1410
    %1763 = vmatpush1.bf16.msra.mxu0 %v1409
    %1764 = vmatprep.subr.bf16.mxu0 %v1402
    %1765 = vmatpush1.bf16.msra.mxu0 %v1401
    %1766 = vmatprep.subr.bf16.mxu0 %v1394
    %1767 = vmatpush1.bf16.msra.mxu0 %v1393
    %1768 = vmatprep.subr.bf16.mxu0 %v1386
    %1769 = vmatpush1.bf16.msra.mxu0 %v1385
    %1770 = vmatprep.subr.bf16.mxu0 %v1378
    %1771 = vmatpush1.bf16.msra.mxu0 %v1377
    %1772 = vmatprep.subr.bf16.mxu0 %v1498
    %1773 = vmatpush2.bf16.msra.mxu0 %v1497
    %1774 = vmatprep.subr.bf16.mxu0 %v1490
    %1775 = vmatpush2.bf16.msra.mxu0 %v1489
    %1776 = vmatprep.subr.bf16.mxu0 %v1482
    %1777 = vmatpush2.bf16.msra.mxu0 %v1481
    %1778 = vmatprep.subr.bf16.mxu0 %v1474
    %1779 = vmatpush2.bf16.msra.mxu0 %v1473
    %1780 = vmatprep.subr.bf16.mxu0 %v1466
    %1781 = vmatpush2.bf16.msra.mxu0 %v1465
    %1782 = vmatprep.subr.bf16.mxu0 %v1458
    %1783 = vmatpush2.bf16.msra.mxu0 %v1457
    %1784 = vmatprep.subr.bf16.mxu0 %v1450
    %1785 = vmatpush2.bf16.msra.mxu0 %v1449
    %1786 = vmatprep.subr.bf16.mxu0 %v1442
    %1787 = vmatpush2.bf16.msra.mxu0 %v1441
    %1788 = vmatprep.mubr.bf16.mxu0 0
    %1789 = vmatmul.mubr.bf16.gmra.mxu0 0
    %v1790 = vpop.f32.mrf.mxu0
    %v1791 = vadd.f32 0.0, %v1790
    %v1792 = vpop.f32.mrf.mxu0
    %v1793 = vadd.f32 0.0, %v1792
    %v1794 = vpop.f32.mrf.mxu0
    %v1795 = vadd.f32 0.0, %v1794
    %v1796 = vpop.f32.mrf.mxu0
    %v1797 = vadd.f32 0.0, %v1796
    %1798 = vdwg.mxu0
    %v1799 = vadd.f32 %v971, %v1662
    %v1800 = vadd.f32 %v972, %v1664
    %v1801 = vadd.f32 %v973, %v1705
    %v1802 = vadd.f32 %v974, %v1707
    %v1803 = vadd.f32 %v975, %v1748
    %v1804 = vadd.f32 %v976, %v1750
    %v1805 = vadd.f32 %v977, %v1791
    %v1806 = vadd.f32 %v978, %v1793
    %v1807 = vadd.f32 %v979, %v1666
    %v1808 = vadd.f32 %v980, %v1668
    %v1809 = vadd.f32 %v981, %v1709
    %v1810 = vadd.f32 %v982, %v1711
    %v1811 = vadd.f32 %v983, %v1752
    %v1812 = vadd.f32 %v984, %v1754
    %v1813 = vadd.f32 %v985, %v1795
    %v1814 = vadd.f32 %v986, %v1797
    %v1815 = vxor.u32 %v1799, 2147483648
    %v1816 = vxor.u32 %v1800, 2147483648
    %v1817 = vxor.u32 %v1801, 2147483648
    %v1818 = vxor.u32 %v1802, 2147483648
    %v1819 = vxor.u32 %v1803, 2147483648
    %v1820 = vxor.u32 %v1804, 2147483648
    %v1821 = vxor.u32 %v1807, 2147483648
    %v1822 = vxor.u32 %v1808, 2147483648
    %v1823 = vxor.u32 %v1809, 2147483648
    %v1824 = vxor.u32 %v1810, 2147483648
    %v1825 = vxor.u32 %v1811, 2147483648
    %v1826 = vxor.u32 %v1812, 2147483648
    %v1827 = vmul.f32 %v1815, 1.442695
    %v1828 = vpow.pop %v1827
    %v1829 = vmul.f32 %v1816, 1.442695
    %v1830 = vpow.pop %v1829
    %v1831 = vmul.f32 %v1817, 1.442695
    %v1832 = vpow.pop %v1831
    %v1833 = vmul.f32 %v1818, 1.442695
    %v1834 = vpow.pop %v1833
    %v1835 = vmul.f32 %v1819, 1.442695
    %v1836 = vpow.pop %v1835
    %v1837 = vmul.f32 %v1820, 1.442695
    %v1838 = vpow.pop %v1837
    %v1839 = vmul.f32 %v1821, 1.442695
    %v1840 = vpow.pop %v1839
    %v1841 = vmul.f32 %v1822, 1.442695
    %v1842 = vpow.pop %v1841
    %v1843 = vmul.f32 %v1823, 1.442695
    %v1844 = vpow.pop %v1843
    %v1845 = vmul.f32 %v1824, 1.442695
    %v1846 = vpow.pop %v1845
    %v1847 = vmul.f32 %v1825, 1.442695
    %v1848 = vpow.pop %v1847
    %v1849 = vmul.f32 %v1826, 1.442695
    %v1850 = vpow.pop %v1849
    %v1851 = vadd.f32 %v1828, 1.0
    %v1852 = vadd.f32 %v1830, 1.0
    %v1853 = vadd.f32 %v1832, 1.0
    %v1854 = vadd.f32 %v1834, 1.0
    %v1855 = vadd.f32 %v1836, 1.0
    %v1856 = vadd.f32 %v1838, 1.0
    %v1857 = vadd.f32 %v1840, 1.0
    %v1858 = vadd.f32 %v1842, 1.0
    %v1859 = vadd.f32 %v1844, 1.0
    %v1860 = vadd.f32 %v1846, 1.0
    %v1861 = vadd.f32 %v1848, 1.0
    %v1862 = vadd.f32 %v1850, 1.0
    %v1863 = vrcp.pop %v1851
    %v1864 = vmul.f32 1.0, %v1863
    %v1865 = vrcp.pop %v1852
    %v1866 = vmul.f32 1.0, %v1865
    %v1867 = vrcp.pop %v1853
    %v1868 = vmul.f32 1.0, %v1867
    %v1869 = vrcp.pop %v1854
    %v1870 = vmul.f32 1.0, %v1869
    %v1871 = vrcp.pop %v1855
    %v1872 = vmul.f32 1.0, %v1871
    %v1873 = vrcp.pop %v1856
    %v1874 = vmul.f32 1.0, %v1873
    %v1875 = vrcp.pop %v1857
    %v1876 = vmul.f32 1.0, %v1875
    %v1877 = vrcp.pop %v1858
    %v1878 = vmul.f32 1.0, %v1877
    %v1879 = vrcp.pop %v1859
    %v1880 = vmul.f32 1.0, %v1879
    %v1881 = vrcp.pop %v1860
    %v1882 = vmul.f32 1.0, %v1881
    %v1883 = vrcp.pop %v1861
    %v1884 = vmul.f32 1.0, %v1883
    %v1885 = vrcp.pop %v1862
    %v1886 = vmul.f32 1.0, %v1885
    %v1887 = vtanh.pop %v1805
    %v1888 = vtanh.pop %v1806
    %v1889 = vtanh.pop %v1813
    %v1890 = vtanh.pop %v1814
    %v1891 = vmul.f32 %v1868, 0.0
    %v1892 = vmul.f32 %v1870, 0.0
    %v1893 = vmul.f32 %v1880, 0.0
    %v1894 = vmul.f32 %v1882, 0.0
    %v1895 = vmul.f32 %v1864, %v1887
    %v1896 = vmul.f32 %v1866, %v1888
    %v1897 = vmul.f32 %v1876, %v1889
    %v1898 = vmul.f32 %v1878, %v1890
    %v1899 = vadd.f32 %v1891, %v1895
    %v1900 = vadd.f32 %v1892, %v1896
    %v1901 = vadd.f32 %v1893, %v1897
    %v1902 = vadd.f32 %v1894, %v1898
    %v1903 = vtanh.pop %v1899
    %v1904 = vtanh.pop %v1900
    %v1905 = vtanh.pop %v1901
    %v1906 = vtanh.pop %v1902
    %v1907 = vmul.f32 %v1872, %v1903
    %v1908 = vmul.f32 %v1874, %v1904
    %v1909 = vmul.f32 %v1884, %v1905
    %v1910 = vmul.f32 %v1886, %v1906
    %v1911 = vpack.c.bf16 %v1909, %v1907
    %v1912 = vpack.c.bf16 %v1910, %v1908
    %s1913 = scalar_lea.vmem [#allocation2], 128
    %v1914 = vld [vmem:[%s1913] sm:$0xff]
    %v1915 = vld [vmem:[%s1913 + $0x8] sm:$0xff]
    %v1916 = vld [vmem:[%s1913 + $0x10] sm:$0xff]
    %v1917 = vld [vmem:[%s1913 + $0x18] sm:$0xff]
    %v1918 = vld [vmem:[%s1913 + $0x20] sm:$0xff]
    %v1919 = vld [vmem:[%s1913 + $0x28] sm:$0xff]
    %v1920 = vld [vmem:[%s1913 + $0x30] sm:$0xff]
    %v1921 = vld [vmem:[%s1913 + $0x38] sm:$0xff]
    %v1922 = vld [vmem:[%s1913 + $0x40] sm:$0xff]
    %v1923 = vld [vmem:[%s1913 + $0x48] sm:$0xff]
    %v1924 = vld [vmem:[%s1913 + $0x50] sm:$0xff]
    %v1925 = vld [vmem:[%s1913 + $0x58] sm:$0xff]
    %v1926 = vld [vmem:[%s1913 + $0x60] sm:$0xff]
    %v1927 = vld [vmem:[%s1913 + $0x68] sm:$0xff]
    %v1928 = vld [vmem:[%s1913 + $0x70] sm:$0xff]
    %v1929 = vld [vmem:[%s1913 + $0x78] sm:$0xff]
    %1930 = vmatprep.subr.bf16.mxu0 %v1428
    %1931 = vmatpush1.bf16.msra.mxu0 %v1427
    %1932 = vmatprep.subr.bf16.mxu0 %v1420
    %1933 = vmatpush1.bf16.msra.mxu0 %v1419
    %1934 = vmatprep.subr.bf16.mxu0 %v1412
    %1935 = vmatpush1.bf16.msra.mxu0 %v1411
    %1936 = vmatprep.subr.bf16.mxu0 %v1404
    %1937 = vmatpush1.bf16.msra.mxu0 %v1403
    %1938 = vmatprep.subr.bf16.mxu0 %v1396
    %1939 = vmatpush1.bf16.msra.mxu0 %v1395
    %1940 = vmatprep.subr.bf16.mxu0 %v1388
    %1941 = vmatpush1.bf16.msra.mxu0 %v1387
    %1942 = vmatprep.subr.bf16.mxu0 %v1380
    %1943 = vmatpush1.bf16.msra.mxu0 %v1379
    %1944 = vmatprep.subr.bf16.mxu0 %v1372
    %1945 = vmatpush1.bf16.msra.mxu0 %v1371
    %1946 = vmatprep.subr.bf16.mxu0 %v1492
    %1947 = vmatpush2.bf16.msra.mxu0 %v1491
    %1948 = vmatprep.subr.bf16.mxu0 %v1484
    %1949 = vmatpush2.bf16.msra.mxu0 %v1483
    %1950 = vmatprep.subr.bf16.mxu0 %v1476
    %1951 = vmatpush2.bf16.msra.mxu0 %v1475
    %1952 = vmatprep.subr.bf16.mxu0 %v1468
    %1953 = vmatpush2.bf16.msra.mxu0 %v1467
    %1954 = vmatprep.subr.bf16.mxu0 %v1460
    %1955 = vmatpush2.bf16.msra.mxu0 %v1459
    %1956 = vmatprep.subr.bf16.mxu0 %v1452
    %1957 = vmatpush2.bf16.msra.mxu0 %v1451
    %1958 = vmatprep.subr.bf16.mxu0 %v1444
    %1959 = vmatpush2.bf16.msra.mxu0 %v1443
    %1960 = vmatprep.subr.bf16.mxu0 %v1436
    %1961 = vmatpush2.bf16.msra.mxu0 %v1435
    %1962 = vmatprep.mubr.bf16.mxu0 %v1912
    %1963 = vmatmul.mubr.bf16.gmra.mxu0 %v1911
    %v1964 = vpop.f32.mrf.mxu0
    %v1965 = vadd.f32 0.0, %v1964
    %v1966 = vpop.f32.mrf.mxu0
    %v1967 = vadd.f32 0.0, %v1966
    %v1968 = vpop.f32.mrf.mxu0
    %v1969 = vadd.f32 0.0, %v1968
    %v1970 = vpop.f32.mrf.mxu0
    %v1971 = vadd.f32 0.0, %v1970
    %1972 = vdwg.mxu0
    %1973 = vmatprep.subr.bf16.mxu0 %v1430
    %1974 = vmatpush1.bf16.msra.mxu0 %v1429
    %1975 = vmatprep.subr.bf16.mxu0 %v1422
    %1976 = vmatpush1.bf16.msra.mxu0 %v1421
    %1977 = vmatprep.subr.bf16.mxu0 %v1414
    %1978 = vmatpush1.bf16.msra.mxu0 %v1413
    %1979 = vmatprep.subr.bf16.mxu0 %v1406
    %1980 = vmatpush1.bf16.msra.mxu0 %v1405
    %1981 = vmatprep.subr.bf16.mxu0 %v1398
    %1982 = vmatpush1.bf16.msra.mxu0 %v1397
    %1983 = vmatprep.subr.bf16.mxu0 %v1390
    %1984 = vmatpush1.bf16.msra.mxu0 %v1389
    %1985 = vmatprep.subr.bf16.mxu0 %v1382
    %1986 = vmatpush1.bf16.msra.mxu0 %v1381
    %1987 = vmatprep.subr.bf16.mxu0 %v1374
    %1988 = vmatpush1.bf16.msra.mxu0 %v1373
    %1989 = vmatprep.subr.bf16.mxu0 %v1494
    %1990 = vmatpush2.bf16.msra.mxu0 %v1493
    %1991 = vmatprep.subr.bf16.mxu0 %v1486
    %1992 = vmatpush2.bf16.msra.mxu0 %v1485
    %1993 = vmatprep.subr.bf16.mxu0 %v1478
    %1994 = vmatpush2.bf16.msra.mxu0 %v1477
    %1995 = vmatprep.subr.bf16.mxu0 %v1470
    %1996 = vmatpush2.bf16.msra.mxu0 %v1469
    %1997 = vmatprep.subr.bf16.mxu0 %v1462
    %1998 = vmatpush2.bf16.msra.mxu0 %v1461
    %1999 = vmatprep.subr.bf16.mxu0 %v1454
    %2000 = vmatpush2.bf16.msra.mxu0 %v1453
    %2001 = vmatprep.subr.bf16.mxu0 %v1446
    %2002 = vmatpush2.bf16.msra.mxu0 %v1445
    %2003 = vmatprep.subr.bf16.mxu0 %v1438
    %2004 = vmatpush2.bf16.msra.mxu0 %v1437
    %2005 = vmatprep.mubr.bf16.mxu0 %v1912
    %2006 = vmatmul.mubr.bf16.gmra.mxu0 %v1911
    %v2007 = vpop.f32.mrf.mxu0
    %v2008 = vadd.f32 0.0, %v2007
    %v2009 = vpop.f32.mrf.mxu0
    %v2010 = vadd.f32 0.0, %v2009
    %v2011 = vpop.f32.mrf.mxu0
    %v2012 = vadd.f32 0.0, %v2011
    %v2013 = vpop.f32.mrf.mxu0
    %v2014 = vadd.f32 0.0, %v2013
    %2015 = vdwg.mxu0
    %2016 = vmatprep.subr.bf16.mxu0 %v1432
    %2017 = vmatpush1.bf16.msra.mxu0 %v1431
    %2018 = vmatprep.subr.bf16.mxu0 %v1424
    %2019 = vmatpush1.bf16.msra.mxu0 %v1423
    %2020 = vmatprep.subr.bf16.mxu0 %v1416
    %2021 = vmatpush1.bf16.msra.mxu0 %v1415
    %2022 = vmatprep.subr.bf16.mxu0 %v1408
    %2023 = vmatpush1.bf16.msra.mxu0 %v1407
    %2024 = vmatprep.subr.bf16.mxu0 %v1400
    %2025 = vmatpush1.bf16.msra.mxu0 %v1399
    %2026 = vmatprep.subr.bf16.mxu0 %v1392
    %2027 = vmatpush1.bf16.msra.mxu0 %v1391
    %2028 = vmatprep.subr.bf16.mxu0 %v1384
    %2029 = vmatpush1.bf16.msra.mxu0 %v1383
    %2030 = vmatprep.subr.bf16.mxu0 %v1376
    %2031 = vmatpush1.bf16.msra.mxu0 %v1375
    %2032 = vmatprep.subr.bf16.mxu0 %v1496
    %2033 = vmatpush2.bf16.msra.mxu0 %v1495
    %2034 = vmatprep.subr.bf16.mxu0 %v1488
    %2035 = vmatpush2.bf16.msra.mxu0 %v1487
    %2036 = vmatprep.subr.bf16.mxu0 %v1480
    %2037 = vmatpush2.bf16.msra.mxu0 %v1479
    %2038 = vmatprep.subr.bf16.mxu0 %v1472
    %2039 = vmatpush2.bf16.msra.mxu0 %v1471
    %2040 = vmatprep.subr.bf16.mxu0 %v1464
    %2041 = vmatpush2.bf16.msra.mxu0 %v1463
    %2042 = vmatprep.subr.bf16.mxu0 %v1456
    %2043 = vmatpush2.bf16.msra.mxu0 %v1455
    %2044 = vmatprep.subr.bf16.mxu0 %v1448
    %2045 = vmatpush2.bf16.msra.mxu0 %v1447
    %2046 = vmatprep.subr.bf16.mxu0 %v1440
    %2047 = vmatpush2.bf16.msra.mxu0 %v1439
    %2048 = vmatprep.mubr.bf16.mxu0 %v1912
    %2049 = vmatmul.mubr.bf16.gmra.mxu0 %v1911
    %v2050 = vpop.f32.mrf.mxu0
    %v2051 = vadd.f32 0.0, %v2050
    %v2052 = vpop.f32.mrf.mxu0
    %v2053 = vadd.f32 0.0, %v2052
    %v2054 = vpop.f32.mrf.mxu0
    %v2055 = vadd.f32 0.0, %v2054
    %v2056 = vpop.f32.mrf.mxu0
    %v2057 = vadd.f32 0.0, %v2056
    %2058 = vdwg.mxu0
    %2059 = vmatprep.subr.bf16.mxu0 %v1434
    %2060 = vmatpush1.bf16.msra.mxu0 %v1433
    %2061 = vmatprep.subr.bf16.mxu0 %v1426
    %2062 = vmatpush1.bf16.msra.mxu0 %v1425
    %2063 = vmatprep.subr.bf16.mxu0 %v1418
    %2064 = vmatpush1.bf16.msra.mxu0 %v1417
    %2065 = vmatprep.subr.bf16.mxu0 %v1410
    %2066 = vmatpush1.bf16.msra.mxu0 %v1409
    %2067 = vmatprep.subr.bf16.mxu0 %v1402
    %2068 = vmatpush1.bf16.msra.mxu0 %v1401
    %2069 = vmatprep.subr.bf16.mxu0 %v1394
    %2070 = vmatpush1.bf16.msra.mxu0 %v1393
    %2071 = vmatprep.subr.bf16.mxu0 %v1386
    %2072 = vmatpush1.bf16.msra.mxu0 %v1385
    %2073 = vmatprep.subr.bf16.mxu0 %v1378
    %2074 = vmatpush1.bf16.msra.mxu0 %v1377
    %2075 = vmatprep.subr.bf16.mxu0 %v1498
    %2076 = vmatpush2.bf16.msra.mxu0 %v1497
    %2077 = vmatprep.subr.bf16.mxu0 %v1490
    %2078 = vmatpush2.bf16.msra.mxu0 %v1489
    %2079 = vmatprep.subr.bf16.mxu0 %v1482
    %2080 = vmatpush2.bf16.msra.mxu0 %v1481
    %2081 = vmatprep.subr.bf16.mxu0 %v1474
    %2082 = vmatpush2.bf16.msra.mxu0 %v1473
    %2083 = vmatprep.subr.bf16.mxu0 %v1466
    %2084 = vmatpush2.bf16.msra.mxu0 %v1465
    %2085 = vmatprep.subr.bf16.mxu0 %v1458
    %2086 = vmatpush2.bf16.msra.mxu0 %v1457
    %2087 = vmatprep.subr.bf16.mxu0 %v1450
    %2088 = vmatpush2.bf16.msra.mxu0 %v1449
    %2089 = vmatprep.subr.bf16.mxu0 %v1442
    %2090 = vmatpush2.bf16.msra.mxu0 %v1441
    %2091 = vmatprep.mubr.bf16.mxu0 %v1912
    %2092 = vmatmul.mubr.bf16.gmra.mxu0 %v1911
    %v2093 = vpop.f32.mrf.mxu0
    %v2094 = vadd.f32 0.0, %v2093
    %v2095 = vpop.f32.mrf.mxu0
    %v2096 = vadd.f32 0.0, %v2095
    %v2097 = vpop.f32.mrf.mxu0
    %v2098 = vadd.f32 0.0, %v2097
    %v2099 = vpop.f32.mrf.mxu0
    %v2100 = vadd.f32 0.0, %v2099
    %2101 = vdwg.mxu0
    %v2102 = vadd.f32 %v1914, %v1965
    %v2103 = vadd.f32 %v1915, %v1967
    %v2104 = vadd.f32 %v1916, %v2008
    %v2105 = vadd.f32 %v1917, %v2010
    %v2106 = vadd.f32 %v1918, %v2051
    %v2107 = vadd.f32 %v1919, %v2053
    %v2108 = vadd.f32 %v1920, %v2094
    %v2109 = vadd.f32 %v1921, %v2096
    %v2110 = vadd.f32 %v1922, %v1969
    %v2111 = vadd.f32 %v1923, %v1971
    %v2112 = vadd.f32 %v1924, %v2012
    %v2113 = vadd.f32 %v1925, %v2014
    %v2114 = vadd.f32 %v1926, %v2055
    %v2115 = vadd.f32 %v1927, %v2057
    %v2116 = vadd.f32 %v1928, %v2098
    %v2117 = vadd.f32 %v1929, %v2100
    %v2118 = vxor.u32 %v2102, 2147483648
    %v2119 = vxor.u32 %v2103, 2147483648
    %v2120 = vxor.u32 %v2104, 2147483648
    %v2121 = vxor.u32 %v2105, 2147483648
    %v2122 = vxor.u32 %v2106, 2147483648
    %v2123 = vxor.u32 %v2107, 2147483648
    %v2124 = vxor.u32 %v2110, 2147483648
    %v2125 = vxor.u32 %v2111, 2147483648
    %v2126 = vxor.u32 %v2112, 2147483648
    %v2127 = vxor.u32 %v2113, 2147483648
    %v2128 = vxor.u32 %v2114, 2147483648
    %v2129 = vxor.u32 %v2115, 2147483648
    %v2130 = vmul.f32 %v2118, 1.442695
    %v2131 = vpow.pop %v2130
    %v2132 = vmul.f32 %v2119, 1.442695
    %v2133 = vpow.pop %v2132
    %v2134 = vmul.f32 %v2120, 1.442695
    %v2135 = vpow.pop %v2134
    %v2136 = vmul.f32 %v2121, 1.442695
    %v2137 = vpow.pop %v2136
    %v2138 = vmul.f32 %v2122, 1.442695
    %v2139 = vpow.pop %v2138
    %v2140 = vmul.f32 %v2123, 1.442695
    %v2141 = vpow.pop %v2140
    %v2142 = vmul.f32 %v2124, 1.442695
    %v2143 = vpow.pop %v2142
    %v2144 = vmul.f32 %v2125, 1.442695
    %v2145 = vpow.pop %v2144
    %v2146 = vmul.f32 %v2126, 1.442695
    %v2147 = vpow.pop %v2146
    %v2148 = vmul.f32 %v2127, 1.442695
    %v2149 = vpow.pop %v2148
    %v2150 = vmul.f32 %v2128, 1.442695
    %v2151 = vpow.pop %v2150
    %v2152 = vmul.f32 %v2129, 1.442695
    %v2153 = vpow.pop %v2152
    %v2154 = vadd.f32 %v2131, 1.0
    %v2155 = vadd.f32 %v2133, 1.0
    %v2156 = vadd.f32 %v2135, 1.0
    %v2157 = vadd.f32 %v2137, 1.0
    %v2158 = vadd.f32 %v2139, 1.0
    %v2159 = vadd.f32 %v2141, 1.0
    %v2160 = vadd.f32 %v2143, 1.0
    %v2161 = vadd.f32 %v2145, 1.0
    %v2162 = vadd.f32 %v2147, 1.0
    %v2163 = vadd.f32 %v2149, 1.0
    %v2164 = vadd.f32 %v2151, 1.0
    %v2165 = vadd.f32 %v2153, 1.0
    %v2166 = vrcp.pop %v2154
    %v2167 = vmul.f32 1.0, %v2166
    %v2168 = vrcp.pop %v2155
    %v2169 = vmul.f32 1.0, %v2168
    %v2170 = vrcp.pop %v2156
    %v2171 = vmul.f32 1.0, %v2170
    %v2172 = vrcp.pop %v2157
    %v2173 = vmul.f32 1.0, %v2172
    %v2174 = vrcp.pop %v2158
    %v2175 = vmul.f32 1.0, %v2174
    %v2176 = vrcp.pop %v2159
    %v2177 = vmul.f32 1.0, %v2176
    %v2178 = vrcp.pop %v2160
    %v2179 = vmul.f32 1.0, %v2178
    %v2180 = vrcp.pop %v2161
    %v2181 = vmul.f32 1.0, %v2180
    %v2182 = vrcp.pop %v2162
    %v2183 = vmul.f32 1.0, %v2182
    %v2184 = vrcp.pop %v2163
    %v2185 = vmul.f32 1.0, %v2184
    %v2186 = vrcp.pop %v2164
    %v2187 = vmul.f32 1.0, %v2186
    %v2188 = vrcp.pop %v2165
    %v2189 = vmul.f32 1.0, %v2188
    %v2190 = vtanh.pop %v2108
    %v2191 = vtanh.pop %v2109
    %v2192 = vtanh.pop %v2116
    %v2193 = vtanh.pop %v2117
    %v2194 = vmul.f32 %v2171, %v1899
    %v2195 = vmul.f32 %v2173, %v1900
    %v2196 = vmul.f32 %v2183, %v1901
    %v2197 = vmul.f32 %v2185, %v1902
    %v2198 = vmul.f32 %v2167, %v2190
    %v2199 = vmul.f32 %v2169, %v2191
    %v2200 = vmul.f32 %v2179, %v2192
    %v2201 = vmul.f32 %v2181, %v2193
    %v2202 = vadd.f32 %v2194, %v2198
    %v2203 = vadd.f32 %v2195, %v2199
    %v2204 = vadd.f32 %v2196, %v2200
    %v2205 = vadd.f32 %v2197, %v2201
    %v2206 = vtanh.pop %v2202
    %v2207 = vtanh.pop %v2203
    %v2208 = vtanh.pop %v2204
    %v2209 = vtanh.pop %v2205
    %v2210 = vmul.f32 %v2175, %v2206
    %v2211 = vmul.f32 %v2177, %v2207
    %v2212 = vmul.f32 %v2187, %v2208
    %v2213 = vmul.f32 %v2189, %v2209
    %v2214 = vpack.c.bf16 %v2212, %v2210
    %v2215 = vpack.c.bf16 %v2213, %v2211
    %s2216 = scalar_lea.vmem [#allocation2], 256
    %v2217 = vld [vmem:[%s2216] sm:$0xff]
    %v2218 = vld [vmem:[%s2216 + $0x8] sm:$0xff]
    %v2219 = vld [vmem:[%s2216 + $0x10] sm:$0xff]
    %v2220 = vld [vmem:[%s2216 + $0x18] sm:$0xff]
    %v2221 = vld [vmem:[%s2216 + $0x20] sm:$0xff]
    %v2222 = vld [vmem:[%s2216 + $0x28] sm:$0xff]
    %v2223 = vld [vmem:[%s2216 + $0x30] sm:$0xff]
    %v2224 = vld [vmem:[%s2216 + $0x38] sm:$0xff]
    %v2225 = vld [vmem:[%s2216 + $0x40] sm:$0xff]
    %v2226 = vld [vmem:[%s2216 + $0x48] sm:$0xff]
    %v2227 = vld [vmem:[%s2216 + $0x50] sm:$0xff]
    %v2228 = vld [vmem:[%s2216 + $0x58] sm:$0xff]
    %v2229 = vld [vmem:[%s2216 + $0x60] sm:$0xff]
    %v2230 = vld [vmem:[%s2216 + $0x68] sm:$0xff]
    %v2231 = vld [vmem:[%s2216 + $0x70] sm:$0xff]
    %v2232 = vld [vmem:[%s2216 + $0x78] sm:$0xff]
    %2233 = vmatprep.subr.bf16.mxu0 %v1428
    %2234 = vmatpush1.bf16.msra.mxu0 %v1427
    %2235 = vmatprep.subr.bf16.mxu0 %v1420
    %2236 = vmatpush1.bf16.msra.mxu0 %v1419
    %2237 = vmatprep.subr.bf16.mxu0 %v1412
    %2238 = vmatpush1.bf16.msra.mxu0 %v1411
    %2239 = vmatprep.subr.bf16.mxu0 %v1404
    %2240 = vmatpush1.bf16.msra.mxu0 %v1403
    %2241 = vmatprep.subr.bf16.mxu0 %v1396
    %2242 = vmatpush1.bf16.msra.mxu0 %v1395
    %2243 = vmatprep.subr.bf16.mxu0 %v1388
    %2244 = vmatpush1.bf16.msra.mxu0 %v1387
    %2245 = vmatprep.subr.bf16.mxu0 %v1380
    %2246 = vmatpush1.bf16.msra.mxu0 %v1379
    %2247 = vmatprep.subr.bf16.mxu0 %v1372
    %2248 = vmatpush1.bf16.msra.mxu0 %v1371
    %2249 = vmatprep.subr.bf16.mxu0 %v1492
    %2250 = vmatpush2.bf16.msra.mxu0 %v1491
    %2251 = vmatprep.subr.bf16.mxu0 %v1484
    %2252 = vmatpush2.bf16.msra.mxu0 %v1483
    %2253 = vmatprep.subr.bf16.mxu0 %v1476
    %2254 = vmatpush2.bf16.msra.mxu0 %v1475
    %2255 = vmatprep.subr.bf16.mxu0 %v1468
    %2256 = vmatpush2.bf16.msra.mxu0 %v1467
    %2257 = vmatprep.subr.bf16.mxu0 %v1460
    %2258 = vmatpush2.bf16.msra.mxu0 %v1459
    %2259 = vmatprep.subr.bf16.mxu0 %v1452
    %2260 = vmatpush2.bf16.msra.mxu0 %v1451
    %2261 = vmatprep.subr.bf16.mxu0 %v1444
    %2262 = vmatpush2.bf16.msra.mxu0 %v1443
    %2263 = vmatprep.subr.bf16.mxu0 %v1436
    %2264 = vmatpush2.bf16.msra.mxu0 %v1435
    %2265 = vmatprep.mubr.bf16.mxu0 %v2215
    %2266 = vmatmul.mubr.bf16.gmra.mxu0 %v2214
    %v2267 = vpop.f32.mrf.mxu0
    %v2268 = vadd.f32 0.0, %v2267
    %v2269 = vpop.f32.mrf.mxu0
    %v2270 = vadd.f32 0.0, %v2269
    %v2271 = vpop.f32.mrf.mxu0
    %v2272 = vadd.f32 0.0, %v2271
    %v2273 = vpop.f32.mrf.mxu0
    %v2274 = vadd.f32 0.0, %v2273
    %2275 = vdwg.mxu0
    %2276 = vmatprep.subr.bf16.mxu0 %v1430
    %2277 = vmatpush1.bf16.msra.mxu0 %v1429
    %2278 = vmatprep.subr.bf16.mxu0 %v1422
    %2279 = vmatpush1.bf16.msra.mxu0 %v1421
    %2280 = vmatprep.subr.bf16.mxu0 %v1414
    %2281 = vmatpush1.bf16.msra.mxu0 %v1413
    %2282 = vmatprep.subr.bf16.mxu0 %v1406
    %2283 = vmatpush1.bf16.msra.mxu0 %v1405
    %2284 = vmatprep.subr.bf16.mxu0 %v1398
    %2285 = vmatpush1.bf16.msra.mxu0 %v1397
    %2286 = vmatprep.subr.bf16.mxu0 %v1390
    %2287 = vmatpush1.bf16.msra.mxu0 %v1389
    %2288 = vmatprep.subr.bf16.mxu0 %v1382
    %2289 = vmatpush1.bf16.msra.mxu0 %v1381
    %2290 = vmatprep.subr.bf16.mxu0 %v1374
    %2291 = vmatpush1.bf16.msra.mxu0 %v1373
    %2292 = vmatprep.subr.bf16.mxu0 %v1494
    %2293 = vmatpush2.bf16.msra.mxu0 %v1493
    %2294 = vmatprep.subr.bf16.mxu0 %v1486
    %2295 = vmatpush2.bf16.msra.mxu0 %v1485
    %2296 = vmatprep.subr.bf16.mxu0 %v1478
    %2297 = vmatpush2.bf16.msra.mxu0 %v1477
    %2298 = vmatprep.subr.bf16.mxu0 %v1470
    %2299 = vmatpush2.bf16.msra.mxu0 %v1469
    %2300 = vmatprep.subr.bf16.mxu0 %v1462
    %2301 = vmatpush2.bf16.msra.mxu0 %v1461
    %2302 = vmatprep.subr.bf16.mxu0 %v1454
    %2303 = vmatpush2.bf16.msra.mxu0 %v1453
    %2304 = vmatprep.subr.bf16.mxu0 %v1446
    %2305 = vmatpush2.bf16.msra.mxu0 %v1445
    %2306 = vmatprep.subr.bf16.mxu0 %v1438
    %2307 = vmatpush2.bf16.msra.mxu0 %v1437
    %2308 = vmatprep.mubr.bf16.mxu0 %v2215
    %2309 = vmatmul.mubr.bf16.gmra.mxu0 %v2214
    %v2310 = vpop.f32.mrf.mxu0
    %v2311 = vadd.f32 0.0, %v2310
    %v2312 = vpop.f32.mrf.mxu0
    %v2313 = vadd.f32 0.0, %v2312
    %v2314 = vpop.f32.mrf.mxu0
    %v2315 = vadd.f32 0.0, %v2314
    %v2316 = vpop.f32.mrf.mxu0
    %v2317 = vadd.f32 0.0, %v2316
    %2318 = vdwg.mxu0
    %2319 = vmatprep.subr.bf16.mxu0 %v1432
    %2320 = vmatpush1.bf16.msra.mxu0 %v1431
    %2321 = vmatprep.subr.bf16.mxu0 %v1424
    %2322 = vmatpush1.bf16.msra.mxu0 %v1423
    %2323 = vmatprep.subr.bf16.mxu0 %v1416
    %2324 = vmatpush1.bf16.msra.mxu0 %v1415
    %2325 = vmatprep.subr.bf16.mxu0 %v1408
    %2326 = vmatpush1.bf16.msra.mxu0 %v1407
    %2327 = vmatprep.subr.bf16.mxu0 %v1400
    %2328 = vmatpush1.bf16.msra.mxu0 %v1399
    %2329 = vmatprep.subr.bf16.mxu0 %v1392
    %2330 = vmatpush1.bf16.msra.mxu0 %v1391
    %2331 = vmatprep.subr.bf16.mxu0 %v1384
    %2332 = vmatpush1.bf16.msra.mxu0 %v1383
    %2333 = vmatprep.subr.bf16.mxu0 %v1376
    %2334 = vmatpush1.bf16.msra.mxu0 %v1375
    %2335 = vmatprep.subr.bf16.mxu0 %v1496
    %2336 = vmatpush2.bf16.msra.mxu0 %v1495
    %2337 = vmatprep.subr.bf16.mxu0 %v1488
    %2338 = vmatpush2.bf16.msra.mxu0 %v1487
    %2339 = vmatprep.subr.bf16.mxu0 %v1480
    %2340 = vmatpush2.bf16.msra.mxu0 %v1479
    %2341 = vmatprep.subr.bf16.mxu0 %v1472
    %2342 = vmatpush2.bf16.msra.mxu0 %v1471
    %2343 = vmatprep.subr.bf16.mxu0 %v1464
    %2344 = vmatpush2.bf16.msra.mxu0 %v1463
    %2345 = vmatprep.subr.bf16.mxu0 %v1456
    %2346 = vmatpush2.bf16.msra.mxu0 %v1455
    %2347 = vmatprep.subr.bf16.mxu0 %v1448
    %2348 = vmatpush2.bf16.msra.mxu0 %v1447
    %2349 = vmatprep.subr.bf16.mxu0 %v1440
    %2350 = vmatpush2.bf16.msra.mxu0 %v1439
    %2351 = vmatprep.mubr.bf16.mxu0 %v2215
    %2352 = vmatmul.mubr.bf16.gmra.mxu0 %v2214
    %v2353 = vpop.f32.mrf.mxu0
    %v2354 = vadd.f32 0.0, %v2353
    %v2355 = vpop.f32.mrf.mxu0
    %v2356 = vadd.f32 0.0, %v2355
    %v2357 = vpop.f32.mrf.mxu0
    %v2358 = vadd.f32 0.0, %v2357
    %v2359 = vpop.f32.mrf.mxu0
    %v2360 = vadd.f32 0.0, %v2359
    %2361 = vdwg.mxu0
    %2362 = vmatprep.subr.bf16.mxu0 %v1434
    %2363 = vmatpush1.bf16.msra.mxu0 %v1433
    %2364 = vmatprep.subr.bf16.mxu0 %v1426
    %2365 = vmatpush1.bf16.msra.mxu0 %v1425
    %2366 = vmatprep.subr.bf16.mxu0 %v1418
    %2367 = vmatpush1.bf16.msra.mxu0 %v1417
    %2368 = vmatprep.subr.bf16.mxu0 %v1410
    %2369 = vmatpush1.bf16.msra.mxu0 %v1409
    %2370 = vmatprep.subr.bf16.mxu0 %v1402
    %2371 = vmatpush1.bf16.msra.mxu0 %v1401
    %2372 = vmatprep.subr.bf16.mxu0 %v1394
    %2373 = vmatpush1.bf16.msra.mxu0 %v1393
    %2374 = vmatprep.subr.bf16.mxu0 %v1386
    %2375 = vmatpush1.bf16.msra.mxu0 %v1385
    %2376 = vmatprep.subr.bf16.mxu0 %v1378
    %2377 = vmatpush1.bf16.msra.mxu0 %v1377
    %2378 = vmatprep.subr.bf16.mxu0 %v1498
    %2379 = vmatpush2.bf16.msra.mxu0 %v1497
    %2380 = vmatprep.subr.bf16.mxu0 %v1490
    %2381 = vmatpush2.bf16.msra.mxu0 %v1489
    %2382 = vmatprep.subr.bf16.mxu0 %v1482
    %2383 = vmatpush2.bf16.msra.mxu0 %v1481
    %2384 = vmatprep.subr.bf16.mxu0 %v1474
    %2385 = vmatpush2.bf16.msra.mxu0 %v1473
    %2386 = vmatprep.subr.bf16.mxu0 %v1466
    %2387 = vmatpush2.bf16.msra.mxu0 %v1465
    %2388 = vmatprep.subr.bf16.mxu0 %v1458
    %2389 = vmatpush2.bf16.msra.mxu0 %v1457
    %2390 = vmatprep.subr.bf16.mxu0 %v1450
    %2391 = vmatpush2.bf16.msra.mxu0 %v1449
    %2392 = vmatprep.subr.bf16.mxu0 %v1442
    %2393 = vmatpush2.bf16.msra.mxu0 %v1441
    %2394 = vmatprep.mubr.bf16.mxu0 %v2215
    %2395 = vmatmul.mubr.bf16.gmra.mxu0 %v2214
    %v2396 = vpop.f32.mrf.mxu0
    %v2397 = vadd.f32 0.0, %v2396
    %v2398 = vpop.f32.mrf.mxu0
    %v2399 = vadd.f32 0.0, %v2398
    %v2400 = vpop.f32.mrf.mxu0
    %v2401 = vadd.f32 0.0, %v2400
    %v2402 = vpop.f32.mrf.mxu0
    %v2403 = vadd.f32 0.0, %v2402
    %2404 = vdwg.mxu0
    %v2405 = vadd.f32 %v2217, %v2268
    %v2406 = vadd.f32 %v2218, %v2270
    %v2407 = vadd.f32 %v2219, %v2311
    %v2408 = vadd.f32 %v2220, %v2313
    %v2409 = vadd.f32 %v2221, %v2354
    %v2410 = vadd.f32 %v2222, %v2356
    %v2411 = vadd.f32 %v2223, %v2397
    %v2412 = vadd.f32 %v2224, %v2399
    %v2413 = vadd.f32 %v2225, %v2272
    %v2414 = vadd.f32 %v2226, %v2274
    %v2415 = vadd.f32 %v2227, %v2315
    %v2416 = vadd.f32 %v2228, %v2317
    %v2417 = vadd.f32 %v2229, %v2358
    %v2418 = vadd.f32 %v2230, %v2360
    %v2419 = vadd.f32 %v2231, %v2401
    %v2420 = vadd.f32 %v2232, %v2403
    %v2421 = vxor.u32 %v2405, 2147483648
    %v2422 = vxor.u32 %v2406, 2147483648
    %v2423 = vxor.u32 %v2407, 2147483648
    %v2424 = vxor.u32 %v2408, 2147483648
    %v2425 = vxor.u32 %v2409, 2147483648
    %v2426 = vxor.u32 %v2410, 2147483648
    %v2427 = vxor.u32 %v2413, 2147483648
    %v2428 = vxor.u32 %v2414, 2147483648
    %v2429 = vxor.u32 %v2415, 2147483648
    %v2430 = vxor.u32 %v2416, 2147483648
    %v2431 = vxor.u32 %v2417, 2147483648
    %v2432 = vxor.u32 %v2418, 2147483648
    %v2433 = vmul.f32 %v2421, 1.442695
    %v2434 = vpow.pop %v2433
    %v2435 = vmul.f32 %v2422, 1.442695
    %v2436 = vpow.pop %v2435
    %v2437 = vmul.f32 %v2423, 1.442695
    %v2438 = vpow.pop %v2437
    %v2439 = vmul.f32 %v2424, 1.442695
    %v2440 = vpow.pop %v2439
    %v2441 = vmul.f32 %v2425, 1.442695
    %v2442 = vpow.pop %v2441
    %v2443 = vmul.f32 %v2426, 1.442695
    %v2444 = vpow.pop %v2443
    %v2445 = vmul.f32 %v2427, 1.442695
    %v2446 = vpow.pop %v2445
    %v2447 = vmul.f32 %v2428, 1.442695
    %v2448 = vpow.pop %v2447
    %v2449 = vmul.f32 %v2429, 1.442695
    %v2450 = vpow.pop %v2449
    %v2451 = vmul.f32 %v2430, 1.442695
    %v2452 = vpow.pop %v2451
    %v2453 = vmul.f32 %v2431, 1.442695
    %v2454 = vpow.pop %v2453
    %v2455 = vmul.f32 %v2432, 1.442695
    %v2456 = vpow.pop %v2455
    %v2457 = vadd.f32 %v2434, 1.0
    %v2458 = vadd.f32 %v2436, 1.0
    %v2459 = vadd.f32 %v2438, 1.0
    %v2460 = vadd.f32 %v2440, 1.0
    %v2461 = vadd.f32 %v2442, 1.0
    %v2462 = vadd.f32 %v2444, 1.0
    %v2463 = vadd.f32 %v2446, 1.0
    %v2464 = vadd.f32 %v2448, 1.0
    %v2465 = vadd.f32 %v2450, 1.0
    %v2466 = vadd.f32 %v2452, 1.0
    %v2467 = vadd.f32 %v2454, 1.0
    %v2468 = vadd.f32 %v2456, 1.0
    %v2469 = vrcp.pop %v2457
    %v2470 = vmul.f32 1.0, %v2469
    %v2471 = vrcp.pop %v2458
    %v2472 = vmul.f32 1.0, %v2471
    %v2473 = vrcp.pop %v2459
    %v2474 = vmul.f32 1.0, %v2473
    %v2475 = vrcp.pop %v2460
    %v2476 = vmul.f32 1.0, %v2475
    %v2477 = vrcp.pop %v2461
    %v2478 = vmul.f32 1.0, %v2477
    %v2479 = vrcp.pop %v2462
    %v2480 = vmul.f32 1.0, %v2479
    %v2481 = vrcp.pop %v2463
    %v2482 = vmul.f32 1.0, %v2481
    %v2483 = vrcp.pop %v2464
    %v2484 = vmul.f32 1.0, %v2483
    %v2485 = vrcp.pop %v2465
    %v2486 = vmul.f32 1.0, %v2485
    %v2487 = vrcp.pop %v2466
    %v2488 = vmul.f32 1.0, %v2487
    %v2489 = vrcp.pop %v2467
    %v2490 = vmul.f32 1.0, %v2489
    %v2491 = vrcp.pop %v2468
    %v2492 = vmul.f32 1.0, %v2491
    %v2493 = vtanh.pop %v2411
    %v2494 = vtanh.pop %v2412
    %v2495 = vtanh.pop %v2419
    %v2496 = vtanh.pop %v2420
    %v2497 = vmul.f32 %v2474, %v2202
    %v2498 = vmul.f32 %v2476, %v2203
    %v2499 = vmul.f32 %v2486, %v2204
    %v2500 = vmul.f32 %v2488, %v2205
    %v2501 = vmul.f32 %v2470, %v2493
    %v2502 = vmul.f32 %v2472, %v2494
    %v2503 = vmul.f32 %v2482, %v2495
    %v2504 = vmul.f32 %v2484, %v2496
    %v2505 = vadd.f32 %v2497, %v2501
    %v2506 = vadd.f32 %v2498, %v2502
    %v2507 = vadd.f32 %v2499, %v2503
    %v2508 = vadd.f32 %v2500, %v2504
    %v2509 = vtanh.pop %v2505
    %v2510 = vtanh.pop %v2506
    %v2511 = vtanh.pop %v2507
    %v2512 = vtanh.pop %v2508
    %v2513 = vmul.f32 %v2478, %v2509
    %v2514 = vmul.f32 %v2480, %v2510
    %v2515 = vmul.f32 %v2490, %v2511
    %v2516 = vmul.f32 %v2492, %v2512
    %v2517 = vpack.c.bf16 %v2515, %v2513
    %v2518 = vpack.c.bf16 %v2516, %v2514
    %s2519 = scalar_lea.vmem [#allocation2], 384
    %v2520 = vld [vmem:[%s2519] sm:$0xff]
    %v2521 = vld [vmem:[%s2519 + $0x8] sm:$0xff]
    %v2522 = vld [vmem:[%s2519 + $0x10] sm:$0xff]
    %v2523 = vld [vmem:[%s2519 + $0x18] sm:$0xff]
    %v2524 = vld [vmem:[%s2519 + $0x20] sm:$0xff]
    %v2525 = vld [vmem:[%s2519 + $0x28] sm:$0xff]
    %v2526 = vld [vmem:[%s2519 + $0x30] sm:$0xff]
    %v2527 = vld [vmem:[%s2519 + $0x38] sm:$0xff]
    %v2528 = vld [vmem:[%s2519 + $0x40] sm:$0xff]
    %v2529 = vld [vmem:[%s2519 + $0x48] sm:$0xff]
    %v2530 = vld [vmem:[%s2519 + $0x50] sm:$0xff]
    %v2531 = vld [vmem:[%s2519 + $0x58] sm:$0xff]
    %v2532 = vld [vmem:[%s2519 + $0x60] sm:$0xff]
    %v2533 = vld [vmem:[%s2519 + $0x68] sm:$0xff]
    %v2534 = vld [vmem:[%s2519 + $0x70] sm:$0xff]
    %v2535 = vld [vmem:[%s2519 + $0x78] sm:$0xff]
    %2536 = vmatprep.subr.bf16.mxu0 %v1428
    %2537 = vmatpush1.bf16.msra.mxu0 %v1427
    %2538 = vmatprep.subr.bf16.mxu0 %v1420
    %2539 = vmatpush1.bf16.msra.mxu0 %v1419
    %2540 = vmatprep.subr.bf16.mxu0 %v1412
    %2541 = vmatpush1.bf16.msra.mxu0 %v1411
    %2542 = vmatprep.subr.bf16.mxu0 %v1404
    %2543 = vmatpush1.bf16.msra.mxu0 %v1403
    %2544 = vmatprep.subr.bf16.mxu0 %v1396
    %2545 = vmatpush1.bf16.msra.mxu0 %v1395
    %2546 = vmatprep.subr.bf16.mxu0 %v1388
    %2547 = vmatpush1.bf16.msra.mxu0 %v1387
    %2548 = vmatprep.subr.bf16.mxu0 %v1380
    %2549 = vmatpush1.bf16.msra.mxu0 %v1379
    %2550 = vmatprep.subr.bf16.mxu0 %v1372
    %2551 = vmatpush1.bf16.msra.mxu0 %v1371
    %2552 = vmatprep.subr.bf16.mxu0 %v1492
    %2553 = vmatpush2.bf16.msra.mxu0 %v1491
    %2554 = vmatprep.subr.bf16.mxu0 %v1484
    %2555 = vmatpush2.bf16.msra.mxu0 %v1483
    %2556 = vmatprep.subr.bf16.mxu0 %v1476
    %2557 = vmatpush2.bf16.msra.mxu0 %v1475
    %2558 = vmatprep.subr.bf16.mxu0 %v1468
    %2559 = vmatpush2.bf16.msra.mxu0 %v1467
    %2560 = vmatprep.subr.bf16.mxu0 %v1460
    %2561 = vmatpush2.bf16.msra.mxu0 %v1459
    %2562 = vmatprep.subr.bf16.mxu0 %v1452
    %2563 = vmatpush2.bf16.msra.mxu0 %v1451
    %2564 = vmatprep.subr.bf16.mxu0 %v1444
    %2565 = vmatpush2.bf16.msra.mxu0 %v1443
    %2566 = vmatprep.subr.bf16.mxu0 %v1436
    %2567 = vmatpush2.bf16.msra.mxu0 %v1435
    %2568 = vmatprep.mubr.bf16.mxu0 %v2518
    %2569 = vmatmul.mubr.bf16.gmra.mxu0 %v2517
    %v2570 = vpop.f32.mrf.mxu0
    %v2571 = vadd.f32 0.0, %v2570
    %v2572 = vpop.f32.mrf.mxu0
    %v2573 = vadd.f32 0.0, %v2572
    %v2574 = vpop.f32.mrf.mxu0
    %v2575 = vadd.f32 0.0, %v2574
    %v2576 = vpop.f32.mrf.mxu0
    %v2577 = vadd.f32 0.0, %v2576
    %2578 = vdwg.mxu0
    %2579 = vmatprep.subr.bf16.mxu0 %v1430
    %2580 = vmatpush1.bf16.msra.mxu0 %v1429
    %2581 = vmatprep.subr.bf16.mxu0 %v1422
    %2582 = vmatpush1.bf16.msra.mxu0 %v1421
    %2583 = vmatprep.subr.bf16.mxu0 %v1414
    %2584 = vmatpush1.bf16.msra.mxu0 %v1413
    %2585 = vmatprep.subr.bf16.mxu0 %v1406
    %2586 = vmatpush1.bf16.msra.mxu0 %v1405
    %2587 = vmatprep.subr.bf16.mxu0 %v1398
    %2588 = vmatpush1.bf16.msra.mxu0 %v1397
    %2589 = vmatprep.subr.bf16.mxu0 %v1390
    %2590 = vmatpush1.bf16.msra.mxu0 %v1389
    %2591 = vmatprep.subr.bf16.mxu0 %v1382
    %2592 = vmatpush1.bf16.msra.mxu0 %v1381
    %2593 = vmatprep.subr.bf16.mxu0 %v1374
    %2594 = vmatpush1.bf16.msra.mxu0 %v1373
    %2595 = vmatprep.subr.bf16.mxu0 %v1494
    %2596 = vmatpush2.bf16.msra.mxu0 %v1493
    %2597 = vmatprep.subr.bf16.mxu0 %v1486
    %2598 = vmatpush2.bf16.msra.mxu0 %v1485
    %2599 = vmatprep.subr.bf16.mxu0 %v1478
    %2600 = vmatpush2.bf16.msra.mxu0 %v1477
    %2601 = vmatprep.subr.bf16.mxu0 %v1470
    %2602 = vmatpush2.bf16.msra.mxu0 %v1469
    %2603 = vmatprep.subr.bf16.mxu0 %v1462
    %2604 = vmatpush2.bf16.msra.mxu0 %v1461
    %2605 = vmatprep.subr.bf16.mxu0 %v1454
    %2606 = vmatpush2.bf16.msra.mxu0 %v1453
    %2607 = vmatprep.subr.bf16.mxu0 %v1446
    %2608 = vmatpush2.bf16.msra.mxu0 %v1445
    %2609 = vmatprep.subr.bf16.mxu0 %v1438
    %2610 = vmatpush2.bf16.msra.mxu0 %v1437
    %2611 = vmatprep.mubr.bf16.mxu0 %v2518
    %2612 = vmatmul.mubr.bf16.gmra.mxu0 %v2517
    %v2613 = vpop.f32.mrf.mxu0
    %v2614 = vadd.f32 0.0, %v2613
    %v2615 = vpop.f32.mrf.mxu0
    %v2616 = vadd.f32 0.0, %v2615
    %v2617 = vpop.f32.mrf.mxu0
    %v2618 = vadd.f32 0.0, %v2617
    %v2619 = vpop.f32.mrf.mxu0
    %v2620 = vadd.f32 0.0, %v2619
    %2621 = vdwg.mxu0
    %2622 = vmatprep.subr.bf16.mxu0 %v1432
    %2623 = vmatpush1.bf16.msra.mxu0 %v1431
    %2624 = vmatprep.subr.bf16.mxu0 %v1424
    %2625 = vmatpush1.bf16.msra.mxu0 %v1423
    %2626 = vmatprep.subr.bf16.mxu0 %v1416
    %2627 = vmatpush1.bf16.msra.mxu0 %v1415
    %2628 = vmatprep.subr.bf16.mxu0 %v1408
    %2629 = vmatpush1.bf16.msra.mxu0 %v1407
    %2630 = vmatprep.subr.bf16.mxu0 %v1400
    %2631 = vmatpush1.bf16.msra.mxu0 %v1399
    %2632 = vmatprep.subr.bf16.mxu0 %v1392
    %2633 = vmatpush1.bf16.msra.mxu0 %v1391
    %2634 = vmatprep.subr.bf16.mxu0 %v1384
    %2635 = vmatpush1.bf16.msra.mxu0 %v1383
    %2636 = vmatprep.subr.bf16.mxu0 %v1376
    %2637 = vmatpush1.bf16.msra.mxu0 %v1375
    %2638 = vmatprep.subr.bf16.mxu0 %v1496
    %2639 = vmatpush2.bf16.msra.mxu0 %v1495
    %2640 = vmatprep.subr.bf16.mxu0 %v1488
    %2641 = vmatpush2.bf16.msra.mxu0 %v1487
    %2642 = vmatprep.subr.bf16.mxu0 %v1480
    %2643 = vmatpush2.bf16.msra.mxu0 %v1479
    %2644 = vmatprep.subr.bf16.mxu0 %v1472
    %2645 = vmatpush2.bf16.msra.mxu0 %v1471
    %2646 = vmatprep.subr.bf16.mxu0 %v1464
    %2647 = vmatpush2.bf16.msra.mxu0 %v1463
    %2648 = vmatprep.subr.bf16.mxu0 %v1456
    %2649 = vmatpush2.bf16.msra.mxu0 %v1455
    %2650 = vmatprep.subr.bf16.mxu0 %v1448
    %2651 = vmatpush2.bf16.msra.mxu0 %v1447
    %2652 = vmatprep.subr.bf16.mxu0 %v1440
    %2653 = vmatpush2.bf16.msra.mxu0 %v1439
    %2654 = vmatprep.mubr.bf16.mxu0 %v2518
    %2655 = vmatmul.mubr.bf16.gmra.mxu0 %v2517
    %v2656 = vpop.f32.mrf.mxu0
    %v2657 = vadd.f32 0.0, %v2656
    %v2658 = vpop.f32.mrf.mxu0
    %v2659 = vadd.f32 0.0, %v2658
    %v2660 = vpop.f32.mrf.mxu0
    %v2661 = vadd.f32 0.0, %v2660
    %v2662 = vpop.f32.mrf.mxu0
    %v2663 = vadd.f32 0.0, %v2662
    %2664 = vdwg.mxu0
    %2665 = vmatprep.subr.bf16.mxu0 %v1434
    %2666 = vmatpush1.bf16.msra.mxu0 %v1433
    %2667 = vmatprep.subr.bf16.mxu0 %v1426
    %2668 = vmatpush1.bf16.msra.mxu0 %v1425
    %2669 = vmatprep.subr.bf16.mxu0 %v1418
    %2670 = vmatpush1.bf16.msra.mxu0 %v1417
    %2671 = vmatprep.subr.bf16.mxu0 %v1410
    %2672 = vmatpush1.bf16.msra.mxu0 %v1409
    %2673 = vmatprep.subr.bf16.mxu0 %v1402
    %2674 = vmatpush1.bf16.msra.mxu0 %v1401
    %2675 = vmatprep.subr.bf16.mxu0 %v1394
    %2676 = vmatpush1.bf16.msra.mxu0 %v1393
    %2677 = vmatprep.subr.bf16.mxu0 %v1386
    %2678 = vmatpush1.bf16.msra.mxu0 %v1385
    %2679 = vmatprep.subr.bf16.mxu0 %v1378
    %2680 = vmatpush1.bf16.msra.mxu0 %v1377
    %2681 = vmatprep.subr.bf16.mxu0 %v1498
    %2682 = vmatpush2.bf16.msra.mxu0 %v1497
    %2683 = vmatprep.subr.bf16.mxu0 %v1490
    %2684 = vmatpush2.bf16.msra.mxu0 %v1489
    %2685 = vmatprep.subr.bf16.mxu0 %v1482
    %2686 = vmatpush2.bf16.msra.mxu0 %v1481
    %2687 = vmatprep.subr.bf16.mxu0 %v1474
    %2688 = vmatpush2.bf16.msra.mxu0 %v1473
    %2689 = vmatprep.subr.bf16.mxu0 %v1466
    %2690 = vmatpush2.bf16.msra.mxu0 %v1465
    %2691 = vmatprep.subr.bf16.mxu0 %v1458
    %2692 = vmatpush2.bf16.msra.mxu0 %v1457
    %2693 = vmatprep.subr.bf16.mxu0 %v1450
    %2694 = vmatpush2.bf16.msra.mxu0 %v1449
    %2695 = vmatprep.subr.bf16.mxu0 %v1442
    %2696 = vmatpush2.bf16.msra.mxu0 %v1441
    %2697 = vmatprep.mubr.bf16.mxu0 %v2518
    %2698 = vmatmul.mubr.bf16.gmra.mxu0 %v2517
    %v2699 = vpop.f32.mrf.mxu0
    %v2700 = vadd.f32 0.0, %v2699
    %v2701 = vpop.f32.mrf.mxu0
    %v2702 = vadd.f32 0.0, %v2701
    %v2703 = vpop.f32.mrf.mxu0
    %v2704 = vadd.f32 0.0, %v2703
    %v2705 = vpop.f32.mrf.mxu0
    %v2706 = vadd.f32 0.0, %v2705
    %2707 = vdwg.mxu0
    %v2708 = vadd.f32 %v2520, %v2571
    %v2709 = vadd.f32 %v2521, %v2573
    %v2710 = vadd.f32 %v2522, %v2614
    %v2711 = vadd.f32 %v2523, %v2616
    %v2712 = vadd.f32 %v2524, %v2657
    %v2713 = vadd.f32 %v2525, %v2659
    %v2714 = vadd.f32 %v2526, %v2700
    %v2715 = vadd.f32 %v2527, %v2702
    %v2716 = vadd.f32 %v2528, %v2575
    %v2717 = vadd.f32 %v2529, %v2577
    %v2718 = vadd.f32 %v2530, %v2618
    %v2719 = vadd.f32 %v2531, %v2620
    %v2720 = vadd.f32 %v2532, %v2661
    %v2721 = vadd.f32 %v2533, %v2663
    %v2722 = vadd.f32 %v2534, %v2704
    %v2723 = vadd.f32 %v2535, %v2706
    %v2724 = vxor.u32 %v2708, 2147483648
    %v2725 = vxor.u32 %v2709, 2147483648
    %v2726 = vxor.u32 %v2710, 2147483648
    %v2727 = vxor.u32 %v2711, 2147483648
    %v2728 = vxor.u32 %v2712, 2147483648
    %v2729 = vxor.u32 %v2713, 2147483648
    %v2730 = vxor.u32 %v2716, 2147483648
    %v2731 = vxor.u32 %v2717, 2147483648
    %v2732 = vxor.u32 %v2718, 2147483648
    %v2733 = vxor.u32 %v2719, 2147483648
    %v2734 = vxor.u32 %v2720, 2147483648
    %v2735 = vxor.u32 %v2721, 2147483648
    %v2736 = vmul.f32 %v2724, 1.442695
    %v2737 = vpow.pop %v2736
    %v2738 = vmul.f32 %v2725, 1.442695
    %v2739 = vpow.pop %v2738
    %v2740 = vmul.f32 %v2726, 1.442695
    %v2741 = vpow.pop %v2740
    %v2742 = vmul.f32 %v2727, 1.442695
    %v2743 = vpow.pop %v2742
    %v2744 = vmul.f32 %v2728, 1.442695
    %v2745 = vpow.pop %v2744
    %v2746 = vmul.f32 %v2729, 1.442695
    %v2747 = vpow.pop %v2746
    %v2748 = vmul.f32 %v2730, 1.442695
    %v2749 = vpow.pop %v2748
    %v2750 = vmul.f32 %v2731, 1.442695
    %v2751 = vpow.pop %v2750
    %v2752 = vmul.f32 %v2732, 1.442695
    %v2753 = vpow.pop %v2752
    %v2754 = vmul.f32 %v2733, 1.442695
    %v2755 = vpow.pop %v2754
    %v2756 = vmul.f32 %v2734, 1.442695
    %v2757 = vpow.pop %v2756
    %v2758 = vmul.f32 %v2735, 1.442695
    %v2759 = vpow.pop %v2758
    %v2760 = vadd.f32 %v2737, 1.0
    %v2761 = vadd.f32 %v2739, 1.0
    %v2762 = vadd.f32 %v2741, 1.0
    %v2763 = vadd.f32 %v2743, 1.0
    %v2764 = vadd.f32 %v2745, 1.0
    %v2765 = vadd.f32 %v2747, 1.0
    %v2766 = vadd.f32 %v2749, 1.0
    %v2767 = vadd.f32 %v2751, 1.0
    %v2768 = vadd.f32 %v2753, 1.0
    %v2769 = vadd.f32 %v2755, 1.0
    %v2770 = vadd.f32 %v2757, 1.0
    %v2771 = vadd.f32 %v2759, 1.0
    %v2772 = vrcp.pop %v2760
    %v2773 = vmul.f32 1.0, %v2772
    %v2774 = vrcp.pop %v2761
    %v2775 = vmul.f32 1.0, %v2774
    %v2776 = vrcp.pop %v2762
    %v2777 = vmul.f32 1.0, %v2776
    %v2778 = vrcp.pop %v2763
    %v2779 = vmul.f32 1.0, %v2778
    %v2780 = vrcp.pop %v2764
    %v2781 = vmul.f32 1.0, %v2780
    %v2782 = vrcp.pop %v2765
    %v2783 = vmul.f32 1.0, %v2782
    %v2784 = vrcp.pop %v2766
    %v2785 = vmul.f32 1.0, %v2784
    %v2786 = vrcp.pop %v2767
    %v2787 = vmul.f32 1.0, %v2786
    %v2788 = vrcp.pop %v2768
    %v2789 = vmul.f32 1.0, %v2788
    %v2790 = vrcp.pop %v2769
    %v2791 = vmul.f32 1.0, %v2790
    %v2792 = vrcp.pop %v2770
    %v2793 = vmul.f32 1.0, %v2792
    %v2794 = vrcp.pop %v2771
    %v2795 = vmul.f32 1.0, %v2794
    %v2796 = vtanh.pop %v2714
    %v2797 = vtanh.pop %v2715
    %v2798 = vtanh.pop %v2722
    %v2799 = vtanh.pop %v2723
    %v2800 = vmul.f32 %v2777, %v2505
    %v2801 = vmul.f32 %v2779, %v2506
    %v2802 = vmul.f32 %v2789, %v2507
    %v2803 = vmul.f32 %v2791, %v2508
    %v2804 = vmul.f32 %v2773, %v2796
    %v2805 = vmul.f32 %v2775, %v2797
    %v2806 = vmul.f32 %v2785, %v2798
    %v2807 = vmul.f32 %v2787, %v2799
    %v2808 = vadd.f32 %v2800, %v2804
    %v2809 = vadd.f32 %v2801, %v2805
    %v2810 = vadd.f32 %v2802, %v2806
    %v2811 = vadd.f32 %v2803, %v2807
    %v2812 = vtanh.pop %v2808
    %v2813 = vtanh.pop %v2809
    %v2814 = vtanh.pop %v2810
    %v2815 = vtanh.pop %v2811
    %v2816 = vmul.f32 %v2781, %v2812
    %v2817 = vmul.f32 %v2783, %v2813
    %v2818 = vmul.f32 %v2793, %v2814
    %v2819 = vmul.f32 %v2795, %v2815
    %v2820 = vpack.c.bf16 %v2818, %v2816
    %v2821 = vpack.c.bf16 %v2819, %v2817
    %s2822 = scalar_lea.vmem [#allocation2], 512
    %v2823 = vld [vmem:[%s2822] sm:$0xff]
    %v2824 = vld [vmem:[%s2822 + $0x8] sm:$0xff]
    %v2825 = vld [vmem:[%s2822 + $0x10] sm:$0xff]
    %v2826 = vld [vmem:[%s2822 + $0x18] sm:$0xff]
    %v2827 = vld [vmem:[%s2822 + $0x20] sm:$0xff]
    %v2828 = vld [vmem:[%s2822 + $0x28] sm:$0xff]
    %v2829 = vld [vmem:[%s2822 + $0x30] sm:$0xff]
    %v2830 = vld [vmem:[%s2822 + $0x38] sm:$0xff]
    %v2831 = vld [vmem:[%s2822 + $0x40] sm:$0xff]
    %v2832 = vld [vmem:[%s2822 + $0x48] sm:$0xff]
    %v2833 = vld [vmem:[%s2822 + $0x50] sm:$0xff]
    %v2834 = vld [vmem:[%s2822 + $0x58] sm:$0xff]
    %v2835 = vld [vmem:[%s2822 + $0x60] sm:$0xff]
    %v2836 = vld [vmem:[%s2822 + $0x68] sm:$0xff]
    %v2837 = vld [vmem:[%s2822 + $0x70] sm:$0xff]
    %v2838 = vld [vmem:[%s2822 + $0x78] sm:$0xff]
    %2839 = vmatprep.subr.bf16.mxu0 %v1428
    %2840 = vmatpush1.bf16.msra.mxu0 %v1427
    %2841 = vmatprep.subr.bf16.mxu0 %v1420
    %2842 = vmatpush1.bf16.msra.mxu0 %v1419
    %2843 = vmatprep.subr.bf16.mxu0 %v1412
    %2844 = vmatpush1.bf16.msra.mxu0 %v1411
    %2845 = vmatprep.subr.bf16.mxu0 %v1404
    %2846 = vmatpush1.bf16.msra.mxu0 %v1403
    %2847 = vmatprep.subr.bf16.mxu0 %v1396
    %2848 = vmatpush1.bf16.msra.mxu0 %v1395
    %2849 = vmatprep.subr.bf16.mxu0 %v1388
    %2850 = vmatpush1.bf16.msra.mxu0 %v1387
    %2851 = vmatprep.subr.bf16.mxu0 %v1380
    %2852 = vmatpush1.bf16.msra.mxu0 %v1379
    %2853 = vmatprep.subr.bf16.mxu0 %v1372
    %2854 = vmatpush1.bf16.msra.mxu0 %v1371
    %2855 = vmatprep.subr.bf16.mxu0 %v1492
    %2856 = vmatpush2.bf16.msra.mxu0 %v1491
    %2857 = vmatprep.subr.bf16.mxu0 %v1484
    %2858 = vmatpush2.bf16.msra.mxu0 %v1483
    %2859 = vmatprep.subr.bf16.mxu0 %v1476
    %2860 = vmatpush2.bf16.msra.mxu0 %v1475
    %2861 = vmatprep.subr.bf16.mxu0 %v1468
    %2862 = vmatpush2.bf16.msra.mxu0 %v1467
    %2863 = vmatprep.subr.bf16.mxu0 %v1460
    %2864 = vmatpush2.bf16.msra.mxu0 %v1459
    %2865 = vmatprep.subr.bf16.mxu0 %v1452
    %2866 = vmatpush2.bf16.msra.mxu0 %v1451
    %2867 = vmatprep.subr.bf16.mxu0 %v1444
    %2868 = vmatpush2.bf16.msra.mxu0 %v1443
    %2869 = vmatprep.subr.bf16.mxu0 %v1436
    %2870 = vmatpush2.bf16.msra.mxu0 %v1435
    %2871 = vmatprep.mubr.bf16.mxu0 %v2821
    %2872 = vmatmul.mubr.bf16.gmra.mxu0 %v2820
    %v2873 = vpop.f32.mrf.mxu0
    %v2874 = vadd.f32 0.0, %v2873
    %v2875 = vpop.f32.mrf.mxu0
    %v2876 = vadd.f32 0.0, %v2875
    %v2877 = vpop.f32.mrf.mxu0
    %v2878 = vadd.f32 0.0, %v2877
    %v2879 = vpop.f32.mrf.mxu0
    %v2880 = vadd.f32 0.0, %v2879
    %2881 = vdwg.mxu0
    %2882 = vmatprep.subr.bf16.mxu0 %v1430
    %2883 = vmatpush1.bf16.msra.mxu0 %v1429
    %2884 = vmatprep.subr.bf16.mxu0 %v1422
    %2885 = vmatpush1.bf16.msra.mxu0 %v1421
    %2886 = vmatprep.subr.bf16.mxu0 %v1414
    %2887 = vmatpush1.bf16.msra.mxu0 %v1413
    %2888 = vmatprep.subr.bf16.mxu0 %v1406
    %2889 = vmatpush1.bf16.msra.mxu0 %v1405
    %2890 = vmatprep.subr.bf16.mxu0 %v1398
    %2891 = vmatpush1.bf16.msra.mxu0 %v1397
    %2892 = vmatprep.subr.bf16.mxu0 %v1390
    %2893 = vmatpush1.bf16.msra.mxu0 %v1389
    %2894 = vmatprep.subr.bf16.mxu0 %v1382
    %2895 = vmatpush1.bf16.msra.mxu0 %v1381
    %2896 = vmatprep.subr.bf16.mxu0 %v1374
    %2897 = vmatpush1.bf16.msra.mxu0 %v1373
    %2898 = vmatprep.subr.bf16.mxu0 %v1494
    %2899 = vmatpush2.bf16.msra.mxu0 %v1493
    %2900 = vmatprep.subr.bf16.mxu0 %v1486
    %2901 = vmatpush2.bf16.msra.mxu0 %v1485
    %2902 = vmatprep.subr.bf16.mxu0 %v1478
    %2903 = vmatpush2.bf16.msra.mxu0 %v1477
    %2904 = vmatprep.subr.bf16.mxu0 %v1470
    %2905 = vmatpush2.bf16.msra.mxu0 %v1469
    %2906 = vmatprep.subr.bf16.mxu0 %v1462
    %2907 = vmatpush2.bf16.msra.mxu0 %v1461
    %2908 = vmatprep.subr.bf16.mxu0 %v1454
    %2909 = vmatpush2.bf16.msra.mxu0 %v1453
    %2910 = vmatprep.subr.bf16.mxu0 %v1446
    %2911 = vmatpush2.bf16.msra.mxu0 %v1445
    %2912 = vmatprep.subr.bf16.mxu0 %v1438
    %2913 = vmatpush2.bf16.msra.mxu0 %v1437
    %2914 = vmatprep.mubr.bf16.mxu0 %v2821
    %2915 = vmatmul.mubr.bf16.gmra.mxu0 %v2820
    %v2916 = vpop.f32.mrf.mxu0
    %v2917 = vadd.f32 0.0, %v2916
    %v2918 = vpop.f32.mrf.mxu0
    %v2919 = vadd.f32 0.0, %v2918
    %v2920 = vpop.f32.mrf.mxu0
    %v2921 = vadd.f32 0.0, %v2920
    %v2922 = vpop.f32.mrf.mxu0
    %v2923 = vadd.f32 0.0, %v2922
    %2924 = vdwg.mxu0
    %2925 = vmatprep.subr.bf16.mxu0 %v1432
    %2926 = vmatpush1.bf16.msra.mxu0 %v1431
    %2927 = vmatprep.subr.bf16.mxu0 %v1424
    %2928 = vmatpush1.bf16.msra.mxu0 %v1423
    %2929 = vmatprep.subr.bf16.mxu0 %v1416
    %2930 = vmatpush1.bf16.msra.mxu0 %v1415
    %2931 = vmatprep.subr.bf16.mxu0 %v1408
    %2932 = vmatpush1.bf16.msra.mxu0 %v1407
    %2933 = vmatprep.subr.bf16.mxu0 %v1400
    %2934 = vmatpush1.bf16.msra.mxu0 %v1399
    %2935 = vmatprep.subr.bf16.mxu0 %v1392
    %2936 = vmatpush1.bf16.msra.mxu0 %v1391
    %2937 = vmatprep.subr.bf16.mxu0 %v1384
    %2938 = vmatpush1.bf16.msra.mxu0 %v1383
    %2939 = vmatprep.subr.bf16.mxu0 %v1376
    %2940 = vmatpush1.bf16.msra.mxu0 %v1375
    %2941 = vmatprep.subr.bf16.mxu0 %v1496
    %2942 = vmatpush2.bf16.msra.mxu0 %v1495
    %2943 = vmatprep.subr.bf16.mxu0 %v1488
    %2944 = vmatpush2.bf16.msra.mxu0 %v1487
    %2945 = vmatprep.subr.bf16.mxu0 %v1480
    %2946 = vmatpush2.bf16.msra.mxu0 %v1479
    %2947 = vmatprep.subr.bf16.mxu0 %v1472
    %2948 = vmatpush2.bf16.msra.mxu0 %v1471
    %2949 = vmatprep.subr.bf16.mxu0 %v1464
    %2950 = vmatpush2.bf16.msra.mxu0 %v1463
    %2951 = vmatprep.subr.bf16.mxu0 %v1456
    %2952 = vmatpush2.bf16.msra.mxu0 %v1455
    %2953 = vmatprep.subr.bf16.mxu0 %v1448
    %2954 = vmatpush2.bf16.msra.mxu0 %v1447
    %2955 = vmatprep.subr.bf16.mxu0 %v1440
    %2956 = vmatpush2.bf16.msra.mxu0 %v1439
    %2957 = vmatprep.mubr.bf16.mxu0 %v2821
    %2958 = vmatmul.mubr.bf16.gmra.mxu0 %v2820
    %v2959 = vpop.f32.mrf.mxu0
    %v2960 = vadd.f32 0.0, %v2959
    %v2961 = vpop.f32.mrf.mxu0
    %v2962 = vadd.f32 0.0, %v2961
    %v2963 = vpop.f32.mrf.mxu0
    %v2964 = vadd.f32 0.0, %v2963
    %v2965 = vpop.f32.mrf.mxu0
    %v2966 = vadd.f32 0.0, %v2965
    %2967 = vdwg.mxu0
    %2968 = vmatprep.subr.bf16.mxu0 %v1434
    %2969 = vmatpush1.bf16.msra.mxu0 %v1433
    %2970 = vmatprep.subr.bf16.mxu0 %v1426
    %2971 = vmatpush1.bf16.msra.mxu0 %v1425
    %2972 = vmatprep.subr.bf16.mxu0 %v1418
    %2973 = vmatpush1.bf16.msra.mxu0 %v1417
    %2974 = vmatprep.subr.bf16.mxu0 %v1410
    %2975 = vmatpush1.bf16.msra.mxu0 %v1409
    %2976 = vmatprep.subr.bf16.mxu0 %v1402
    %2977 = vmatpush1.bf16.msra.mxu0 %v1401
    %2978 = vmatprep.subr.bf16.mxu0 %v1394
    %2979 = vmatpush1.bf16.msra.mxu0 %v1393
    %2980 = vmatprep.subr.bf16.mxu0 %v1386
    %2981 = vmatpush1.bf16.msra.mxu0 %v1385
    %2982 = vmatprep.subr.bf16.mxu0 %v1378
    %2983 = vmatpush1.bf16.msra.mxu0 %v1377
    %2984 = vmatprep.subr.bf16.mxu0 %v1498
    %2985 = vmatpush2.bf16.msra.mxu0 %v1497
    %2986 = vmatprep.subr.bf16.mxu0 %v1490
    %2987 = vmatpush2.bf16.msra.mxu0 %v1489
    %2988 = vmatprep.subr.bf16.mxu0 %v1482
    %2989 = vmatpush2.bf16.msra.mxu0 %v1481
    %2990 = vmatprep.subr.bf16.mxu0 %v1474
    %2991 = vmatpush2.bf16.msra.mxu0 %v1473
    %2992 = vmatprep.subr.bf16.mxu0 %v1466
    %2993 = vmatpush2.bf16.msra.mxu0 %v1465
    %2994 = vmatprep.subr.bf16.mxu0 %v1458
    %2995 = vmatpush2.bf16.msra.mxu0 %v1457
    %2996 = vmatprep.subr.bf16.mxu0 %v1450
    %2997 = vmatpush2.bf16.msra.mxu0 %v1449
    %2998 = vmatprep.subr.bf16.mxu0 %v1442
    %2999 = vmatpush2.bf16.msra.mxu0 %v1441
    %3000 = vmatprep.mubr.bf16.mxu0 %v2821
    %3001 = vmatmul.mubr.bf16.gmra.mxu0 %v2820
    %v3002 = vpop.f32.mrf.mxu0
    %v3003 = vadd.f32 0.0, %v3002
    %v3004 = vpop.f32.mrf.mxu0
    %v3005 = vadd.f32 0.0, %v3004
    %v3006 = vpop.f32.mrf.mxu0
    %v3007 = vadd.f32 0.0, %v3006
    %v3008 = vpop.f32.mrf.mxu0
    %v3009 = vadd.f32 0.0, %v3008
    %3010 = vdwg.mxu0
    %v3011 = vadd.f32 %v2823, %v2874
    %v3012 = vadd.f32 %v2824, %v2876
    %v3013 = vadd.f32 %v2825, %v2917
    %v3014 = vadd.f32 %v2826, %v2919
    %v3015 = vadd.f32 %v2827, %v2960
    %v3016 = vadd.f32 %v2828, %v2962
    %v3017 = vadd.f32 %v2829, %v3003
    %v3018 = vadd.f32 %v2830, %v3005
    %v3019 = vadd.f32 %v2831, %v2878
    %v3020 = vadd.f32 %v2832, %v2880
    %v3021 = vadd.f32 %v2833, %v2921
    %v3022 = vadd.f32 %v2834, %v2923
    %v3023 = vadd.f32 %v2835, %v2964
    %v3024 = vadd.f32 %v2836, %v2966
    %v3025 = vadd.f32 %v2837, %v3007
    %v3026 = vadd.f32 %v2838, %v3009
    %v3027 = vxor.u32 %v3011, 2147483648
    %v3028 = vxor.u32 %v3012, 2147483648
    %v3029 = vxor.u32 %v3013, 2147483648
    %v3030 = vxor.u32 %v3014, 2147483648
    %v3031 = vxor.u32 %v3015, 2147483648
    %v3032 = vxor.u32 %v3016, 2147483648
    %v3033 = vxor.u32 %v3019, 2147483648
    %v3034 = vxor.u32 %v3020, 2147483648
    %v3035 = vxor.u32 %v3021, 2147483648
    %v3036 = vxor.u32 %v3022, 2147483648
    %v3037 = vxor.u32 %v3023, 2147483648
    %v3038 = vxor.u32 %v3024, 2147483648
    %v3039 = vmul.f32 %v3027, 1.442695
    %v3040 = vpow.pop %v3039
    %v3041 = vmul.f32 %v3028, 1.442695
    %v3042 = vpow.pop %v3041
    %v3043 = vmul.f32 %v3029, 1.442695
    %v3044 = vpow.pop %v3043
    %v3045 = vmul.f32 %v3030, 1.442695
    %v3046 = vpow.pop %v3045
    %v3047 = vmul.f32 %v3031, 1.442695
    %v3048 = vpow.pop %v3047
    %v3049 = vmul.f32 %v3032, 1.442695
    %v3050 = vpow.pop %v3049
    %v3051 = vmul.f32 %v3033, 1.442695
    %v3052 = vpow.pop %v3051
    %v3053 = vmul.f32 %v3034, 1.442695
    %v3054 = vpow.pop %v3053
    %v3055 = vmul.f32 %v3035, 1.442695
    %v3056 = vpow.pop %v3055
    %v3057 = vmul.f32 %v3036, 1.442695
    %v3058 = vpow.pop %v3057
    %v3059 = vmul.f32 %v3037, 1.442695
    %v3060 = vpow.pop %v3059
    %v3061 = vmul.f32 %v3038, 1.442695
    %v3062 = vpow.pop %v3061
    %v3063 = vadd.f32 %v3040, 1.0
    %v3064 = vadd.f32 %v3042, 1.0
    %v3065 = vadd.f32 %v3044, 1.0
    %v3066 = vadd.f32 %v3046, 1.0
    %v3067 = vadd.f32 %v3048, 1.0
    %v3068 = vadd.f32 %v3050, 1.0
    %v3069 = vadd.f32 %v3052, 1.0
    %v3070 = vadd.f32 %v3054, 1.0
    %v3071 = vadd.f32 %v3056, 1.0
    %v3072 = vadd.f32 %v3058, 1.0
    %v3073 = vadd.f32 %v3060, 1.0
    %v3074 = vadd.f32 %v3062, 1.0
    %v3075 = vrcp.pop %v3063
    %v3076 = vmul.f32 1.0, %v3075
    %v3077 = vrcp.pop %v3064
    %v3078 = vmul.f32 1.0, %v3077
    %v3079 = vrcp.pop %v3065
    %v3080 = vmul.f32 1.0, %v3079
    %v3081 = vrcp.pop %v3066
    %v3082 = vmul.f32 1.0, %v3081
    %v3083 = vrcp.pop %v3067
    %v3084 = vmul.f32 1.0, %v3083
    %v3085 = vrcp.pop %v3068
    %v3086 = vmul.f32 1.0, %v3085
    %v3087 = vrcp.pop %v3069
    %v3088 = vmul.f32 1.0, %v3087
    %v3089 = vrcp.pop %v3070
    %v3090 = vmul.f32 1.0, %v3089
    %v3091 = vrcp.pop %v3071
    %v3092 = vmul.f32 1.0, %v3091
    %v3093 = vrcp.pop %v3072
    %v3094 = vmul.f32 1.0, %v3093
    %v3095 = vrcp.pop %v3073
    %v3096 = vmul.f32 1.0, %v3095
    %v3097 = vrcp.pop %v3074
    %v3098 = vmul.f32 1.0, %v3097
    %v3099 = vtanh.pop %v3017
    %v3100 = vtanh.pop %v3018
    %v3101 = vtanh.pop %v3025
    %v3102 = vtanh.pop %v3026
    %v3103 = vmul.f32 %v3080, %v2808
    %v3104 = vmul.f32 %v3082, %v2809
    %v3105 = vmul.f32 %v3092, %v2810
    %v3106 = vmul.f32 %v3094, %v2811
    %v3107 = vmul.f32 %v3076, %v3099
    %v3108 = vmul.f32 %v3078, %v3100
    %v3109 = vmul.f32 %v3088, %v3101
    %v3110 = vmul.f32 %v3090, %v3102
    %v3111 = vadd.f32 %v3103, %v3107
    %v3112 = vadd.f32 %v3104, %v3108
    %v3113 = vadd.f32 %v3105, %v3109
    %v3114 = vadd.f32 %v3106, %v3110
    %v3115 = vtanh.pop %v3111
    %v3116 = vtanh.pop %v3112
    %v3117 = vtanh.pop %v3113
    %v3118 = vtanh.pop %v3114
    %v3119 = vmul.f32 %v3084, %v3115
    %v3120 = vmul.f32 %v3086, %v3116
    %v3121 = vmul.f32 %v3096, %v3117
    %v3122 = vmul.f32 %v3098, %v3118
    %v3123 = vpack.c.bf16 %v3121, %v3119
    %v3124 = vpack.c.bf16 %v3122, %v3120
    %s3125 = scalar_lea.vmem [#allocation2], 640
    %v3126 = vld [vmem:[%s3125] sm:$0xff]
    %v3127 = vld [vmem:[%s3125 + $0x8] sm:$0xff]
    %v3128 = vld [vmem:[%s3125 + $0x10] sm:$0xff]
    %v3129 = vld [vmem:[%s3125 + $0x18] sm:$0xff]
    %v3130 = vld [vmem:[%s3125 + $0x20] sm:$0xff]
    %v3131 = vld [vmem:[%s3125 + $0x28] sm:$0xff]
    %v3132 = vld [vmem:[%s3125 + $0x30] sm:$0xff]
    %v3133 = vld [vmem:[%s3125 + $0x38] sm:$0xff]
    %v3134 = vld [vmem:[%s3125 + $0x40] sm:$0xff]
    %v3135 = vld [vmem:[%s3125 + $0x48] sm:$0xff]
    %v3136 = vld [vmem:[%s3125 + $0x50] sm:$0xff]
    %v3137 = vld [vmem:[%s3125 + $0x58] sm:$0xff]
    %v3138 = vld [vmem:[%s3125 + $0x60] sm:$0xff]
    %v3139 = vld [vmem:[%s3125 + $0x68] sm:$0xff]
    %v3140 = vld [vmem:[%s3125 + $0x70] sm:$0xff]
    %v3141 = vld [vmem:[%s3125 + $0x78] sm:$0xff]
    %3142 = vmatprep.subr.bf16.mxu0 %v1428
    %3143 = vmatpush1.bf16.msra.mxu0 %v1427
    %3144 = vmatprep.subr.bf16.mxu0 %v1420
    %3145 = vmatpush1.bf16.msra.mxu0 %v1419
    %3146 = vmatprep.subr.bf16.mxu0 %v1412
    %3147 = vmatpush1.bf16.msra.mxu0 %v1411
    %3148 = vmatprep.subr.bf16.mxu0 %v1404
    %3149 = vmatpush1.bf16.msra.mxu0 %v1403
    %3150 = vmatprep.subr.bf16.mxu0 %v1396
    %3151 = vmatpush1.bf16.msra.mxu0 %v1395
    %3152 = vmatprep.subr.bf16.mxu0 %v1388
    %3153 = vmatpush1.bf16.msra.mxu0 %v1387
    %3154 = vmatprep.subr.bf16.mxu0 %v1380
    %3155 = vmatpush1.bf16.msra.mxu0 %v1379
    %3156 = vmatprep.subr.bf16.mxu0 %v1372
    %3157 = vmatpush1.bf16.msra.mxu0 %v1371
    %3158 = vmatprep.subr.bf16.mxu0 %v1492
    %3159 = vmatpush2.bf16.msra.mxu0 %v1491
    %3160 = vmatprep.subr.bf16.mxu0 %v1484
    %3161 = vmatpush2.bf16.msra.mxu0 %v1483
    %3162 = vmatprep.subr.bf16.mxu0 %v1476
    %3163 = vmatpush2.bf16.msra.mxu0 %v1475
    %3164 = vmatprep.subr.bf16.mxu0 %v1468
    %3165 = vmatpush2.bf16.msra.mxu0 %v1467
    %3166 = vmatprep.subr.bf16.mxu0 %v1460
    %3167 = vmatpush2.bf16.msra.mxu0 %v1459
    %3168 = vmatprep.subr.bf16.mxu0 %v1452
    %3169 = vmatpush2.bf16.msra.mxu0 %v1451
    %3170 = vmatprep.subr.bf16.mxu0 %v1444
    %3171 = vmatpush2.bf16.msra.mxu0 %v1443
    %3172 = vmatprep.subr.bf16.mxu0 %v1436
    %3173 = vmatpush2.bf16.msra.mxu0 %v1435
    %3174 = vmatprep.mubr.bf16.mxu0 %v3124
    %3175 = vmatmul.mubr.bf16.gmra.mxu0 %v3123
    %v3176 = vpop.f32.mrf.mxu0
    %v3177 = vadd.f32 0.0, %v3176
    %v3178 = vpop.f32.mrf.mxu0
    %v3179 = vadd.f32 0.0, %v3178
    %v3180 = vpop.f32.mrf.mxu0
    %v3181 = vadd.f32 0.0, %v3180
    %v3182 = vpop.f32.mrf.mxu0
    %v3183 = vadd.f32 0.0, %v3182
    %3184 = vdwg.mxu0
    %3185 = vmatprep.subr.bf16.mxu0 %v1430
    %3186 = vmatpush1.bf16.msra.mxu0 %v1429
    %3187 = vmatprep.subr.bf16.mxu0 %v1422
    %3188 = vmatpush1.bf16.msra.mxu0 %v1421
    %3189 = vmatprep.subr.bf16.mxu0 %v1414
    %3190 = vmatpush1.bf16.msra.mxu0 %v1413
    %3191 = vmatprep.subr.bf16.mxu0 %v1406
    %3192 = vmatpush1.bf16.msra.mxu0 %v1405
    %3193 = vmatprep.subr.bf16.mxu0 %v1398
    %3194 = vmatpush1.bf16.msra.mxu0 %v1397
    %3195 = vmatprep.subr.bf16.mxu0 %v1390
    %3196 = vmatpush1.bf16.msra.mxu0 %v1389
    %3197 = vmatprep.subr.bf16.mxu0 %v1382
    %3198 = vmatpush1.bf16.msra.mxu0 %v1381
    %3199 = vmatprep.subr.bf16.mxu0 %v1374
    %3200 = vmatpush1.bf16.msra.mxu0 %v1373
    %3201 = vmatprep.subr.bf16.mxu0 %v1494
    %3202 = vmatpush2.bf16.msra.mxu0 %v1493
    %3203 = vmatprep.subr.bf16.mxu0 %v1486
    %3204 = vmatpush2.bf16.msra.mxu0 %v1485
    %3205 = vmatprep.subr.bf16.mxu0 %v1478
    %3206 = vmatpush2.bf16.msra.mxu0 %v1477
    %3207 = vmatprep.subr.bf16.mxu0 %v1470
    %3208 = vmatpush2.bf16.msra.mxu0 %v1469
    %3209 = vmatprep.subr.bf16.mxu0 %v1462
    %3210 = vmatpush2.bf16.msra.mxu0 %v1461
    %3211 = vmatprep.subr.bf16.mxu0 %v1454
    %3212 = vmatpush2.bf16.msra.mxu0 %v1453
    %3213 = vmatprep.subr.bf16.mxu0 %v1446
    %3214 = vmatpush2.bf16.msra.mxu0 %v1445
    %3215 = vmatprep.subr.bf16.mxu0 %v1438
    %3216 = vmatpush2.bf16.msra.mxu0 %v1437
    %3217 = vmatprep.mubr.bf16.mxu0 %v3124
    %3218 = vmatmul.mubr.bf16.gmra.mxu0 %v3123
    %v3219 = vpop.f32.mrf.mxu0
    %v3220 = vadd.f32 0.0, %v3219
    %v3221 = vpop.f32.mrf.mxu0
    %v3222 = vadd.f32 0.0, %v3221
    %v3223 = vpop.f32.mrf.mxu0
    %v3224 = vadd.f32 0.0, %v3223
    %v3225 = vpop.f32.mrf.mxu0
    %v3226 = vadd.f32 0.0, %v3225
    %3227 = vdwg.mxu0
    %3228 = vmatprep.subr.bf16.mxu0 %v1432
    %3229 = vmatpush1.bf16.msra.mxu0 %v1431
    %3230 = vmatprep.subr.bf16.mxu0 %v1424
    %3231 = vmatpush1.bf16.msra.mxu0 %v1423
    %3232 = vmatprep.subr.bf16.mxu0 %v1416
    %3233 = vmatpush1.bf16.msra.mxu0 %v1415
    %3234 = vmatprep.subr.bf16.mxu0 %v1408
    %3235 = vmatpush1.bf16.msra.mxu0 %v1407
    %3236 = vmatprep.subr.bf16.mxu0 %v1400
    %3237 = vmatpush1.bf16.msra.mxu0 %v1399
    %3238 = vmatprep.subr.bf16.mxu0 %v1392
    %3239 = vmatpush1.bf16.msra.mxu0 %v1391
    %3240 = vmatprep.subr.bf16.mxu0 %v1384
    %3241 = vmatpush1.bf16.msra.mxu0 %v1383
    %3242 = vmatprep.subr.bf16.mxu0 %v1376
    %3243 = vmatpush1.bf16.msra.mxu0 %v1375
    %3244 = vmatprep.subr.bf16.mxu0 %v1496
    %3245 = vmatpush2.bf16.msra.mxu0 %v1495
    %3246 = vmatprep.subr.bf16.mxu0 %v1488
    %3247 = vmatpush2.bf16.msra.mxu0 %v1487
    %3248 = vmatprep.subr.bf16.mxu0 %v1480
    %3249 = vmatpush2.bf16.msra.mxu0 %v1479
    %3250 = vmatprep.subr.bf16.mxu0 %v1472
    %3251 = vmatpush2.bf16.msra.mxu0 %v1471
    %3252 = vmatprep.subr.bf16.mxu0 %v1464
    %3253 = vmatpush2.bf16.msra.mxu0 %v1463
    %3254 = vmatprep.subr.bf16.mxu0 %v1456
    %3255 = vmatpush2.bf16.msra.mxu0 %v1455
    %3256 = vmatprep.subr.bf16.mxu0 %v1448
    %3257 = vmatpush2.bf16.msra.mxu0 %v1447
    %3258 = vmatprep.subr.bf16.mxu0 %v1440
    %3259 = vmatpush2.bf16.msra.mxu0 %v1439
    %3260 = vmatprep.mubr.bf16.mxu0 %v3124
    %3261 = vmatmul.mubr.bf16.gmra.mxu0 %v3123
    %v3262 = vpop.f32.mrf.mxu0
    %v3263 = vadd.f32 0.0, %v3262
    %v3264 = vpop.f32.mrf.mxu0
    %v3265 = vadd.f32 0.0, %v3264
    %v3266 = vpop.f32.mrf.mxu0
    %v3267 = vadd.f32 0.0, %v3266
    %v3268 = vpop.f32.mrf.mxu0
    %v3269 = vadd.f32 0.0, %v3268
    %3270 = vdwg.mxu0
    %3271 = vmatprep.subr.bf16.mxu0 %v1434
    %3272 = vmatpush1.bf16.msra.mxu0 %v1433
    %3273 = vmatprep.subr.bf16.mxu0 %v1426
    %3274 = vmatpush1.bf16.msra.mxu0 %v1425
    %3275 = vmatprep.subr.bf16.mxu0 %v1418
    %3276 = vmatpush1.bf16.msra.mxu0 %v1417
    %3277 = vmatprep.subr.bf16.mxu0 %v1410
    %3278 = vmatpush1.bf16.msra.mxu0 %v1409
    %3279 = vmatprep.subr.bf16.mxu0 %v1402
    %3280 = vmatpush1.bf16.msra.mxu0 %v1401
    %3281 = vmatprep.subr.bf16.mxu0 %v1394
    %3282 = vmatpush1.bf16.msra.mxu0 %v1393
    %3283 = vmatprep.subr.bf16.mxu0 %v1386
    %3284 = vmatpush1.bf16.msra.mxu0 %v1385
    %3285 = vmatprep.subr.bf16.mxu0 %v1378
    %3286 = vmatpush1.bf16.msra.mxu0 %v1377
    %3287 = vmatprep.subr.bf16.mxu0 %v1498
    %3288 = vmatpush2.bf16.msra.mxu0 %v1497
    %3289 = vmatprep.subr.bf16.mxu0 %v1490
    %3290 = vmatpush2.bf16.msra.mxu0 %v1489
    %3291 = vmatprep.subr.bf16.mxu0 %v1482
    %3292 = vmatpush2.bf16.msra.mxu0 %v1481
    %3293 = vmatprep.subr.bf16.mxu0 %v1474
    %3294 = vmatpush2.bf16.msra.mxu0 %v1473
    %3295 = vmatprep.subr.bf16.mxu0 %v1466
    %3296 = vmatpush2.bf16.msra.mxu0 %v1465
    %3297 = vmatprep.subr.bf16.mxu0 %v1458
    %3298 = vmatpush2.bf16.msra.mxu0 %v1457
    %3299 = vmatprep.subr.bf16.mxu0 %v1450
    %3300 = vmatpush2.bf16.msra.mxu0 %v1449
    %3301 = vmatprep.subr.bf16.mxu0 %v1442
    %3302 = vmatpush2.bf16.msra.mxu0 %v1441
    %3303 = vmatprep.mubr.bf16.mxu0 %v3124
    %3304 = vmatmul.mubr.bf16.gmra.mxu0 %v3123
    %v3305 = vpop.f32.mrf.mxu0
    %v3306 = vadd.f32 0.0, %v3305
    %v3307 = vpop.f32.mrf.mxu0
    %v3308 = vadd.f32 0.0, %v3307
    %v3309 = vpop.f32.mrf.mxu0
    %v3310 = vadd.f32 0.0, %v3309
    %v3311 = vpop.f32.mrf.mxu0
    %v3312 = vadd.f32 0.0, %v3311
    %3313 = vdwg.mxu0
    %v3314 = vadd.f32 %v3126, %v3177
    %v3315 = vadd.f32 %v3127, %v3179
    %v3316 = vadd.f32 %v3128, %v3220
    %v3317 = vadd.f32 %v3129, %v3222
    %v3318 = vadd.f32 %v3130, %v3263
    %v3319 = vadd.f32 %v3131, %v3265
    %v3320 = vadd.f32 %v3132, %v3306
    %v3321 = vadd.f32 %v3133, %v3308
    %v3322 = vadd.f32 %v3134, %v3181
    %v3323 = vadd.f32 %v3135, %v3183
    %v3324 = vadd.f32 %v3136, %v3224
    %v3325 = vadd.f32 %v3137, %v3226
    %v3326 = vadd.f32 %v3138, %v3267
    %v3327 = vadd.f32 %v3139, %v3269
    %v3328 = vadd.f32 %v3140, %v3310
    %v3329 = vadd.f32 %v3141, %v3312
    %v3330 = vxor.u32 %v3314, 2147483648
    %v3331 = vxor.u32 %v3315, 2147483648
    %v3332 = vxor.u32 %v3316, 2147483648
    %v3333 = vxor.u32 %v3317, 2147483648
    %v3334 = vxor.u32 %v3318, 2147483648
    %v3335 = vxor.u32 %v3319, 2147483648
    %v3336 = vxor.u32 %v3322, 2147483648
    %v3337 = vxor.u32 %v3323, 2147483648
    %v3338 = vxor.u32 %v3324, 2147483648
    %v3339 = vxor.u32 %v3325, 2147483648
    %v3340 = vxor.u32 %v3326, 2147483648
    %v3341 = vxor.u32 %v3327, 2147483648
    %v3342 = vmul.f32 %v3330, 1.442695
    %v3343 = vpow.pop %v3342
    %v3344 = vmul.f32 %v3331, 1.442695
    %v3345 = vpow.pop %v3344
    %v3346 = vmul.f32 %v3332, 1.442695
    %v3347 = vpow.pop %v3346
    %v3348 = vmul.f32 %v3333, 1.442695
    %v3349 = vpow.pop %v3348
    %v3350 = vmul.f32 %v3334, 1.442695
    %v3351 = vpow.pop %v3350
    %v3352 = vmul.f32 %v3335, 1.442695
    %v3353 = vpow.pop %v3352
    %v3354 = vmul.f32 %v3336, 1.442695
    %v3355 = vpow.pop %v3354
    %v3356 = vmul.f32 %v3337, 1.442695
    %v3357 = vpow.pop %v3356
    %v3358 = vmul.f32 %v3338, 1.442695
    %v3359 = vpow.pop %v3358
    %v3360 = vmul.f32 %v3339, 1.442695
    %v3361 = vpow.pop %v3360
    %v3362 = vmul.f32 %v3340, 1.442695
    %v3363 = vpow.pop %v3362
    %v3364 = vmul.f32 %v3341, 1.442695
    %v3365 = vpow.pop %v3364
    %v3366 = vadd.f32 %v3343, 1.0
    %v3367 = vadd.f32 %v3345, 1.0
    %v3368 = vadd.f32 %v3347, 1.0
    %v3369 = vadd.f32 %v3349, 1.0
    %v3370 = vadd.f32 %v3351, 1.0
    %v3371 = vadd.f32 %v3353, 1.0
    %v3372 = vadd.f32 %v3355, 1.0
    %v3373 = vadd.f32 %v3357, 1.0
    %v3374 = vadd.f32 %v3359, 1.0
    %v3375 = vadd.f32 %v3361, 1.0
    %v3376 = vadd.f32 %v3363, 1.0
    %v3377 = vadd.f32 %v3365, 1.0
    %v3378 = vrcp.pop %v3366
    %v3379 = vmul.f32 1.0, %v3378
    %v3380 = vrcp.pop %v3367
    %v3381 = vmul.f32 1.0, %v3380
    %v3382 = vrcp.pop %v3368
    %v3383 = vmul.f32 1.0, %v3382
    %v3384 = vrcp.pop %v3369
    %v3385 = vmul.f32 1.0, %v3384
    %v3386 = vrcp.pop %v3370
    %v3387 = vmul.f32 1.0, %v3386
    %v3388 = vrcp.pop %v3371
    %v3389 = vmul.f32 1.0, %v3388
    %v3390 = vrcp.pop %v3372
    %v3391 = vmul.f32 1.0, %v3390
    %v3392 = vrcp.pop %v3373
    %v3393 = vmul.f32 1.0, %v3392
    %v3394 = vrcp.pop %v3374
    %v3395 = vmul.f32 1.0, %v3394
    %v3396 = vrcp.pop %v3375
    %v3397 = vmul.f32 1.0, %v3396
    %v3398 = vrcp.pop %v3376
    %v3399 = vmul.f32 1.0, %v3398
    %v3400 = vrcp.pop %v3377
    %v3401 = vmul.f32 1.0, %v3400
    %v3402 = vtanh.pop %v3320
    %v3403 = vtanh.pop %v3321
    %v3404 = vtanh.pop %v3328
    %v3405 = vtanh.pop %v3329
    %v3406 = vmul.f32 %v3383, %v3111
    %v3407 = vmul.f32 %v3385, %v3112
    %v3408 = vmul.f32 %v3395, %v3113
    %v3409 = vmul.f32 %v3397, %v3114
    %v3410 = vmul.f32 %v3379, %v3402
    %v3411 = vmul.f32 %v3381, %v3403
    %v3412 = vmul.f32 %v3391, %v3404
    %v3413 = vmul.f32 %v3393, %v3405
    %v3414 = vadd.f32 %v3406, %v3410
    %v3415 = vadd.f32 %v3407, %v3411
    %v3416 = vadd.f32 %v3408, %v3412
    %v3417 = vadd.f32 %v3409, %v3413
    %v3418 = vtanh.pop %v3414
    %v3419 = vtanh.pop %v3415
    %v3420 = vtanh.pop %v3416
    %v3421 = vtanh.pop %v3417
    %v3422 = vmul.f32 %v3387, %v3418
    %v3423 = vmul.f32 %v3389, %v3419
    %v3424 = vmul.f32 %v3399, %v3420
    %v3425 = vmul.f32 %v3401, %v3421
    %v3426 = vpack.c.bf16 %v3424, %v3422
    %v3427 = vpack.c.bf16 %v3425, %v3423
    %s3428 = scalar_lea.vmem [#allocation2], 768
    %v3429 = vld [vmem:[%s3428] sm:$0xff]
    %v3430 = vld [vmem:[%s3428 + $0x8] sm:$0xff]
    %v3431 = vld [vmem:[%s3428 + $0x10] sm:$0xff]
    %v3432 = vld [vmem:[%s3428 + $0x18] sm:$0xff]
    %v3433 = vld [vmem:[%s3428 + $0x20] sm:$0xff]
    %v3434 = vld [vmem:[%s3428 + $0x28] sm:$0xff]
    %v3435 = vld [vmem:[%s3428 + $0x30] sm:$0xff]
    %v3436 = vld [vmem:[%s3428 + $0x38] sm:$0xff]
    %v3437 = vld [vmem:[%s3428 + $0x40] sm:$0xff]
    %v3438 = vld [vmem:[%s3428 + $0x48] sm:$0xff]
    %v3439 = vld [vmem:[%s3428 + $0x50] sm:$0xff]
    %v3440 = vld [vmem:[%s3428 + $0x58] sm:$0xff]
    %v3441 = vld [vmem:[%s3428 + $0x60] sm:$0xff]
    %v3442 = vld [vmem:[%s3428 + $0x68] sm:$0xff]
    %v3443 = vld [vmem:[%s3428 + $0x70] sm:$0xff]
    %v3444 = vld [vmem:[%s3428 + $0x78] sm:$0xff]
    %3445 = vmatprep.subr.bf16.mxu0 %v1428
    %3446 = vmatpush1.bf16.msra.mxu0 %v1427
    %3447 = vmatprep.subr.bf16.mxu0 %v1420
    %3448 = vmatpush1.bf16.msra.mxu0 %v1419
    %3449 = vmatprep.subr.bf16.mxu0 %v1412
    %3450 = vmatpush1.bf16.msra.mxu0 %v1411
    %3451 = vmatprep.subr.bf16.mxu0 %v1404
    %3452 = vmatpush1.bf16.msra.mxu0 %v1403
    %3453 = vmatprep.subr.bf16.mxu0 %v1396
    %3454 = vmatpush1.bf16.msra.mxu0 %v1395
    %3455 = vmatprep.subr.bf16.mxu0 %v1388
    %3456 = vmatpush1.bf16.msra.mxu0 %v1387
    %3457 = vmatprep.subr.bf16.mxu0 %v1380
    %3458 = vmatpush1.bf16.msra.mxu0 %v1379
    %3459 = vmatprep.subr.bf16.mxu0 %v1372
    %3460 = vmatpush1.bf16.msra.mxu0 %v1371
    %3461 = vmatprep.subr.bf16.mxu0 %v1492
    %3462 = vmatpush2.bf16.msra.mxu0 %v1491
    %3463 = vmatprep.subr.bf16.mxu0 %v1484
    %3464 = vmatpush2.bf16.msra.mxu0 %v1483
    %3465 = vmatprep.subr.bf16.mxu0 %v1476
    %3466 = vmatpush2.bf16.msra.mxu0 %v1475
    %3467 = vmatprep.subr.bf16.mxu0 %v1468
    %3468 = vmatpush2.bf16.msra.mxu0 %v1467
    %3469 = vmatprep.subr.bf16.mxu0 %v1460
    %3470 = vmatpush2.bf16.msra.mxu0 %v1459
    %3471 = vmatprep.subr.bf16.mxu0 %v1452
    %3472 = vmatpush2.bf16.msra.mxu0 %v1451
    %3473 = vmatprep.subr.bf16.mxu0 %v1444
    %3474 = vmatpush2.bf16.msra.mxu0 %v1443
    %3475 = vmatprep.subr.bf16.mxu0 %v1436
    %3476 = vmatpush2.bf16.msra.mxu0 %v1435
    %3477 = vmatprep.mubr.bf16.mxu0 %v3427
    %3478 = vmatmul.mubr.bf16.gmra.mxu0 %v3426
    %v3479 = vpop.f32.mrf.mxu0
    %v3480 = vadd.f32 0.0, %v3479
    %v3481 = vpop.f32.mrf.mxu0
    %v3482 = vadd.f32 0.0, %v3481
    %v3483 = vpop.f32.mrf.mxu0
    %v3484 = vadd.f32 0.0, %v3483
    %v3485 = vpop.f32.mrf.mxu0
    %v3486 = vadd.f32 0.0, %v3485
    %3487 = vdwg.mxu0
    %3488 = vmatprep.subr.bf16.mxu0 %v1430
    %3489 = vmatpush1.bf16.msra.mxu0 %v1429
    %3490 = vmatprep.subr.bf16.mxu0 %v1422
    %3491 = vmatpush1.bf16.msra.mxu0 %v1421
    %3492 = vmatprep.subr.bf16.mxu0 %v1414
    %3493 = vmatpush1.bf16.msra.mxu0 %v1413
    %3494 = vmatprep.subr.bf16.mxu0 %v1406
    %3495 = vmatpush1.bf16.msra.mxu0 %v1405
    %3496 = vmatprep.subr.bf16.mxu0 %v1398
    %3497 = vmatpush1.bf16.msra.mxu0 %v1397
    %3498 = vmatprep.subr.bf16.mxu0 %v1390
    %3499 = vmatpush1.bf16.msra.mxu0 %v1389
    %3500 = vmatprep.subr.bf16.mxu0 %v1382
    %3501 = vmatpush1.bf16.msra.mxu0 %v1381
    %3502 = vmatprep.subr.bf16.mxu0 %v1374
    %3503 = vmatpush1.bf16.msra.mxu0 %v1373
    %3504 = vmatprep.subr.bf16.mxu0 %v1494
    %3505 = vmatpush2.bf16.msra.mxu0 %v1493
    %3506 = vmatprep.subr.bf16.mxu0 %v1486
    %3507 = vmatpush2.bf16.msra.mxu0 %v1485
    %3508 = vmatprep.subr.bf16.mxu0 %v1478
    %3509 = vmatpush2.bf16.msra.mxu0 %v1477
    %3510 = vmatprep.subr.bf16.mxu0 %v1470
    %3511 = vmatpush2.bf16.msra.mxu0 %v1469
    %3512 = vmatprep.subr.bf16.mxu0 %v1462
    %3513 = vmatpush2.bf16.msra.mxu0 %v1461
    %3514 = vmatprep.subr.bf16.mxu0 %v1454
    %3515 = vmatpush2.bf16.msra.mxu0 %v1453
    %3516 = vmatprep.subr.bf16.mxu0 %v1446
    %3517 = vmatpush2.bf16.msra.mxu0 %v1445
    %3518 = vmatprep.subr.bf16.mxu0 %v1438
    %3519 = vmatpush2.bf16.msra.mxu0 %v1437
    %3520 = vmatprep.mubr.bf16.mxu0 %v3427
    %3521 = vmatmul.mubr.bf16.gmra.mxu0 %v3426
    %v3522 = vpop.f32.mrf.mxu0
    %v3523 = vadd.f32 0.0, %v3522
    %v3524 = vpop.f32.mrf.mxu0
    %v3525 = vadd.f32 0.0, %v3524
    %v3526 = vpop.f32.mrf.mxu0
    %v3527 = vadd.f32 0.0, %v3526
    %v3528 = vpop.f32.mrf.mxu0
    %v3529 = vadd.f32 0.0, %v3528
    %3530 = vdwg.mxu0
    %3531 = vmatprep.subr.bf16.mxu0 %v1432
    %3532 = vmatpush1.bf16.msra.mxu0 %v1431
    %3533 = vmatprep.subr.bf16.mxu0 %v1424
    %3534 = vmatpush1.bf16.msra.mxu0 %v1423
    %3535 = vmatprep.subr.bf16.mxu0 %v1416
    %3536 = vmatpush1.bf16.msra.mxu0 %v1415
    %3537 = vmatprep.subr.bf16.mxu0 %v1408
    %3538 = vmatpush1.bf16.msra.mxu0 %v1407
    %3539 = vmatprep.subr.bf16.mxu0 %v1400
    %3540 = vmatpush1.bf16.msra.mxu0 %v1399
    %3541 = vmatprep.subr.bf16.mxu0 %v1392
    %3542 = vmatpush1.bf16.msra.mxu0 %v1391
    %3543 = vmatprep.subr.bf16.mxu0 %v1384
    %3544 = vmatpush1.bf16.msra.mxu0 %v1383
    %3545 = vmatprep.subr.bf16.mxu0 %v1376
    %3546 = vmatpush1.bf16.msra.mxu0 %v1375
    %3547 = vmatprep.subr.bf16.mxu0 %v1496
    %3548 = vmatpush2.bf16.msra.mxu0 %v1495
    %3549 = vmatprep.subr.bf16.mxu0 %v1488
    %3550 = vmatpush2.bf16.msra.mxu0 %v1487
    %3551 = vmatprep.subr.bf16.mxu0 %v1480
    %3552 = vmatpush2.bf16.msra.mxu0 %v1479
    %3553 = vmatprep.subr.bf16.mxu0 %v1472
    %3554 = vmatpush2.bf16.msra.mxu0 %v1471
    %3555 = vmatprep.subr.bf16.mxu0 %v1464
    %3556 = vmatpush2.bf16.msra.mxu0 %v1463
    %3557 = vmatprep.subr.bf16.mxu0 %v1456
    %3558 = vmatpush2.bf16.msra.mxu0 %v1455
    %3559 = vmatprep.subr.bf16.mxu0 %v1448
    %3560 = vmatpush2.bf16.msra.mxu0 %v1447
    %3561 = vmatprep.subr.bf16.mxu0 %v1440
    %3562 = vmatpush2.bf16.msra.mxu0 %v1439
    %3563 = vmatprep.mubr.bf16.mxu0 %v3427
    %3564 = vmatmul.mubr.bf16.gmra.mxu0 %v3426
    %v3565 = vpop.f32.mrf.mxu0
    %v3566 = vadd.f32 0.0, %v3565
    %v3567 = vpop.f32.mrf.mxu0
    %v3568 = vadd.f32 0.0, %v3567
    %v3569 = vpop.f32.mrf.mxu0
    %v3570 = vadd.f32 0.0, %v3569
    %v3571 = vpop.f32.mrf.mxu0
    %v3572 = vadd.f32 0.0, %v3571
    %3573 = vdwg.mxu0
    %3574 = vmatprep.subr.bf16.mxu0 %v1434
    %3575 = vmatpush1.bf16.msra.mxu0 %v1433
    %3576 = vmatprep.subr.bf16.mxu0 %v1426
    %3577 = vmatpush1.bf16.msra.mxu0 %v1425
    %3578 = vmatprep.subr.bf16.mxu0 %v1418
    %3579 = vmatpush1.bf16.msra.mxu0 %v1417
    %3580 = vmatprep.subr.bf16.mxu0 %v1410
    %3581 = vmatpush1.bf16.msra.mxu0 %v1409
    %3582 = vmatprep.subr.bf16.mxu0 %v1402
    %3583 = vmatpush1.bf16.msra.mxu0 %v1401
    %3584 = vmatprep.subr.bf16.mxu0 %v1394
    %3585 = vmatpush1.bf16.msra.mxu0 %v1393
    %3586 = vmatprep.subr.bf16.mxu0 %v1386
    %3587 = vmatpush1.bf16.msra.mxu0 %v1385
    %3588 = vmatprep.subr.bf16.mxu0 %v1378
    %3589 = vmatpush1.bf16.msra.mxu0 %v1377
    %3590 = vmatprep.subr.bf16.mxu0 %v1498
    %3591 = vmatpush2.bf16.msra.mxu0 %v1497
    %3592 = vmatprep.subr.bf16.mxu0 %v1490
    %3593 = vmatpush2.bf16.msra.mxu0 %v1489
    %3594 = vmatprep.subr.bf16.mxu0 %v1482
    %3595 = vmatpush2.bf16.msra.mxu0 %v1481
    %3596 = vmatprep.subr.bf16.mxu0 %v1474
    %3597 = vmatpush2.bf16.msra.mxu0 %v1473
    %3598 = vmatprep.subr.bf16.mxu0 %v1466
    %3599 = vmatpush2.bf16.msra.mxu0 %v1465
    %3600 = vmatprep.subr.bf16.mxu0 %v1458
    %3601 = vmatpush2.bf16.msra.mxu0 %v1457
    %3602 = vmatprep.subr.bf16.mxu0 %v1450
    %3603 = vmatpush2.bf16.msra.mxu0 %v1449
    %3604 = vmatprep.subr.bf16.mxu0 %v1442
    %3605 = vmatpush2.bf16.msra.mxu0 %v1441
    %3606 = vmatprep.mubr.bf16.mxu0 %v3427
    %3607 = vmatmul.mubr.bf16.gmra.mxu0 %v3426
    %v3608 = vpop.f32.mrf.mxu0
    %v3609 = vadd.f32 0.0, %v3608
    %v3610 = vpop.f32.mrf.mxu0
    %v3611 = vadd.f32 0.0, %v3610
    %v3612 = vpop.f32.mrf.mxu0
    %v3613 = vadd.f32 0.0, %v3612
    %v3614 = vpop.f32.mrf.mxu0
    %v3615 = vadd.f32 0.0, %v3614
    %3616 = vdwg.mxu0
    %v3617 = vadd.f32 %v3429, %v3480
    %v3618 = vadd.f32 %v3430, %v3482
    %v3619 = vadd.f32 %v3431, %v3523
    %v3620 = vadd.f32 %v3432, %v3525
    %v3621 = vadd.f32 %v3433, %v3566
    %v3622 = vadd.f32 %v3434, %v3568
    %v3623 = vadd.f32 %v3435, %v3609
    %v3624 = vadd.f32 %v3436, %v3611
    %v3625 = vadd.f32 %v3437, %v3484
    %v3626 = vadd.f32 %v3438, %v3486
    %v3627 = vadd.f32 %v3439, %v3527
    %v3628 = vadd.f32 %v3440, %v3529
    %v3629 = vadd.f32 %v3441, %v3570
    %v3630 = vadd.f32 %v3442, %v3572
    %v3631 = vadd.f32 %v3443, %v3613
    %v3632 = vadd.f32 %v3444, %v3615
    %v3633 = vxor.u32 %v3617, 2147483648
    %v3634 = vxor.u32 %v3618, 2147483648
    %v3635 = vxor.u32 %v3619, 2147483648
    %v3636 = vxor.u32 %v3620, 2147483648
    %v3637 = vxor.u32 %v3621, 2147483648
    %v3638 = vxor.u32 %v3622, 2147483648
    %v3639 = vxor.u32 %v3625, 2147483648
    %v3640 = vxor.u32 %v3626, 2147483648
    %v3641 = vxor.u32 %v3627, 2147483648
    %v3642 = vxor.u32 %v3628, 2147483648
    %v3643 = vxor.u32 %v3629, 2147483648
    %v3644 = vxor.u32 %v3630, 2147483648
    %v3645 = vmul.f32 %v3633, 1.442695
    %v3646 = vpow.pop %v3645
    %v3647 = vmul.f32 %v3634, 1.442695
    %v3648 = vpow.pop %v3647
    %v3649 = vmul.f32 %v3635, 1.442695
    %v3650 = vpow.pop %v3649
    %v3651 = vmul.f32 %v3636, 1.442695
    %v3652 = vpow.pop %v3651
    %v3653 = vmul.f32 %v3637, 1.442695
    %v3654 = vpow.pop %v3653
    %v3655 = vmul.f32 %v3638, 1.442695
    %v3656 = vpow.pop %v3655
    %v3657 = vmul.f32 %v3639, 1.442695
    %v3658 = vpow.pop %v3657
    %v3659 = vmul.f32 %v3640, 1.442695
    %v3660 = vpow.pop %v3659
    %v3661 = vmul.f32 %v3641, 1.442695
    %v3662 = vpow.pop %v3661
    %v3663 = vmul.f32 %v3642, 1.442695
    %v3664 = vpow.pop %v3663
    %v3665 = vmul.f32 %v3643, 1.442695
    %v3666 = vpow.pop %v3665
    %v3667 = vmul.f32 %v3644, 1.442695
    %v3668 = vpow.pop %v3667
    %v3669 = vadd.f32 %v3646, 1.0
    %v3670 = vadd.f32 %v3648, 1.0
    %v3671 = vadd.f32 %v3650, 1.0
    %v3672 = vadd.f32 %v3652, 1.0
    %v3673 = vadd.f32 %v3654, 1.0
    %v3674 = vadd.f32 %v3656, 1.0
    %v3675 = vadd.f32 %v3658, 1.0
    %v3676 = vadd.f32 %v3660, 1.0
    %v3677 = vadd.f32 %v3662, 1.0
    %v3678 = vadd.f32 %v3664, 1.0
    %v3679 = vadd.f32 %v3666, 1.0
    %v3680 = vadd.f32 %v3668, 1.0
    %v3681 = vrcp.pop %v3669
    %v3682 = vmul.f32 1.0, %v3681
    %v3683 = vrcp.pop %v3670
    %v3684 = vmul.f32 1.0, %v3683
    %v3685 = vrcp.pop %v3671
    %v3686 = vmul.f32 1.0, %v3685
    %v3687 = vrcp.pop %v3672
    %v3688 = vmul.f32 1.0, %v3687
    %v3689 = vrcp.pop %v3673
    %v3690 = vmul.f32 1.0, %v3689
    %v3691 = vrcp.pop %v3674
    %v3692 = vmul.f32 1.0, %v3691
    %v3693 = vrcp.pop %v3675
    %v3694 = vmul.f32 1.0, %v3693
    %v3695 = vrcp.pop %v3676
    %v3696 = vmul.f32 1.0, %v3695
    %v3697 = vrcp.pop %v3677
    %v3698 = vmul.f32 1.0, %v3697
    %v3699 = vrcp.pop %v3678
    %v3700 = vmul.f32 1.0, %v3699
    %v3701 = vrcp.pop %v3679
    %v3702 = vmul.f32 1.0, %v3701
    %v3703 = vrcp.pop %v3680
    %v3704 = vmul.f32 1.0, %v3703
    %v3705 = vtanh.pop %v3623
    %v3706 = vtanh.pop %v3624
    %v3707 = vtanh.pop %v3631
    %v3708 = vtanh.pop %v3632
    %v3709 = vmul.f32 %v3686, %v3414
    %v3710 = vmul.f32 %v3688, %v3415
    %v3711 = vmul.f32 %v3698, %v3416
    %v3712 = vmul.f32 %v3700, %v3417
    %v3713 = vmul.f32 %v3682, %v3705
    %v3714 = vmul.f32 %v3684, %v3706
    %v3715 = vmul.f32 %v3694, %v3707
    %v3716 = vmul.f32 %v3696, %v3708
    %v3717 = vadd.f32 %v3709, %v3713
    %v3718 = vadd.f32 %v3710, %v3714
    %v3719 = vadd.f32 %v3711, %v3715
    %v3720 = vadd.f32 %v3712, %v3716
    %v3721 = vtanh.pop %v3717
    %v3722 = vtanh.pop %v3718
    %v3723 = vtanh.pop %v3719
    %v3724 = vtanh.pop %v3720
    %v3725 = vmul.f32 %v3690, %v3721
    %v3726 = vmul.f32 %v3692, %v3722
    %v3727 = vmul.f32 %v3702, %v3723
    %v3728 = vmul.f32 %v3704, %v3724
    %v3729 = vpack.c.bf16 %v3727, %v3725
    %v3730 = vpack.c.bf16 %v3728, %v3726
    %s3731 = scalar_lea.vmem [#allocation2], 896
    %v3732 = vld [vmem:[%s3731] sm:$0xff]
    %v3733 = vld [vmem:[%s3731 + $0x8] sm:$0xff]
    %v3734 = vld [vmem:[%s3731 + $0x10] sm:$0xff]
    %v3735 = vld [vmem:[%s3731 + $0x18] sm:$0xff]
    %v3736 = vld [vmem:[%s3731 + $0x20] sm:$0xff]
    %v3737 = vld [vmem:[%s3731 + $0x28] sm:$0xff]
    %v3738 = vld [vmem:[%s3731 + $0x30] sm:$0xff]
    %v3739 = vld [vmem:[%s3731 + $0x38] sm:$0xff]
    %v3740 = vld [vmem:[%s3731 + $0x40] sm:$0xff]
    %v3741 = vld [vmem:[%s3731 + $0x48] sm:$0xff]
    %v3742 = vld [vmem:[%s3731 + $0x50] sm:$0xff]
    %v3743 = vld [vmem:[%s3731 + $0x58] sm:$0xff]
    %v3744 = vld [vmem:[%s3731 + $0x60] sm:$0xff]
    %v3745 = vld [vmem:[%s3731 + $0x68] sm:$0xff]
    %v3746 = vld [vmem:[%s3731 + $0x70] sm:$0xff]
    %v3747 = vld [vmem:[%s3731 + $0x78] sm:$0xff]
    %3748 = vmatprep.subr.bf16.mxu0 %v1428
    %3749 = vmatpush1.bf16.msra.mxu0 %v1427
    %3750 = vmatprep.subr.bf16.mxu0 %v1420
    %3751 = vmatpush1.bf16.msra.mxu0 %v1419
    %3752 = vmatprep.subr.bf16.mxu0 %v1412
    %3753 = vmatpush1.bf16.msra.mxu0 %v1411
    %3754 = vmatprep.subr.bf16.mxu0 %v1404
    %3755 = vmatpush1.bf16.msra.mxu0 %v1403
    %3756 = vmatprep.subr.bf16.mxu0 %v1396
    %3757 = vmatpush1.bf16.msra.mxu0 %v1395
    %3758 = vmatprep.subr.bf16.mxu0 %v1388
    %3759 = vmatpush1.bf16.msra.mxu0 %v1387
    %3760 = vmatprep.subr.bf16.mxu0 %v1380
    %3761 = vmatpush1.bf16.msra.mxu0 %v1379
    %3762 = vmatprep.subr.bf16.mxu0 %v1372
    %3763 = vmatpush1.bf16.msra.mxu0 %v1371
    %3764 = vmatprep.subr.bf16.mxu0 %v1492
    %3765 = vmatpush2.bf16.msra.mxu0 %v1491
    %3766 = vmatprep.subr.bf16.mxu0 %v1484
    %3767 = vmatpush2.bf16.msra.mxu0 %v1483
    %3768 = vmatprep.subr.bf16.mxu0 %v1476
    %3769 = vmatpush2.bf16.msra.mxu0 %v1475
    %3770 = vmatprep.subr.bf16.mxu0 %v1468
    %3771 = vmatpush2.bf16.msra.mxu0 %v1467
    %3772 = vmatprep.subr.bf16.mxu0 %v1460
    %3773 = vmatpush2.bf16.msra.mxu0 %v1459
    %3774 = vmatprep.subr.bf16.mxu0 %v1452
    %3775 = vmatpush2.bf16.msra.mxu0 %v1451
    %3776 = vmatprep.subr.bf16.mxu0 %v1444
    %3777 = vmatpush2.bf16.msra.mxu0 %v1443
    %3778 = vmatprep.subr.bf16.mxu0 %v1436
    %3779 = vmatpush2.bf16.msra.mxu0 %v1435
    %3780 = vmatprep.mubr.bf16.mxu0 %v3730
    %3781 = vmatmul.mubr.bf16.gmra.mxu0 %v3729
    %v3782 = vpop.f32.mrf.mxu0
    %v3783 = vadd.f32 0.0, %v3782
    %v3784 = vpop.f32.mrf.mxu0
    %v3785 = vadd.f32 0.0, %v3784
    %v3786 = vpop.f32.mrf.mxu0
    %v3787 = vadd.f32 0.0, %v3786
    %v3788 = vpop.f32.mrf.mxu0
    %v3789 = vadd.f32 0.0, %v3788
    %3790 = vdwg.mxu0
    %3791 = vmatprep.subr.bf16.mxu0 %v1430
    %3792 = vmatpush1.bf16.msra.mxu0 %v1429
    %3793 = vmatprep.subr.bf16.mxu0 %v1422
    %3794 = vmatpush1.bf16.msra.mxu0 %v1421
    %3795 = vmatprep.subr.bf16.mxu0 %v1414
    %3796 = vmatpush1.bf16.msra.mxu0 %v1413
    %3797 = vmatprep.subr.bf16.mxu0 %v1406
    %3798 = vmatpush1.bf16.msra.mxu0 %v1405
    %3799 = vmatprep.subr.bf16.mxu0 %v1398
    %3800 = vmatpush1.bf16.msra.mxu0 %v1397
    %3801 = vmatprep.subr.bf16.mxu0 %v1390
    %3802 = vmatpush1.bf16.msra.mxu0 %v1389
    %3803 = vmatprep.subr.bf16.mxu0 %v1382
    %3804 = vmatpush1.bf16.msra.mxu0 %v1381
    %3805 = vmatprep.subr.bf16.mxu0 %v1374
    %3806 = vmatpush1.bf16.msra.mxu0 %v1373
    %3807 = vmatprep.subr.bf16.mxu0 %v1494
    %3808 = vmatpush2.bf16.msra.mxu0 %v1493
    %3809 = vmatprep.subr.bf16.mxu0 %v1486
    %3810 = vmatpush2.bf16.msra.mxu0 %v1485
    %3811 = vmatprep.subr.bf16.mxu0 %v1478
    %3812 = vmatpush2.bf16.msra.mxu0 %v1477
    %3813 = vmatprep.subr.bf16.mxu0 %v1470
    %3814 = vmatpush2.bf16.msra.mxu0 %v1469
    %3815 = vmatprep.subr.bf16.mxu0 %v1462
    %3816 = vmatpush2.bf16.msra.mxu0 %v1461
    %3817 = vmatprep.subr.bf16.mxu0 %v1454
    %3818 = vmatpush2.bf16.msra.mxu0 %v1453
    %3819 = vmatprep.subr.bf16.mxu0 %v1446
    %3820 = vmatpush2.bf16.msra.mxu0 %v1445
    %3821 = vmatprep.subr.bf16.mxu0 %v1438
    %3822 = vmatpush2.bf16.msra.mxu0 %v1437
    %3823 = vmatprep.mubr.bf16.mxu0 %v3730
    %3824 = vmatmul.mubr.bf16.gmra.mxu0 %v3729
    %v3825 = vpop.f32.mrf.mxu0
    %v3826 = vadd.f32 0.0, %v3825
    %v3827 = vpop.f32.mrf.mxu0
    %v3828 = vadd.f32 0.0, %v3827
    %v3829 = vpop.f32.mrf.mxu0
    %v3830 = vadd.f32 0.0, %v3829
    %v3831 = vpop.f32.mrf.mxu0
    %v3832 = vadd.f32 0.0, %v3831
    %3833 = vdwg.mxu0
    %3834 = vmatprep.subr.bf16.mxu0 %v1432
    %3835 = vmatpush1.bf16.msra.mxu0 %v1431
    %3836 = vmatprep.subr.bf16.mxu0 %v1424
    %3837 = vmatpush1.bf16.msra.mxu0 %v1423
    %3838 = vmatprep.subr.bf16.mxu0 %v1416
    %3839 = vmatpush1.bf16.msra.mxu0 %v1415
    %3840 = vmatprep.subr.bf16.mxu0 %v1408
    %3841 = vmatpush1.bf16.msra.mxu0 %v1407
    %3842 = vmatprep.subr.bf16.mxu0 %v1400
    %3843 = vmatpush1.bf16.msra.mxu0 %v1399
    %3844 = vmatprep.subr.bf16.mxu0 %v1392
    %3845 = vmatpush1.bf16.msra.mxu0 %v1391
    %3846 = vmatprep.subr.bf16.mxu0 %v1384
    %3847 = vmatpush1.bf16.msra.mxu0 %v1383
    %3848 = vmatprep.subr.bf16.mxu0 %v1376
    %3849 = vmatpush1.bf16.msra.mxu0 %v1375
    %3850 = vmatprep.subr.bf16.mxu0 %v1496
    %3851 = vmatpush2.bf16.msra.mxu0 %v1495
    %3852 = vmatprep.subr.bf16.mxu0 %v1488
    %3853 = vmatpush2.bf16.msra.mxu0 %v1487
    %3854 = vmatprep.subr.bf16.mxu0 %v1480
    %3855 = vmatpush2.bf16.msra.mxu0 %v1479
    %3856 = vmatprep.subr.bf16.mxu0 %v1472
    %3857 = vmatpush2.bf16.msra.mxu0 %v1471
    %3858 = vmatprep.subr.bf16.mxu0 %v1464
    %3859 = vmatpush2.bf16.msra.mxu0 %v1463
    %3860 = vmatprep.subr.bf16.mxu0 %v1456
    %3861 = vmatpush2.bf16.msra.mxu0 %v1455
    %3862 = vmatprep.subr.bf16.mxu0 %v1448
    %3863 = vmatpush2.bf16.msra.mxu0 %v1447
    %3864 = vmatprep.subr.bf16.mxu0 %v1440
    %3865 = vmatpush2.bf16.msra.mxu0 %v1439
    %3866 = vmatprep.mubr.bf16.mxu0 %v3730
    %3867 = vmatmul.mubr.bf16.gmra.mxu0 %v3729
    %v3868 = vpop.f32.mrf.mxu0
    %v3869 = vadd.f32 0.0, %v3868
    %v3870 = vpop.f32.mrf.mxu0
    %v3871 = vadd.f32 0.0, %v3870
    %v3872 = vpop.f32.mrf.mxu0
    %v3873 = vadd.f32 0.0, %v3872
    %v3874 = vpop.f32.mrf.mxu0
    %v3875 = vadd.f32 0.0, %v3874
    %3876 = vdwg.mxu0
    %3877 = vmatprep.subr.bf16.mxu0 %v1434
    %3878 = vmatpush1.bf16.msra.mxu0 %v1433
    %3879 = vmatprep.subr.bf16.mxu0 %v1426
    %3880 = vmatpush1.bf16.msra.mxu0 %v1425
    %3881 = vmatprep.subr.bf16.mxu0 %v1418
    %3882 = vmatpush1.bf16.msra.mxu0 %v1417
    %3883 = vmatprep.subr.bf16.mxu0 %v1410
    %3884 = vmatpush1.bf16.msra.mxu0 %v1409
    %3885 = vmatprep.subr.bf16.mxu0 %v1402
    %3886 = vmatpush1.bf16.msra.mxu0 %v1401
    %3887 = vmatprep.subr.bf16.mxu0 %v1394
    %3888 = vmatpush1.bf16.msra.mxu0 %v1393
    %3889 = vmatprep.subr.bf16.mxu0 %v1386
    %3890 = vmatpush1.bf16.msra.mxu0 %v1385
    %3891 = vmatprep.subr.bf16.mxu0 %v1378
    %3892 = vmatpush1.bf16.msra.mxu0 %v1377
    %3893 = vmatprep.subr.bf16.mxu0 %v1498
    %3894 = vmatpush2.bf16.msra.mxu0 %v1497
    %3895 = vmatprep.subr.bf16.mxu0 %v1490
    %3896 = vmatpush2.bf16.msra.mxu0 %v1489
    %3897 = vmatprep.subr.bf16.mxu0 %v1482
    %3898 = vmatpush2.bf16.msra.mxu0 %v1481
    %3899 = vmatprep.subr.bf16.mxu0 %v1474
    %3900 = vmatpush2.bf16.msra.mxu0 %v1473
    %3901 = vmatprep.subr.bf16.mxu0 %v1466
    %3902 = vmatpush2.bf16.msra.mxu0 %v1465
    %3903 = vmatprep.subr.bf16.mxu0 %v1458
    %3904 = vmatpush2.bf16.msra.mxu0 %v1457
    %3905 = vmatprep.subr.bf16.mxu0 %v1450
    %3906 = vmatpush2.bf16.msra.mxu0 %v1449
    %3907 = vmatprep.subr.bf16.mxu0 %v1442
    %3908 = vmatpush2.bf16.msra.mxu0 %v1441
    %3909 = vmatprep.mubr.bf16.mxu0 %v3730
    %3910 = vmatmul.mubr.bf16.gmra.mxu0 %v3729
    %v3911 = vpop.f32.mrf.mxu0
    %v3912 = vadd.f32 0.0, %v3911
    %v3913 = vpop.f32.mrf.mxu0
    %v3914 = vadd.f32 0.0, %v3913
    %v3915 = vpop.f32.mrf.mxu0
    %v3916 = vadd.f32 0.0, %v3915
    %v3917 = vpop.f32.mrf.mxu0
    %v3918 = vadd.f32 0.0, %v3917
    %3919 = vdwg.mxu0
    %v3920 = vadd.f32 %v3732, %v3783
    %v3921 = vadd.f32 %v3733, %v3785
    %v3922 = vadd.f32 %v3734, %v3826
    %v3923 = vadd.f32 %v3735, %v3828
    %v3924 = vadd.f32 %v3736, %v3869
    %v3925 = vadd.f32 %v3737, %v3871
    %v3926 = vadd.f32 %v3738, %v3912
    %v3927 = vadd.f32 %v3739, %v3914
    %v3928 = vadd.f32 %v3740, %v3787
    %v3929 = vadd.f32 %v3741, %v3789
    %v3930 = vadd.f32 %v3742, %v3830
    %v3931 = vadd.f32 %v3743, %v3832
    %v3932 = vadd.f32 %v3744, %v3873
    %v3933 = vadd.f32 %v3745, %v3875
    %v3934 = vadd.f32 %v3746, %v3916
    %v3935 = vadd.f32 %v3747, %v3918
    %v3936 = vxor.u32 %v3920, 2147483648
    %v3937 = vxor.u32 %v3921, 2147483648
    %v3938 = vxor.u32 %v3922, 2147483648
    %v3939 = vxor.u32 %v3923, 2147483648
    %v3940 = vxor.u32 %v3924, 2147483648
    %v3941 = vxor.u32 %v3925, 2147483648
    %v3942 = vxor.u32 %v3928, 2147483648
    %v3943 = vxor.u32 %v3929, 2147483648
    %v3944 = vxor.u32 %v3930, 2147483648
    %v3945 = vxor.u32 %v3931, 2147483648
    %v3946 = vxor.u32 %v3932, 2147483648
    %v3947 = vxor.u32 %v3933, 2147483648
    %v3948 = vmul.f32 %v3936, 1.442695
    %v3949 = vpow.pop %v3948
    %v3950 = vmul.f32 %v3937, 1.442695
    %v3951 = vpow.pop %v3950
    %v3952 = vmul.f32 %v3938, 1.442695
    %v3953 = vpow.pop %v3952
    %v3954 = vmul.f32 %v3939, 1.442695
    %v3955 = vpow.pop %v3954
    %v3956 = vmul.f32 %v3940, 1.442695
    %v3957 = vpow.pop %v3956
    %v3958 = vmul.f32 %v3941, 1.442695
    %v3959 = vpow.pop %v3958
    %v3960 = vmul.f32 %v3942, 1.442695
    %v3961 = vpow.pop %v3960
    %v3962 = vmul.f32 %v3943, 1.442695
    %v3963 = vpow.pop %v3962
    %v3964 = vmul.f32 %v3944, 1.442695
    %v3965 = vpow.pop %v3964
    %v3966 = vmul.f32 %v3945, 1.442695
    %v3967 = vpow.pop %v3966
    %v3968 = vmul.f32 %v3946, 1.442695
    %v3969 = vpow.pop %v3968
    %v3970 = vmul.f32 %v3947, 1.442695
    %v3971 = vpow.pop %v3970
    %v3972 = vadd.f32 %v3949, 1.0
    %v3973 = vadd.f32 %v3951, 1.0
    %v3974 = vadd.f32 %v3953, 1.0
    %v3975 = vadd.f32 %v3955, 1.0
    %v3976 = vadd.f32 %v3957, 1.0
    %v3977 = vadd.f32 %v3959, 1.0
    %v3978 = vadd.f32 %v3961, 1.0
    %v3979 = vadd.f32 %v3963, 1.0
    %v3980 = vadd.f32 %v3965, 1.0
    %v3981 = vadd.f32 %v3967, 1.0
    %v3982 = vadd.f32 %v3969, 1.0
    %v3983 = vadd.f32 %v3971, 1.0
    %v3984 = vrcp.pop %v3972
    %v3985 = vmul.f32 1.0, %v3984
    %v3986 = vrcp.pop %v3973
    %v3987 = vmul.f32 1.0, %v3986
    %v3988 = vrcp.pop %v3974
    %v3989 = vmul.f32 1.0, %v3988
    %v3990 = vrcp.pop %v3975
    %v3991 = vmul.f32 1.0, %v3990
    %v3992 = vrcp.pop %v3976
    %v3993 = vmul.f32 1.0, %v3992
    %v3994 = vrcp.pop %v3977
    %v3995 = vmul.f32 1.0, %v3994
    %v3996 = vrcp.pop %v3978
    %v3997 = vmul.f32 1.0, %v3996
    %v3998 = vrcp.pop %v3979
    %v3999 = vmul.f32 1.0, %v3998
    %v4000 = vrcp.pop %v3980
    %v4001 = vmul.f32 1.0, %v4000
    %v4002 = vrcp.pop %v3981
    %v4003 = vmul.f32 1.0, %v4002
    %v4004 = vrcp.pop %v3982
    %v4005 = vmul.f32 1.0, %v4004
    %v4006 = vrcp.pop %v3983
    %v4007 = vmul.f32 1.0, %v4006
    %v4008 = vtanh.pop %v3926
    %v4009 = vtanh.pop %v3927
    %v4010 = vtanh.pop %v3934
    %v4011 = vtanh.pop %v3935
    %v4012 = vmul.f32 %v3989, %v3717
    %v4013 = vmul.f32 %v3991, %v3718
    %v4014 = vmul.f32 %v4001, %v3719
    %v4015 = vmul.f32 %v4003, %v3720
    %v4016 = vmul.f32 %v3985, %v4008
    %v4017 = vmul.f32 %v3987, %v4009
    %v4018 = vmul.f32 %v3997, %v4010
    %v4019 = vmul.f32 %v3999, %v4011
    %v4020 = vadd.f32 %v4012, %v4016
    %v4021 = vadd.f32 %v4013, %v4017
    %v4022 = vadd.f32 %v4014, %v4018
    %v4023 = vadd.f32 %v4015, %v4019
    %v4024 = vtanh.pop %v4020
    %v4025 = vtanh.pop %v4021
    %v4026 = vtanh.pop %v4022
    %v4027 = vtanh.pop %v4023
    %v4028 = vmul.f32 %v3993, %v4024
    %v4029 = vmul.f32 %v3995, %v4025
    %v4030 = vmul.f32 %v4005, %v4026
    %v4031 = vmul.f32 %v4007, %v4027
    %4032 = vst [vmem:[%s4] sm:$0xff] %v4028
    %4033 = vst [vmem:[%s4 + $0x8] sm:$0xff] %v4029
    %4034 = vst [vmem:[%s4 + $0x10] sm:$0xff] %v4030
    %4035 = vst [vmem:[%s4 + $0x18] sm:$0xff] %v4031
    // Predicated region
    $region26: #{lstm_pooling_forward_prepared.1} parent=1 // pred_check
      _
    $region27: #{lstm_pooling_forward_prepared.1} parent=1 // pred_check_branch
      %4037 = sbr.rel (0) target = $region29
    $region28: #{lstm_pooling_forward_prepared.1} parent=1 // pred_region
      _
    $region29: #{lstm_pooling_forward_prepared.1} parent=1 // pred_fallthru
      _
    // Predicated region
    $region30: #{lstm_pooling_forward_prepared.1} parent=1 // pred_check
      _
    $region31: #{lstm_pooling_forward_prepared.1} parent=1 // pred_check_branch
      %4039 = sbr.rel (0) target = $region33
    $region32: #{lstm_pooling_forward_prepared.1} parent=1 // pred_region
      _
    $region33: #{lstm_pooling_forward_prepared.1} parent=1 // pred_fallthru
      _
    %4040 = vsyncpa [#allocation4], 1
    %4041 = vsyncpa [#allocation6], 1

</llo_original>
